<compile_context>
chip_gen: v6e
topology: v6e:2x2x1
jax: 0.10.0
libtpu: 0.0.40
codegen_flags: <defaults>
</compile_context>

<pallas_src>
import functools

import jax
import jax.numpy as jnp
from jax.experimental import pallas as pl
from jax.experimental.pallas import tpu as pltpu


# ----------------------------- Pallas kernel -------------------------------

def _edge_mlp_kernel(xp_ref, ea_ref, w1p_ref, w1e_ref, b1_ref, w2_ref, w3_ref,
                     out_ref):
    # xp_ref : [2*dn, tile_e]   node-pair features (src rows then tgt rows)
    # ea_ref : [de,   tile_e]   edge attributes, transposed
    # w1p_ref: [Hp, 2*dn]       layer-1 weights for the node-pair columns
    # w1e_ref: [Hp, de]         layer-1 weights for the edge-attr columns
    # b1_ref : [Hp, 1]  (f32)   layer-1 bias; carrier row holds 1.0
    # w2_ref : [Hp, Hp]         b2 folded into the carrier column
    # w3_ref : [OUT, Hp]        b3 folded into the carrier column
    # out_ref: [OUT, tile_e]    lane-dense output
    cdt = w2_ref.dtype
    prec = jax.lax.Precision.HIGHEST if cdt == jnp.float32 else None

    h = jnp.dot(w1p_ref[...], xp_ref[...], precision=prec,
                preferred_element_type=jnp.float32)
    h = h + jnp.dot(w1e_ref[...], ea_ref[...], precision=prec,
                    preferred_element_type=jnp.float32)
    h = h + b1_ref[...]                       # broadcast over lanes
    h = jnp.maximum(h, 0.0)                   # carrier row stays exactly 1.0
    h = jnp.dot(w2_ref[...], h.astype(cdt), precision=prec,
                preferred_element_type=jnp.float32)
    h = jnp.maximum(h, 0.0)
    o = jnp.dot(w3_ref[...], h.astype(cdt), precision=prec,
                preferred_element_type=jnp.float32)
    out_ref[...] = jax.nn.sigmoid(o).astype(out_ref.dtype)


# --------------------------- parameter folding ------------------------------

def fold_edge_mlp_params(params, *, dn, compute_dtype=jnp.bfloat16):
    """Split W1 by input group, fold b2/b3 via a ReLU-stable ones-carrier row.

    params (PyTorch-native [out, in] layout):
      (w1 [H, 2*dn+de], b1 [H], w2 [H, H], b2 [H], w3 [OUT, H], b3 [OUT]).
    Returns (w1p [Hp, 2*dn], w1e [Hp, de], b1a [Hp, 1] f32, w2a [Hp, Hp],
             w3a [OUT, Hp]) with the hidden dim padded so bf16 sublane pairs
    pack cleanly (Hp multiple of 16 for bf16, 8 for f32).
    """
    w1, b1, w2, b2, w3, b3 = params
    h, f = w1.shape
    fp = 2 * dn
    de = f - fp
    out_dim = w3.shape[0]
    pad = 8 if jnp.dtype(compute_dtype).itemsize == 4 else 16
    hp = -(-(h + 1) // pad) * pad
    c = h                                      # ones-carrier row index

    w1p = jnp.zeros((hp, fp), jnp.float32).at[:h].set(w1[:, :fp])
    w1e = jnp.zeros((hp, de), jnp.float32).at[:h].set(w1[:, fp:])
    b1a = jnp.zeros((hp, 1), jnp.float32).at[:h, 0].set(b1).at[c, 0].set(1.0)
    w2a = (jnp.zeros((hp, hp), jnp.float32)
           .at[:h, :h].set(w2).at[:h, c].set(b2).at[c, c].set(1.0))
    w3a = jnp.zeros((out_dim, hp), jnp.float32).at[:, :h].set(w3).at[:, c].set(b3)

    return (w1p.astype(compute_dtype), w1e.astype(compute_dtype),
            b1a,                                   # bias stays f32 (added post-acc)
            w2a.astype(compute_dtype), w3a.astype(compute_dtype))


# ------------------------------ tile selection -------------------------------

def _num_tensorcores():
    """Best-effort TensorCore count of the local device (1 on v5e/v6e)."""
    try:
        dev = jax.devices()[0]
        for attr in ("num_cores", "core_count", "num_tensorcores"):
            val = getattr(dev, attr, None)
            if isinstance(val, int) and val > 0:
                return val
    except Exception:
        pass
    return 1


def _pick_tile_e(n_edges, tile_e, num_cores):
    # Multiple of 256 (covers 128-lane alignment and the v6e/v7x MXU width).
    tile_e = max(256, (tile_e // 256) * 256)
    # Never exceed the (rounded-up) edge count.
    tile_e = min(tile_e, pl.cdiv(n_edges, 256) * 256)
    if num_cores > 1:
        # Multi-TensorCore (v7x): keep >= ~4 "parallel" grid steps so every
        # core gets work.  Single-TC chips get no cap (fewer, bigger steps
        # amortize the ~0.35 us per-step overhead).
        cap = pl.cdiv(pl.cdiv(n_edges, 4), 256) * 256
        tile_e = min(tile_e, max(cap, 256))
    return max(tile_e, 256)


# ------------------------------ pallas wrapper -------------------------------

def edge_mlp_pallas(xp_t, ea_t, w1p, w1e, b1a, w2a, w3a, *, tile_e=8192):
    """xp_t: [2*dn, E], ea_t: [de, E]  ->  [E, OUT]."""
    fp, n_edges = xp_t.shape
    de = ea_t.shape[0]
    hp = w2a.shape[0]
    out_dim = w3a.shape[0]

    tile_e = _pick_tile_e(n_edges, tile_e, _num_tensorcores())
    grid = (pl.cdiv(n_edges, tile_e),)        # ragged tail handled by Pallas
    const = lambda i: (0, 0)                  # weights: resident, never re-DMA'd

    out = pl.pallas_call(
        _edge_mlp_kernel,
        out_shape=jax.ShapeDtypeStruct((out_dim, n_edges), jnp.float32),
        grid_spec=pltpu.PrefetchScalarGridSpec(
            num_scalar_prefetch=0,
            grid=grid,
            in_specs=[
                pl.BlockSpec((fp, tile_e), lambda i: (0, i)),       # node pair
                pl.BlockSpec((de, tile_e), lambda i: (0, i)),       # edge attr
                pl.BlockSpec((hp, fp), const),                      # W1 (pair)
                pl.BlockSpec((hp, de), const),                      # W1 (edge)
                pl.BlockSpec((hp, 1), const),                       # b1 (+carrier)
                pl.BlockSpec((hp, hp), const),                      # W2 (+b2)
                pl.BlockSpec((out_dim, hp), const),                 # W3 (+b3)
            ],
            out_specs=pl.BlockSpec((out_dim, tile_e), lambda i: (0, i)),
        ),
        compiler_params=pltpu.CompilerParams(
            dimension_semantics=("parallel",)),
    )(xp_t, ea_t, w1p, w1e, b1a, w2a, w3a)

    return out.T                               # [E, OUT]


# ------------------------- parameter construction --------------------------

def init_edge_mlp_params(key, in_dim_node=1, in_dim_edge=3, hidden_dim=50,
                         num_hidden_layers=2, out_dim=1):
    """torch.nn.Linear-style init, PyTorch-native [out, in] weight layout."""
    in_dim = 2 * in_dim_node + in_dim_edge
    dims = [in_dim] + [hidden_dim] * num_hidden_layers + [out_dim]
    params = []
    for fan_in, fan_out in zip(dims[:-1], dims[1:]):
        key, kw, kb = jax.random.split(key, 3)
        bound = 1.0 / float(fan_in) ** 0.5
        w = jax.random.uniform(kw, (fan_out, fan_in), jnp.float32, -bound, bound)
        b = jax.random.uniform(kb, (fan_out,), jnp.float32, -bound, bound)
        params += [w, b]
    return tuple(params)


# ------------------------------ full forward --------------------------------

def edge_mlp_forward(x, edge_index, edge_attr, params, *, tile_e=8192,
                     compute_dtype=jnp.bfloat16):
    """x: [N, dn], edge_index: [2, E] int32, edge_attr: [E] or [E, de]."""
    if edge_attr.ndim == 1:
        edge_attr = edge_attr[:, None]
    elif edge_attr.ndim != 2:
        raise ValueError(f"Expected edge_attr with 1 or 2 dims, got {edge_attr.ndim}")
    dn = x.shape[1]
    n_edges = edge_index.shape[1]

    # Node-pair stream [2*dn, E]: single gather, no [F, E] concat in HBM.
    xg = x.astype(compute_dtype)[edge_index]                     # [2, E, dn]
    xp_t = jnp.transpose(xg, (0, 2, 1)).reshape(2 * dn, n_edges)  # [2*dn, E]
    ea_t = edge_attr.astype(compute_dtype).T                      # [de, E]

    w1p, w1e, b1a, w2a, w3a = fold_edge_mlp_params(
        params, dn=dn, compute_dtype=compute_dtype)
    return edge_mlp_pallas(xp_t, ea_t, w1p, w1e, b1a, w2a, w3a, tile_e=tile_e)


# pure-JAX f32 reference for correctness checking
def edge_mlp_reference(x, edge_index, edge_attr, params):
    if edge_attr.ndim == 1:
        edge_attr = edge_attr[:, None]
    ef = jnp.concatenate([x[edge_index[0]], x[edge_index[1]], edge_attr], axis=-1)
    w1, b1, w2, b2, w3, b3 = params
    hi = jax.lax.Precision.HIGHEST
    h = jnp.maximum(jnp.dot(ef, w1.T, precision=hi) + b1, 0.0)
    h = jnp.maximum(jnp.dot(h, w2.T, precision=hi) + b2, 0.0)
    return jax.nn.sigmoid(jnp.dot(h, w3.T, precision=hi) + b3)


if __name__ == "__main__":
    key = jax.random.PRNGKey(0)
    in_dim_node, in_dim_edge, hidden_dim, out_dim = 1, 3, 50, 1

    k_p, key = jax.random.split(key)
    params = init_edge_mlp_params(k_p, in_dim_node, in_dim_edge, hidden_dim,
                                  num_hidden_layers=2, out_dim=out_dim)

    fwd_f32 = jax.jit(functools.partial(edge_mlp_forward,
                                        compute_dtype=jnp.float32))
    fwd_bf16 = jax.jit(functools.partial(edge_mlp_forward,
                                         compute_dtype=jnp.bfloat16))

    # (nodes, edges): tiny case + a multi-/partial-block case with a ragged
    # tail (exercises the masked partial-block read/write path).
    for num_nodes, num_edges in [(16, 8), (64, 1333)]:
        key, k_x, k_e, k_a = jax.random.split(key, 4)
        x = jax.random.normal(k_x, (num_nodes, in_dim_node), jnp.float32)
        edge_index = jax.random.randint(k_e, (2, num_edges), 0, num_nodes,
                                        dtype=jnp.int32)
        edge_attr = jax.random.normal(k_a, (num_edges, in_dim_edge), jnp.float32)

        ref = edge_mlp_reference(x, edge_index, edge_attr, params)

        # f32 path: tight check against the HIGHEST-precision reference.
        out32 = jax.block_until_ready(fwd_f32(x, edge_index, edge_attr, params))
        assert out32.shape == (num_edges, out_dim), out32.shape
        assert bool(jnp.all(jnp.isfinite(out32))), "non-finite f32 output"
        assert jnp.allclose(out32, ref, atol=1e-4, rtol=1e-4), (
            "f32 mismatch vs reference, max abs err = "
            f"{float(jnp.max(jnp.abs(out32 - ref)))}")

        # bf16 (default, fast) path: quantization-looseness sanity check.
        out16 = jax.block_until_ready(fwd_bf16(x, edge_index, edge_attr, params))
        assert out16.shape == (num_edges, out_dim), out16.shape
        assert bool(jnp.all(jnp.isfinite(out16))), "non-finite bf16 output"
        assert jnp.allclose(out16, ref, atol=7.5e-2, rtol=0.0), (
            "bf16 mismatch vs reference, max abs err = "
            f"{float(jnp.max(jnp.abs(out16 - ref)))}")

    print("KERNEL_OK")
</pallas_src>

<mosaic_0001>
module attributes {stable_mosaic.version = 11 : i64} {
  func.func @_edge_mlp_kernel(%arg0: i32, %arg1: memref<2x256xf32, #tpu.memory_space<vmem>>, %arg2: memref<3x256xf32, #tpu.memory_space<vmem>>, %arg3: memref<56x2xf32, #tpu.memory_space<vmem>>, %arg4: memref<56x3xf32, #tpu.memory_space<vmem>>, %arg5: memref<56x1xf32, #tpu.memory_space<vmem>>, %arg6: memref<56x56xf32, #tpu.memory_space<vmem>>, %arg7: memref<1x56xf32, #tpu.memory_space<vmem>>, %arg8: memref<1x256xf32, #tpu.memory_space<vmem>>) attributes {dimension_semantics = [#tpu.dimension_semantics<parallel>], iteration_bounds = array<i64: 1>, scalar_prefetch = 0 : i64, scratch_operands = 0 : i64, tpu.core_type = #tpu.core_type<tc>, window_params = [{transform_indices = @transform_0, window_bounds = array<i64: 2, 256>}, {transform_indices = @transform_1, window_bounds = array<i64: 3, 256>}, {pipeline_mode = #tpu.pipeline_mode<synchronous>, transform_indices = @transform_2, window_bounds = array<i64: 56, 2>}, {pipeline_mode = #tpu.pipeline_mode<synchronous>, transform_indices = @transform_3, window_bounds = array<i64: 56, 3>}, {pipeline_mode = #tpu.pipeline_mode<synchronous>, transform_indices = @transform_4, window_bounds = array<i64: 56, 1>}, {pipeline_mode = #tpu.pipeline_mode<synchronous>, transform_indices = @transform_5, window_bounds = array<i64: 56, 56>}, {pipeline_mode = #tpu.pipeline_mode<synchronous>, transform_indices = @transform_6, window_bounds = array<i64: 1, 56>}, {transform_indices = @transform_7, window_bounds = array<i64: 1, 256>}]} {
    %c0 = arith.constant 0 : index
    %c0_0 = arith.constant 0 : index
    %0 = vector.load %arg3[%c0, %c0_0] : memref<56x2xf32, #tpu.memory_space<vmem>>, vector<56x2xf32>
    %c0_1 = arith.constant 0 : index
    %c0_2 = arith.constant 0 : index
    %1 = vector.load %arg1[%c0_1, %c0_2] : memref<2x256xf32, #tpu.memory_space<vmem>>, vector<2x256xf32>
    %cst = arith.constant dense<0.000000e+00> : vector<56x256xf32>
    %2 = tpu.matmul %0, %1, %cst {dimension_numbers = #tpu.dot_dimension_numbers<[1], [0], [0], [1], [0, 0, 1, 1], [], []>, precision = #tpu.contract_precision<fp32>} : vector<56x2xf32>, vector<2x256xf32>, vector<56x256xf32> -> vector<56x256xf32>
    %c0_3 = arith.constant 0 : index
    %c0_4 = arith.constant 0 : index
    %3 = vector.load %arg4[%c0_3, %c0_4] : memref<56x3xf32, #tpu.memory_space<vmem>>, vector<56x3xf32>
    %c0_5 = arith.constant 0 : index
    %c0_6 = arith.constant 0 : index
    %4 = vector.load %arg2[%c0_5, %c0_6] : memref<3x256xf32, #tpu.memory_space<vmem>>, vector<3x256xf32>
    %cst_7 = arith.constant dense<0.000000e+00> : vector<56x256xf32>
    %5 = tpu.matmul %3, %4, %cst_7 {dimension_numbers = #tpu.dot_dimension_numbers<[1], [0], [0], [1], [0, 0, 1, 1], [], []>, precision = #tpu.contract_precision<fp32>} : vector<56x3xf32>, vector<3x256xf32>, vector<56x256xf32> -> vector<56x256xf32>
    %6 = arith.addf %2, %5 : vector<56x256xf32>
    %c0_8 = arith.constant 0 : index
    %c0_9 = arith.constant 0 : index
    %7 = vector.load %arg5[%c0_8, %c0_9] : memref<56x1xf32, #tpu.memory_space<vmem>>, vector<56x1xf32>
    %8 = vector.broadcast %7 : vector<56x1xf32> to vector<56x256xf32>
    %9 = arith.addf %6, %8 : vector<56x256xf32>
    %cst_10 = arith.constant 0.000000e+00 : f32
    %10 = vector.broadcast %cst_10 : f32 to vector<56x256xf32>
    %11 = arith.maximumf %9, %10 : vector<56x256xf32>
    %c0_11 = arith.constant 0 : index
    %c0_12 = arith.constant 0 : index
    %12 = vector.load %arg6[%c0_11, %c0_12] : memref<56x56xf32, #tpu.memory_space<vmem>>, vector<56x56xf32>
    %cst_13 = arith.constant dense<0.000000e+00> : vector<56x256xf32>
    %13 = tpu.matmul %12, %11, %cst_13 {dimension_numbers = #tpu.dot_dimension_numbers<[1], [0], [0], [1], [0, 0, 1, 1], [], []>, precision = #tpu.contract_precision<fp32>} : vector<56x56xf32>, vector<56x256xf32>, vector<56x256xf32> -> vector<56x256xf32>
    %cst_14 = arith.constant 0.000000e+00 : f32
    %14 = vector.broadcast %cst_14 : f32 to vector<56x256xf32>
    %15 = arith.maximumf %13, %14 : vector<56x256xf32>
    %c0_15 = arith.constant 0 : index
    %c0_16 = arith.constant 0 : index
    %16 = vector.load %arg7[%c0_15, %c0_16] : memref<1x56xf32, #tpu.memory_space<vmem>>, vector<1x56xf32>
    %cst_17 = arith.constant dense<0.000000e+00> : vector<1x256xf32>
    %17 = tpu.matmul %16, %15, %cst_17 {dimension_numbers = #tpu.dot_dimension_numbers<[1], [0], [0], [1], [0, 0, 1, 1], [], []>, precision = #tpu.contract_precision<fp32>} : vector<1x56xf32>, vector<56x256xf32>, vector<1x256xf32> -> vector<1x256xf32>
    %18 = arith.negf %17 : vector<1x256xf32>
    %19 = math.exp %18 : vector<1x256xf32>
    %cst_18 = arith.constant 1.000000e+00 : f32
    %20 = vector.broadcast %cst_18 : f32 to vector<1x256xf32>
    %21 = arith.addf %20, %19 : vector<1x256xf32>
    %22 = arith.divf %20, %21 : vector<1x256xf32>
    %c0_19 = arith.constant 0 : index
    %c0_20 = arith.constant 0 : index
    %23 = vector.load %arg8[%c0_19, %c0_20] : memref<1x256xf32, #tpu.memory_space<vmem>>, vector<1x256xf32>
    tpu.vector_store %arg8[%c0_19, %c0_20], %22 {strides = array<i32>} : memref<1x256xf32, #tpu.memory_space<vmem>>, vector<1x256xf32>,
    return
  }
  func.func @transform_0(%arg0: i32) -> (i32, i32) {
    %c0_i32 = arith.constant 0 : i32
    %c0_i32_0 = arith.constant 0 : i32
    return %c0_i32, %arg0 : i32, i32
  }
  func.func @transform_1(%arg0: i32) -> (i32, i32) {
    %c0_i32 = arith.constant 0 : i32
    %c0_i32_0 = arith.constant 0 : i32
    return %c0_i32, %arg0 : i32, i32
  }
  func.func @transform_2(%arg0: i32) -> (i32, i32) {
    %c0_i32 = arith.constant 0 : i32
    %c0_i32_0 = arith.constant 0 : i32
    %c0_i32_1 = arith.constant 0 : i32
    return %c0_i32, %c0_i32_0 : i32, i32
  }
  func.func @transform_3(%arg0: i32) -> (i32, i32) {
    %c0_i32 = arith.constant 0 : i32
    %c0_i32_0 = arith.constant 0 : i32
    %c0_i32_1 = arith.constant 0 : i32
    return %c0_i32, %c0_i32_0 : i32, i32
  }
  func.func @transform_4(%arg0: i32) -> (i32, i32) {
    %c0_i32 = arith.constant 0 : i32
    %c0_i32_0 = arith.constant 0 : i32
    %c0_i32_1 = arith.constant 0 : i32
    return %c0_i32, %c0_i32_0 : i32, i32
  }
  func.func @transform_5(%arg0: i32) -> (i32, i32) {
    %c0_i32 = arith.constant 0 : i32
    %c0_i32_0 = arith.constant 0 : i32
    %c0_i32_1 = arith.constant 0 : i32
    return %c0_i32, %c0_i32_0 : i32, i32
  }
  func.func @transform_6(%arg0: i32) -> (i32, i32) {
    %c0_i32 = arith.constant 0 : i32
    %c0_i32_0 = arith.constant 0 : i32
    %c0_i32_1 = arith.constant 0 : i32
    return %c0_i32, %c0_i32_0 : i32, i32
  }
  func.func @transform_7(%arg0: i32) -> (i32, i32) {
    %c0_i32 = arith.constant 0 : i32
    %c0_i32_0 = arith.constant 0 : i32
    return %c0_i32, %arg0 : i32, i32
  }
}

</mosaic_0001>

<llo_original>
// kernel: edge_mlp_forward.1
$region0: #{edge_mlp_forward.1}
  #allocation0 [shape = 'u32[]', space=smem, size = 0x4, offset = 0x4, fixed_abs, tag = 'smem constant byte address 0x4 - core index']
  #allocation1 [shape = 'u32[144,128]{1,0:T(1,128)}', space=vmem, size = 0x12000, scoped, tag = 'internal scratch']
  %s0 = inlined_call_operand.vmem [shape: f32[2,8], index: 0, kind: input, shape index: {}]
  %s1 = inlined_call_operand.vmem [shape: f32[3,8], index: 1, kind: input, shape index: {}]
  %s2 = inlined_call_operand.vmem [shape: f32[56,2], index: 2, kind: input, shape index: {}]
  %s3 = inlined_call_operand.vmem [shape: f32[56,3], index: 3, kind: input, shape index: {}]
  %s4 = inlined_call_operand.vmem [shape: f32[56,1], index: 4, kind: input, shape index: {}]
  %s5 = inlined_call_operand.vmem [shape: f32[56,56], index: 5, kind: input, shape index: {}]
  %s6 = inlined_call_operand.vmem [shape: f32[1,56], index: 6, kind: input, shape index: {}]
  %s7 = inlined_call_operand.hbm [shape: f32[1,8], index: 7, kind: output, shape index: {}]
  %s8 = sld [smem:[#allocation0]]
  $region38: #{edge_mlp_forward.1} parent=0
    _
  %s10 = ssub.s32 1, %s8
  %s11 = scalar_select 0, %s10, %s8
  $region1: #{edge_mlp_forward.1} parent=0
    #allocation2 [shape = 'u8[1024]{0}', space=vmem, size = 0x400, scoped, tag = 'output window, operand 0, single buffered']
    #allocation3 [shape = 's32[1]{0}', space=sflag, size = 0x4, scoped, tag = 'scoped memory for edge_mlp_forward.1']
    %12 = vsyncpa [#allocation3], 0
    // Predicated region
    $region2: #{edge_mlp_forward.1} parent=1 // pred_check
      _
    $region3: #{edge_mlp_forward.1} parent=1 // pred_check_branch
      %14 = sbr.rel (0) target = $region5
    $region4: #{edge_mlp_forward.1} parent=1 // pred_region
      _
    $region5: #{edge_mlp_forward.1} parent=1 // pred_fallthru
      _
    // Predicated region
    $region6: #{edge_mlp_forward.1} parent=1 // pred_check
      _
    $region7: #{edge_mlp_forward.1} parent=1 // pred_check_branch
      %16 = sbr.rel (0) target = $region9
    $region8: #{edge_mlp_forward.1} parent=1 // pred_region
      _
    $region9: #{edge_mlp_forward.1} parent=1 // pred_fallthru
      _
    // Predicated region
    $region10: #{edge_mlp_forward.1} parent=1 // pred_check
      _
    $region11: #{edge_mlp_forward.1} parent=1 // pred_check_branch
      %18 = sbr.rel (0) target = $region13
    $region12: #{edge_mlp_forward.1} parent=1 // pred_region
      _
    $region13: #{edge_mlp_forward.1} parent=1 // pred_fallthru
      _
    // Predicated region
    $region14: #{edge_mlp_forward.1} parent=1 // pred_check
      _
    $region15: #{edge_mlp_forward.1} parent=1 // pred_check_branch
      %20 = sbr.rel (0) target = $region17
    $region16: #{edge_mlp_forward.1} parent=1 // pred_region
      _
    $region17: #{edge_mlp_forward.1} parent=1 // pred_fallthru
      _
    // Predicated region
    $region18: #{edge_mlp_forward.1} parent=1 // pred_check
      _
    $region19: #{edge_mlp_forward.1} parent=1 // pred_check_branch
      %22 = sbr.rel (0) target = $region21
    $region20: #{edge_mlp_forward.1} parent=1 // pred_region
      _
    $region21: #{edge_mlp_forward.1} parent=1 // pred_fallthru
      _
    // Predicated region
    $region22: #{edge_mlp_forward.1} parent=1 // pred_check
      _
    $region23: #{edge_mlp_forward.1} parent=1 // pred_check_branch
      %24 = sbr.rel (0) target = $region25
    $region24: #{edge_mlp_forward.1} parent=1 // pred_region
      _
    $region25: #{edge_mlp_forward.1} parent=1 // pred_fallthru
      _
    // Predicated region
    $region26: #{edge_mlp_forward.1} parent=1 // pred_check
      _
    $region27: #{edge_mlp_forward.1} parent=1 // pred_check_branch
      %26 = sbr.rel (0) target = $region29
    $region28: #{edge_mlp_forward.1} parent=1 // pred_region
      _
    $region29: #{edge_mlp_forward.1} parent=1 // pred_fallthru
      _
    %v27 = vld [vmem:[%s2] sm:$0xff]
    %v28 = vld [vmem:[%s2 + $0x8] sm:$0xff]
    %v29 = vld [vmem:[%s2 + $0x10] sm:$0xff]
    %v30 = vld [vmem:[%s2 + $0x18] sm:$0xff]
    %v31 = vld [vmem:[%s2 + $0x20] sm:$0xff]
    %v32 = vld [vmem:[%s2 + $0x28] sm:$0xff]
    %v33 = vld [vmem:[%s2 + $0x30] sm:$0xff]
    %v34 = vld [vmem:[%s0] sm:$0xf]
    %v35 = vld [vmem:[%s3] sm:$0xff]
    %v36 = vld [vmem:[%s3 + $0x8] sm:$0xff]
    %v37 = vld [vmem:[%s3 + $0x10] sm:$0xff]
    %v38 = vld [vmem:[%s3 + $0x18] sm:$0xff]
    %v39 = vld [vmem:[%s3 + $0x20] sm:$0xff]
    %v40 = vld [vmem:[%s3 + $0x28] sm:$0xff]
    %v41 = vld [vmem:[%s3 + $0x30] sm:$0xff]
    %v42 = vld [vmem:[%s1] sm:$0x77]
    %v44 = vcombine.high %v42, %v42
    %vm45 = vcmask 23552
    %v47 = vsel %vm45, %v35, 0
    %v50 = vsel %vm45, %v36, 0
    %v53 = vsel %vm45, %v37, 0
    %v56 = vsel %vm45, %v38, 0
    %v59 = vsel %vm45, %v39, 0
    %v62 = vsel %vm45, %v40, 0
    %v65 = vsel %vm45, %v41, 0
    %vm67 = vcmask 1042432
    %v68 = vsel %vm67, %v42, 0
    %v70 = vsel %vm67, %v44, 0
    %72 = vmatprep.subr.mxu0 0.0
    %73 = vmatpush1.msra.mxu0 0.0
    %74 = vmatprep.subr.mxu0 0.0
    %75 = vmatpush1.msra.mxu0 0.0
    %76 = vmatprep.subr.mxu0 0.0
    %77 = vmatpush1.msra.mxu0 0.0
    %78 = vmatprep.subr.mxu0 0.0
    %79 = vmatpush1.msra.mxu0 0.0
    %80 = vmatprep.subr.mxu0 0.0
    %81 = vmatpush1.msra.mxu0 0.0
    %82 = vmatprep.subr.mxu0 0.0
    %83 = vmatpush1.msra.mxu0 0.0
    %84 = vmatprep.subr.mxu0 0.0
    %85 = vmatpush1.msra.mxu0 0.0
    %86 = vmatprep.subr.mxu0 0.0
    %87 = vmatpush1.msra.mxu0 0.0
    %88 = vmatprep.subr.mxu0 0.0
    %89 = vmatpush1.msra.mxu0 0.0
    %90 = vmatprep.subr.mxu0 0.0
    %91 = vmatpush1.msra.mxu0 0.0
    %92 = vmatprep.subr.mxu0 0.0
    %93 = vmatpush1.msra.mxu0 0.0
    %94 = vmatprep.subr.mxu0 0.0
    %95 = vmatpush1.msra.mxu0 0.0
    %96 = vmatprep.subr.mxu0 0.0
    %97 = vmatpush1.msra.mxu0 0.0
    %98 = vmatprep.subr.mxu0 0.0
    %99 = vmatpush1.msra.mxu0 0.0
    %100 = vmatprep.subr.mxu0 0.0
    %101 = vmatpush1.msra.mxu0 0.0
    %v102 = vand.u32 %v70, 4294901760
    %103 = vmatprep.subr.mxu0 %v102
    %v104 = vand.u32 %v68, 4294901760
    %105 = vmatpush1.msra.mxu0 %v104
    %106 = vmatprep.subr.mxu0 0.0
    %107 = vmatpush2.msra.mxu0 0.0
    %108 = vmatprep.subr.mxu0 0.0
    %109 = vmatpush2.msra.mxu0 0.0
    %110 = vmatprep.subr.mxu0 0.0
    %111 = vmatpush2.msra.mxu0 0.0
    %112 = vmatprep.subr.mxu0 0.0
    %113 = vmatpush2.msra.mxu0 0.0
    %114 = vmatprep.subr.mxu0 0.0
    %115 = vmatpush2.msra.mxu0 0.0
    %116 = vmatprep.subr.mxu0 0.0
    %117 = vmatpush2.msra.mxu0 0.0
    %118 = vmatprep.subr.mxu0 0.0
    %119 = vmatpush2.msra.mxu0 0.0
    %120 = vmatprep.subr.mxu0 0.0
    %121 = vmatpush2.msra.mxu0 0.0
    %122 = vmatprep.subr.mxu0 0.0
    %123 = vmatpush2.msra.mxu0 0.0
    %124 = vmatprep.subr.mxu0 0.0
    %125 = vmatpush2.msra.mxu0 0.0
    %126 = vmatprep.subr.mxu0 0.0
    %127 = vmatpush2.msra.mxu0 0.0
    %128 = vmatprep.subr.mxu0 0.0
    %129 = vmatpush2.msra.mxu0 0.0
    %130 = vmatprep.subr.mxu0 0.0
    %131 = vmatpush2.msra.mxu0 0.0
    %132 = vmatprep.subr.mxu0 0.0
    %133 = vmatpush2.msra.mxu0 0.0
    %134 = vmatprep.subr.mxu0 0.0
    %135 = vmatpush2.msra.mxu0 0.0
    %136 = vmatprep.subr.mxu0 0.0
    %137 = vmatpush2.msra.mxu0 0.0
    %138 = vmatprep.mubr.f32.mxu0 0.0
    %v139 = vand.u32 %v47, 4294901760
    %v140 = vsub.f32 %v47, %v139
    %v141 = vand.u32 %v140, 4294901760
    %v142 = vsub.f32 %v140, %v141
    %v143 = vand.u32 %v142, 4294901760
    %144 = vmatmul.mubr.f32.gmra.mxu0 %v143
    %v145 = vpop.f32.mrf.mxu0
    %v146 = vadd.f32 0.0, %v145
    %v147 = vpop.f32.mrf.mxu0
    %v148 = vadd.f32 0.0, %v147
    %149 = vmatprep.mubr.f32.mxu0 0.0
    %v150 = vand.u32 %v50, 4294901760
    %v151 = vsub.f32 %v50, %v150
    %v152 = vand.u32 %v151, 4294901760
    %v153 = vsub.f32 %v151, %v152
    %v154 = vand.u32 %v153, 4294901760
    %155 = vmatmul.mubr.f32.gmra.mxu0 %v154
    %v156 = vpop.f32.mrf.mxu0
    %v157 = vadd.f32 0.0, %v156
    %v158 = vpop.f32.mrf.mxu0
    %v159 = vadd.f32 0.0, %v158
    %160 = vmatprep.mubr.f32.mxu0 0.0
    %v161 = vand.u32 %v53, 4294901760
    %v162 = vsub.f32 %v53, %v161
    %v163 = vand.u32 %v162, 4294901760
    %v164 = vsub.f32 %v162, %v163
    %v165 = vand.u32 %v164, 4294901760
    %166 = vmatmul.mubr.f32.gmra.mxu0 %v165
    %v167 = vpop.f32.mrf.mxu0
    %v168 = vadd.f32 0.0, %v167
    %v169 = vpop.f32.mrf.mxu0
    %v170 = vadd.f32 0.0, %v169
    %171 = vmatprep.mubr.f32.mxu0 0.0
    %v172 = vand.u32 %v56, 4294901760
    %v173 = vsub.f32 %v56, %v172
    %v174 = vand.u32 %v173, 4294901760
    %v175 = vsub.f32 %v173, %v174
    %v176 = vand.u32 %v175, 4294901760
    %177 = vmatmul.mubr.f32.gmra.mxu0 %v176
    %v178 = vpop.f32.mrf.mxu0
    %v179 = vadd.f32 0.0, %v178
    %v180 = vpop.f32.mrf.mxu0
    %v181 = vadd.f32 0.0, %v180
    %182 = vmatprep.mubr.f32.mxu0 0.0
    %v183 = vand.u32 %v59, 4294901760
    %v184 = vsub.f32 %v59, %v183
    %v185 = vand.u32 %v184, 4294901760
    %v186 = vsub.f32 %v184, %v185
    %v187 = vand.u32 %v186, 4294901760
    %188 = vmatmul.mubr.f32.gmra.mxu0 %v187
    %v189 = vpop.f32.mrf.mxu0
    %v190 = vadd.f32 0.0, %v189
    %v191 = vpop.f32.mrf.mxu0
    %v192 = vadd.f32 0.0, %v191
    %193 = vmatprep.mubr.f32.mxu0 0.0
    %v194 = vand.u32 %v62, 4294901760
    %v195 = vsub.f32 %v62, %v194
    %v196 = vand.u32 %v195, 4294901760
    %v197 = vsub.f32 %v195, %v196
    %v198 = vand.u32 %v197, 4294901760
    %199 = vmatmul.mubr.f32.gmra.mxu0 %v198
    %v200 = vpop.f32.mrf.mxu0
    %v201 = vadd.f32 0.0, %v200
    %v202 = vpop.f32.mrf.mxu0
    %v203 = vadd.f32 0.0, %v202
    %204 = vmatprep.mubr.f32.mxu0 0.0
    %v205 = vand.u32 %v65, 4294901760
    %v206 = vsub.f32 %v65, %v205
    %v207 = vand.u32 %v206, 4294901760
    %v208 = vsub.f32 %v206, %v207
    %v209 = vand.u32 %v208, 4294901760
    %210 = vmatmul.mubr.f32.gmra.mxu0 %v209
    %v211 = vpop.f32.mrf.mxu0
    %v212 = vadd.f32 0.0, %v211
    %v213 = vpop.f32.mrf.mxu0
    %v214 = vadd.f32 0.0, %v213
    %215 = vdwg.mxu0
    %216 = vmatprep.subr.mxu0 0.0
    %217 = vmatpush1.msra.mxu0 0.0
    %218 = vmatprep.subr.mxu0 0.0
    %219 = vmatpush1.msra.mxu0 0.0
    %220 = vmatprep.subr.mxu0 0.0
    %221 = vmatpush1.msra.mxu0 0.0
    %222 = vmatprep.subr.mxu0 0.0
    %223 = vmatpush1.msra.mxu0 0.0
    %224 = vmatprep.subr.mxu0 0.0
    %225 = vmatpush1.msra.mxu0 0.0
    %226 = vmatprep.subr.mxu0 0.0
    %227 = vmatpush1.msra.mxu0 0.0
    %228 = vmatprep.subr.mxu0 0.0
    %229 = vmatpush1.msra.mxu0 0.0
    %230 = vmatprep.subr.mxu0 0.0
    %231 = vmatpush1.msra.mxu0 0.0
    %232 = vmatprep.subr.mxu0 0.0
    %233 = vmatpush1.msra.mxu0 0.0
    %234 = vmatprep.subr.mxu0 0.0
    %235 = vmatpush1.msra.mxu0 0.0
    %236 = vmatprep.subr.mxu0 0.0
    %237 = vmatpush1.msra.mxu0 0.0
    %238 = vmatprep.subr.mxu0 0.0
    %239 = vmatpush1.msra.mxu0 0.0
    %240 = vmatprep.subr.mxu0 0.0
    %241 = vmatpush1.msra.mxu0 0.0
    %242 = vmatprep.subr.mxu0 0.0
    %243 = vmatpush1.msra.mxu0 0.0
    %244 = vmatprep.subr.mxu0 0.0
    %245 = vmatpush1.msra.mxu0 0.0
    %v246 = vand.u32 %v70, 4294901760
    %v247 = vsub.f32 %v70, %v246
    %v248 = vand.u32 %v247, 4294901760
    %v249 = vsub.f32 %v247, %v248
    %v250 = vand.u32 %v249, 4294901760
    %251 = vmatprep.subr.mxu0 %v250
    %v252 = vand.u32 %v68, 4294901760
    %v253 = vsub.f32 %v68, %v252
    %v254 = vand.u32 %v253, 4294901760
    %v255 = vsub.f32 %v253, %v254
    %v256 = vand.u32 %v255, 4294901760
    %257 = vmatpush1.msra.mxu0 %v256
    %258 = vmatprep.subr.mxu0 0.0
    %259 = vmatpush2.msra.mxu0 0.0
    %260 = vmatprep.subr.mxu0 0.0
    %261 = vmatpush2.msra.mxu0 0.0
    %262 = vmatprep.subr.mxu0 0.0
    %263 = vmatpush2.msra.mxu0 0.0
    %264 = vmatprep.subr.mxu0 0.0
    %265 = vmatpush2.msra.mxu0 0.0
    %266 = vmatprep.subr.mxu0 0.0
    %267 = vmatpush2.msra.mxu0 0.0
    %268 = vmatprep.subr.mxu0 0.0
    %269 = vmatpush2.msra.mxu0 0.0
    %270 = vmatprep.subr.mxu0 0.0
    %271 = vmatpush2.msra.mxu0 0.0
    %272 = vmatprep.subr.mxu0 0.0
    %273 = vmatpush2.msra.mxu0 0.0
    %274 = vmatprep.subr.mxu0 0.0
    %275 = vmatpush2.msra.mxu0 0.0
    %276 = vmatprep.subr.mxu0 0.0
    %277 = vmatpush2.msra.mxu0 0.0
    %278 = vmatprep.subr.mxu0 0.0
    %279 = vmatpush2.msra.mxu0 0.0
    %280 = vmatprep.subr.mxu0 0.0
    %281 = vmatpush2.msra.mxu0 0.0
    %282 = vmatprep.subr.mxu0 0.0
    %283 = vmatpush2.msra.mxu0 0.0
    %284 = vmatprep.subr.mxu0 0.0
    %285 = vmatpush2.msra.mxu0 0.0
    %286 = vmatprep.subr.mxu0 0.0
    %287 = vmatpush2.msra.mxu0 0.0
    %288 = vmatprep.subr.mxu0 0.0
    %289 = vmatpush2.msra.mxu0 0.0
    %290 = vmatprep.mubr.f32.mxu0 0.0
    %v291 = vand.u32 %v47, 4294901760
    %292 = vmatmul.mubr.f32.gmra.mxu0 %v291
    %v293 = vpop.f32.mrf.mxu0
    %v294 = vadd.f32 %v146, %v293
    %v295 = vpop.f32.mrf.mxu0
    %v296 = vadd.f32 %v148, %v295
    %297 = vmatprep.mubr.f32.mxu0 0.0
    %v298 = vand.u32 %v50, 4294901760
    %299 = vmatmul.mubr.f32.gmra.mxu0 %v298
    %v300 = vpop.f32.mrf.mxu0
    %v301 = vadd.f32 %v157, %v300
    %v302 = vpop.f32.mrf.mxu0
    %v303 = vadd.f32 %v159, %v302
    %304 = vmatprep.mubr.f32.mxu0 0.0
    %v305 = vand.u32 %v53, 4294901760
    %306 = vmatmul.mubr.f32.gmra.mxu0 %v305
    %v307 = vpop.f32.mrf.mxu0
    %v308 = vadd.f32 %v168, %v307
    %v309 = vpop.f32.mrf.mxu0
    %v310 = vadd.f32 %v170, %v309
    %311 = vmatprep.mubr.f32.mxu0 0.0
    %v312 = vand.u32 %v56, 4294901760
    %313 = vmatmul.mubr.f32.gmra.mxu0 %v312
    %v314 = vpop.f32.mrf.mxu0
    %v315 = vadd.f32 %v179, %v314
    %v316 = vpop.f32.mrf.mxu0
    %v317 = vadd.f32 %v181, %v316
    %318 = vmatprep.mubr.f32.mxu0 0.0
    %v319 = vand.u32 %v59, 4294901760
    %320 = vmatmul.mubr.f32.gmra.mxu0 %v319
    %v321 = vpop.f32.mrf.mxu0
    %v322 = vadd.f32 %v190, %v321
    %v323 = vpop.f32.mrf.mxu0
    %v324 = vadd.f32 %v192, %v323
    %325 = vmatprep.mubr.f32.mxu0 0.0
    %v326 = vand.u32 %v62, 4294901760
    %327 = vmatmul.mubr.f32.gmra.mxu0 %v326
    %v328 = vpop.f32.mrf.mxu0
    %v329 = vadd.f32 %v201, %v328
    %v330 = vpop.f32.mrf.mxu0
    %v331 = vadd.f32 %v203, %v330
    %332 = vmatprep.mubr.f32.mxu0 0.0
    %v333 = vand.u32 %v65, 4294901760
    %334 = vmatmul.mubr.f32.gmra.mxu0 %v333
    %v335 = vpop.f32.mrf.mxu0
    %v336 = vadd.f32 %v212, %v335
    %v337 = vpop.f32.mrf.mxu0
    %v338 = vadd.f32 %v214, %v337
    %339 = vdwg.mxu0
    %340 = vmatprep.subr.mxu0 0.0
    %341 = vmatpush1.msra.mxu0 0.0
    %342 = vmatprep.subr.mxu0 0.0
    %343 = vmatpush1.msra.mxu0 0.0
    %344 = vmatprep.subr.mxu0 0.0
    %345 = vmatpush1.msra.mxu0 0.0
    %346 = vmatprep.subr.mxu0 0.0
    %347 = vmatpush1.msra.mxu0 0.0
    %348 = vmatprep.subr.mxu0 0.0
    %349 = vmatpush1.msra.mxu0 0.0
    %350 = vmatprep.subr.mxu0 0.0
    %351 = vmatpush1.msra.mxu0 0.0
    %352 = vmatprep.subr.mxu0 0.0
    %353 = vmatpush1.msra.mxu0 0.0
    %354 = vmatprep.subr.mxu0 0.0
    %355 = vmatpush1.msra.mxu0 0.0
    %356 = vmatprep.subr.mxu0 0.0
    %357 = vmatpush1.msra.mxu0 0.0
    %358 = vmatprep.subr.mxu0 0.0
    %359 = vmatpush1.msra.mxu0 0.0
    %360 = vmatprep.subr.mxu0 0.0
    %361 = vmatpush1.msra.mxu0 0.0
    %362 = vmatprep.subr.mxu0 0.0
    %363 = vmatpush1.msra.mxu0 0.0
    %364 = vmatprep.subr.mxu0 0.0
    %365 = vmatpush1.msra.mxu0 0.0
    %366 = vmatprep.subr.mxu0 0.0
    %367 = vmatpush1.msra.mxu0 0.0
    %368 = vmatprep.subr.mxu0 0.0
    %369 = vmatpush1.msra.mxu0 0.0
    %v370 = vand.u32 %v70, 4294901760
    %v371 = vsub.f32 %v70, %v370
    %372 = vmatprep.subr.mxu0 %v371
    %v373 = vand.u32 %v68, 4294901760
    %v374 = vsub.f32 %v68, %v373
    %375 = vmatpush1.msra.mxu0 %v374
    %376 = vmatprep.subr.mxu0 0.0
    %377 = vmatpush2.msra.mxu0 0.0
    %378 = vmatprep.subr.mxu0 0.0
    %379 = vmatpush2.msra.mxu0 0.0
    %380 = vmatprep.subr.mxu0 0.0
    %381 = vmatpush2.msra.mxu0 0.0
    %382 = vmatprep.subr.mxu0 0.0
    %383 = vmatpush2.msra.mxu0 0.0
    %384 = vmatprep.subr.mxu0 0.0
    %385 = vmatpush2.msra.mxu0 0.0
    %386 = vmatprep.subr.mxu0 0.0
    %387 = vmatpush2.msra.mxu0 0.0
    %388 = vmatprep.subr.mxu0 0.0
    %389 = vmatpush2.msra.mxu0 0.0
    %390 = vmatprep.subr.mxu0 0.0
    %391 = vmatpush2.msra.mxu0 0.0
    %392 = vmatprep.subr.mxu0 0.0
    %393 = vmatpush2.msra.mxu0 0.0
    %394 = vmatprep.subr.mxu0 0.0
    %395 = vmatpush2.msra.mxu0 0.0
    %396 = vmatprep.subr.mxu0 0.0
    %397 = vmatpush2.msra.mxu0 0.0
    %398 = vmatprep.subr.mxu0 0.0
    %399 = vmatpush2.msra.mxu0 0.0
    %400 = vmatprep.subr.mxu0 0.0
    %401 = vmatpush2.msra.mxu0 0.0
    %402 = vmatprep.subr.mxu0 0.0
    %403 = vmatpush2.msra.mxu0 0.0
    %404 = vmatprep.subr.mxu0 0.0
    %405 = vmatpush2.msra.mxu0 0.0
    %406 = vmatprep.subr.mxu0 0.0
    %407 = vmatpush2.msra.mxu0 0.0
    %408 = vmatprep.mubr.f32.mxu0 0.0
    %v409 = vand.u32 %v47, 4294901760
    %v410 = vsub.f32 %v47, %v409
    %411 = vmatmul.mubr.f32.gmra.mxu0 %v410
    %v412 = vpop.f32.mrf.mxu0
    %v413 = vadd.f32 %v294, %v412
    %v414 = vpop.f32.mrf.mxu0
    %v415 = vadd.f32 %v296, %v414
    %416 = vmatprep.mubr.f32.mxu0 0.0
    %v417 = vand.u32 %v50, 4294901760
    %v418 = vsub.f32 %v50, %v417
    %419 = vmatmul.mubr.f32.gmra.mxu0 %v418
    %v420 = vpop.f32.mrf.mxu0
    %v421 = vadd.f32 %v301, %v420
    %v422 = vpop.f32.mrf.mxu0
    %v423 = vadd.f32 %v303, %v422
    %424 = vmatprep.mubr.f32.mxu0 0.0
    %v425 = vand.u32 %v53, 4294901760
    %v426 = vsub.f32 %v53, %v425
    %427 = vmatmul.mubr.f32.gmra.mxu0 %v426
    %v428 = vpop.f32.mrf.mxu0
    %v429 = vadd.f32 %v308, %v428
    %v430 = vpop.f32.mrf.mxu0
    %v431 = vadd.f32 %v310, %v430
    %432 = vmatprep.mubr.f32.mxu0 0.0
    %v433 = vand.u32 %v56, 4294901760
    %v434 = vsub.f32 %v56, %v433
    %435 = vmatmul.mubr.f32.gmra.mxu0 %v434
    %v436 = vpop.f32.mrf.mxu0
    %v437 = vadd.f32 %v315, %v436
    %v438 = vpop.f32.mrf.mxu0
    %v439 = vadd.f32 %v317, %v438
    %440 = vmatprep.mubr.f32.mxu0 0.0
    %v441 = vand.u32 %v59, 4294901760
    %v442 = vsub.f32 %v59, %v441
    %443 = vmatmul.mubr.f32.gmra.mxu0 %v442
    %v444 = vpop.f32.mrf.mxu0
    %v445 = vadd.f32 %v322, %v444
    %v446 = vpop.f32.mrf.mxu0
    %v447 = vadd.f32 %v324, %v446
    %448 = vmatprep.mubr.f32.mxu0 0.0
    %v449 = vand.u32 %v62, 4294901760
    %v450 = vsub.f32 %v62, %v449
    %451 = vmatmul.mubr.f32.gmra.mxu0 %v450
    %v452 = vpop.f32.mrf.mxu0
    %v453 = vadd.f32 %v329, %v452
    %v454 = vpop.f32.mrf.mxu0
    %v455 = vadd.f32 %v331, %v454
    %456 = vmatprep.mubr.f32.mxu0 0.0
    %v457 = vand.u32 %v65, 4294901760
    %v458 = vsub.f32 %v65, %v457
    %459 = vmatmul.mubr.f32.gmra.mxu0 %v458
    %v460 = vpop.f32.mrf.mxu0
    %v461 = vadd.f32 %v336, %v460
    %v462 = vpop.f32.mrf.mxu0
    %v463 = vadd.f32 %v338, %v462
    %464 = vdwg.mxu0
    %465 = vmatprep.subr.mxu0 0.0
    %466 = vmatpush1.msra.mxu0 0.0
    %467 = vmatprep.subr.mxu0 0.0
    %468 = vmatpush1.msra.mxu0 0.0
    %469 = vmatprep.subr.mxu0 0.0
    %470 = vmatpush1.msra.mxu0 0.0
    %471 = vmatprep.subr.mxu0 0.0
    %472 = vmatpush1.msra.mxu0 0.0
    %473 = vmatprep.subr.mxu0 0.0
    %474 = vmatpush1.msra.mxu0 0.0
    %475 = vmatprep.subr.mxu0 0.0
    %476 = vmatpush1.msra.mxu0 0.0
    %477 = vmatprep.subr.mxu0 0.0
    %478 = vmatpush1.msra.mxu0 0.0
    %479 = vmatprep.subr.mxu0 0.0
    %480 = vmatpush1.msra.mxu0 0.0
    %481 = vmatprep.subr.mxu0 0.0
    %482 = vmatpush1.msra.mxu0 0.0
    %483 = vmatprep.subr.mxu0 0.0
    %484 = vmatpush1.msra.mxu0 0.0
    %485 = vmatprep.subr.mxu0 0.0
    %486 = vmatpush1.msra.mxu0 0.0
    %487 = vmatprep.subr.mxu0 0.0
    %488 = vmatpush1.msra.mxu0 0.0
    %489 = vmatprep.subr.mxu0 0.0
    %490 = vmatpush1.msra.mxu0 0.0
    %491 = vmatprep.subr.mxu0 0.0
    %492 = vmatpush1.msra.mxu0 0.0
    %493 = vmatprep.subr.mxu0 0.0
    %494 = vmatpush1.msra.mxu0 0.0
    %v495 = vand.u32 %v70, 4294901760
    %496 = vmatprep.subr.mxu0 %v495
    %v497 = vand.u32 %v68, 4294901760
    %498 = vmatpush1.msra.mxu0 %v497
    %499 = vmatprep.subr.mxu0 0.0
    %500 = vmatpush2.msra.mxu0 0.0
    %501 = vmatprep.subr.mxu0 0.0
    %502 = vmatpush2.msra.mxu0 0.0
    %503 = vmatprep.subr.mxu0 0.0
    %504 = vmatpush2.msra.mxu0 0.0
    %505 = vmatprep.subr.mxu0 0.0
    %506 = vmatpush2.msra.mxu0 0.0
    %507 = vmatprep.subr.mxu0 0.0
    %508 = vmatpush2.msra.mxu0 0.0
    %509 = vmatprep.subr.mxu0 0.0
    %510 = vmatpush2.msra.mxu0 0.0
    %511 = vmatprep.subr.mxu0 0.0
    %512 = vmatpush2.msra.mxu0 0.0
    %513 = vmatprep.subr.mxu0 0.0
    %514 = vmatpush2.msra.mxu0 0.0
    %515 = vmatprep.subr.mxu0 0.0
    %516 = vmatpush2.msra.mxu0 0.0
    %517 = vmatprep.subr.mxu0 0.0
    %518 = vmatpush2.msra.mxu0 0.0
    %519 = vmatprep.subr.mxu0 0.0
    %520 = vmatpush2.msra.mxu0 0.0
    %521 = vmatprep.subr.mxu0 0.0
    %522 = vmatpush2.msra.mxu0 0.0
    %523 = vmatprep.subr.mxu0 0.0
    %524 = vmatpush2.msra.mxu0 0.0
    %525 = vmatprep.subr.mxu0 0.0
    %526 = vmatpush2.msra.mxu0 0.0
    %527 = vmatprep.subr.mxu0 0.0
    %528 = vmatpush2.msra.mxu0 0.0
    %529 = vmatprep.subr.mxu0 0.0
    %530 = vmatpush2.msra.mxu0 0.0
    %531 = vmatprep.mubr.f32.mxu0 0.0
    %v532 = vand.u32 %v47, 4294901760
    %v533 = vsub.f32 %v47, %v532
    %v534 = vand.u32 %v533, 4294901760
    %535 = vmatmul.mubr.f32.gmra.mxu0 %v534
    %v536 = vpop.f32.mrf.mxu0
    %v537 = vadd.f32 %v413, %v536
    %v538 = vpop.f32.mrf.mxu0
    %v539 = vadd.f32 %v415, %v538
    %540 = vmatprep.mubr.f32.mxu0 0.0
    %v541 = vand.u32 %v50, 4294901760
    %v542 = vsub.f32 %v50, %v541
    %v543 = vand.u32 %v542, 4294901760
    %544 = vmatmul.mubr.f32.gmra.mxu0 %v543
    %v545 = vpop.f32.mrf.mxu0
    %v546 = vadd.f32 %v421, %v545
    %v547 = vpop.f32.mrf.mxu0
    %v548 = vadd.f32 %v423, %v547
    %549 = vmatprep.mubr.f32.mxu0 0.0
    %v550 = vand.u32 %v53, 4294901760
    %v551 = vsub.f32 %v53, %v550
    %v552 = vand.u32 %v551, 4294901760
    %553 = vmatmul.mubr.f32.gmra.mxu0 %v552
    %v554 = vpop.f32.mrf.mxu0
    %v555 = vadd.f32 %v429, %v554
    %v556 = vpop.f32.mrf.mxu0
    %v557 = vadd.f32 %v431, %v556
    %558 = vmatprep.mubr.f32.mxu0 0.0
    %v559 = vand.u32 %v56, 4294901760
    %v560 = vsub.f32 %v56, %v559
    %v561 = vand.u32 %v560, 4294901760
    %562 = vmatmul.mubr.f32.gmra.mxu0 %v561
    %v563 = vpop.f32.mrf.mxu0
    %v564 = vadd.f32 %v437, %v563
    %v565 = vpop.f32.mrf.mxu0
    %v566 = vadd.f32 %v439, %v565
    %567 = vmatprep.mubr.f32.mxu0 0.0
    %v568 = vand.u32 %v59, 4294901760
    %v569 = vsub.f32 %v59, %v568
    %v570 = vand.u32 %v569, 4294901760
    %571 = vmatmul.mubr.f32.gmra.mxu0 %v570
    %v572 = vpop.f32.mrf.mxu0
    %v573 = vadd.f32 %v445, %v572
    %v574 = vpop.f32.mrf.mxu0
    %v575 = vadd.f32 %v447, %v574
    %576 = vmatprep.mubr.f32.mxu0 0.0
    %v577 = vand.u32 %v62, 4294901760
    %v578 = vsub.f32 %v62, %v577
    %v579 = vand.u32 %v578, 4294901760
    %580 = vmatmul.mubr.f32.gmra.mxu0 %v579
    %v581 = vpop.f32.mrf.mxu0
    %v582 = vadd.f32 %v453, %v581
    %v583 = vpop.f32.mrf.mxu0
    %v584 = vadd.f32 %v455, %v583
    %585 = vmatprep.mubr.f32.mxu0 0.0
    %v586 = vand.u32 %v65, 4294901760
    %v587 = vsub.f32 %v65, %v586
    %v588 = vand.u32 %v587, 4294901760
    %589 = vmatmul.mubr.f32.gmra.mxu0 %v588
    %v590 = vpop.f32.mrf.mxu0
    %v591 = vadd.f32 %v461, %v590
    %v592 = vpop.f32.mrf.mxu0
    %v593 = vadd.f32 %v463, %v592
    %594 = vdwg.mxu0
    %595 = vmatprep.subr.mxu0 0.0
    %596 = vmatpush1.msra.mxu0 0.0
    %597 = vmatprep.subr.mxu0 0.0
    %598 = vmatpush1.msra.mxu0 0.0
    %599 = vmatprep.subr.mxu0 0.0
    %600 = vmatpush1.msra.mxu0 0.0
    %601 = vmatprep.subr.mxu0 0.0
    %602 = vmatpush1.msra.mxu0 0.0
    %603 = vmatprep.subr.mxu0 0.0
    %604 = vmatpush1.msra.mxu0 0.0
    %605 = vmatprep.subr.mxu0 0.0
    %606 = vmatpush1.msra.mxu0 0.0
    %607 = vmatprep.subr.mxu0 0.0
    %608 = vmatpush1.msra.mxu0 0.0
    %609 = vmatprep.subr.mxu0 0.0
    %610 = vmatpush1.msra.mxu0 0.0
    %611 = vmatprep.subr.mxu0 0.0
    %612 = vmatpush1.msra.mxu0 0.0
    %613 = vmatprep.subr.mxu0 0.0
    %614 = vmatpush1.msra.mxu0 0.0
    %615 = vmatprep.subr.mxu0 0.0
    %616 = vmatpush1.msra.mxu0 0.0
    %617 = vmatprep.subr.mxu0 0.0
    %618 = vmatpush1.msra.mxu0 0.0
    %619 = vmatprep.subr.mxu0 0.0
    %620 = vmatpush1.msra.mxu0 0.0
    %621 = vmatprep.subr.mxu0 0.0
    %622 = vmatpush1.msra.mxu0 0.0
    %623 = vmatprep.subr.mxu0 0.0
    %624 = vmatpush1.msra.mxu0 0.0
    %v625 = vand.u32 %v70, 4294901760
    %v626 = vsub.f32 %v70, %v625
    %v627 = vand.u32 %v626, 4294901760
    %628 = vmatprep.subr.mxu0 %v627
    %v629 = vand.u32 %v68, 4294901760
    %v630 = vsub.f32 %v68, %v629
    %v631 = vand.u32 %v630, 4294901760
    %632 = vmatpush1.msra.mxu0 %v631
    %633 = vmatprep.subr.mxu0 0.0
    %634 = vmatpush2.msra.mxu0 0.0
    %635 = vmatprep.subr.mxu0 0.0
    %636 = vmatpush2.msra.mxu0 0.0
    %637 = vmatprep.subr.mxu0 0.0
    %638 = vmatpush2.msra.mxu0 0.0
    %639 = vmatprep.subr.mxu0 0.0
    %640 = vmatpush2.msra.mxu0 0.0
    %641 = vmatprep.subr.mxu0 0.0
    %642 = vmatpush2.msra.mxu0 0.0
    %643 = vmatprep.subr.mxu0 0.0
    %644 = vmatpush2.msra.mxu0 0.0
    %645 = vmatprep.subr.mxu0 0.0
    %646 = vmatpush2.msra.mxu0 0.0
    %647 = vmatprep.subr.mxu0 0.0
    %648 = vmatpush2.msra.mxu0 0.0
    %649 = vmatprep.subr.mxu0 0.0
    %650 = vmatpush2.msra.mxu0 0.0
    %651 = vmatprep.subr.mxu0 0.0
    %652 = vmatpush2.msra.mxu0 0.0
    %653 = vmatprep.subr.mxu0 0.0
    %654 = vmatpush2.msra.mxu0 0.0
    %655 = vmatprep.subr.mxu0 0.0
    %656 = vmatpush2.msra.mxu0 0.0
    %657 = vmatprep.subr.mxu0 0.0
    %658 = vmatpush2.msra.mxu0 0.0
    %659 = vmatprep.subr.mxu0 0.0
    %660 = vmatpush2.msra.mxu0 0.0
    %661 = vmatprep.subr.mxu0 0.0
    %662 = vmatpush2.msra.mxu0 0.0
    %663 = vmatprep.subr.mxu0 0.0
    %664 = vmatpush2.msra.mxu0 0.0
    %665 = vmatprep.mubr.f32.mxu0 0.0
    %v666 = vand.u32 %v47, 4294901760
    %667 = vmatmul.mubr.f32.gmra.mxu0 %v666
    %v668 = vpop.f32.mrf.mxu0
    %v669 = vadd.f32 %v537, %v668
    %v670 = vpop.f32.mrf.mxu0
    %v671 = vadd.f32 %v539, %v670
    %672 = vmatprep.mubr.f32.mxu0 0.0
    %v673 = vand.u32 %v50, 4294901760
    %674 = vmatmul.mubr.f32.gmra.mxu0 %v673
    %v675 = vpop.f32.mrf.mxu0
    %v676 = vadd.f32 %v546, %v675
    %v677 = vpop.f32.mrf.mxu0
    %v678 = vadd.f32 %v548, %v677
    %679 = vmatprep.mubr.f32.mxu0 0.0
    %v680 = vand.u32 %v53, 4294901760
    %681 = vmatmul.mubr.f32.gmra.mxu0 %v680
    %v682 = vpop.f32.mrf.mxu0
    %v683 = vadd.f32 %v555, %v682
    %v684 = vpop.f32.mrf.mxu0
    %v685 = vadd.f32 %v557, %v684
    %686 = vmatprep.mubr.f32.mxu0 0.0
    %v687 = vand.u32 %v56, 4294901760
    %688 = vmatmul.mubr.f32.gmra.mxu0 %v687
    %v689 = vpop.f32.mrf.mxu0
    %v690 = vadd.f32 %v564, %v689
    %v691 = vpop.f32.mrf.mxu0
    %v692 = vadd.f32 %v566, %v691
    %693 = vmatprep.mubr.f32.mxu0 0.0
    %v694 = vand.u32 %v59, 4294901760
    %695 = vmatmul.mubr.f32.gmra.mxu0 %v694
    %v696 = vpop.f32.mrf.mxu0
    %v697 = vadd.f32 %v573, %v696
    %v698 = vpop.f32.mrf.mxu0
    %v699 = vadd.f32 %v575, %v698
    %700 = vmatprep.mubr.f32.mxu0 0.0
    %v701 = vand.u32 %v62, 4294901760
    %702 = vmatmul.mubr.f32.gmra.mxu0 %v701
    %v703 = vpop.f32.mrf.mxu0
    %v704 = vadd.f32 %v582, %v703
    %v705 = vpop.f32.mrf.mxu0
    %v706 = vadd.f32 %v584, %v705
    %707 = vmatprep.mubr.f32.mxu0 0.0
    %v708 = vand.u32 %v65, 4294901760
    %709 = vmatmul.mubr.f32.gmra.mxu0 %v708
    %v710 = vpop.f32.mrf.mxu0
    %v711 = vadd.f32 %v591, %v710
    %v712 = vpop.f32.mrf.mxu0
    %v713 = vadd.f32 %v593, %v712
    %714 = vdwg.mxu0
    %715 = vmatprep.subr.mxu0 0.0
    %716 = vmatpush1.msra.mxu0 0.0
    %717 = vmatprep.subr.mxu0 0.0
    %718 = vmatpush1.msra.mxu0 0.0
    %719 = vmatprep.subr.mxu0 0.0
    %720 = vmatpush1.msra.mxu0 0.0
    %721 = vmatprep.subr.mxu0 0.0
    %722 = vmatpush1.msra.mxu0 0.0
    %723 = vmatprep.subr.mxu0 0.0
    %724 = vmatpush1.msra.mxu0 0.0
    %725 = vmatprep.subr.mxu0 0.0
    %726 = vmatpush1.msra.mxu0 0.0
    %727 = vmatprep.subr.mxu0 0.0
    %728 = vmatpush1.msra.mxu0 0.0
    %729 = vmatprep.subr.mxu0 0.0
    %730 = vmatpush1.msra.mxu0 0.0
    %731 = vmatprep.subr.mxu0 0.0
    %732 = vmatpush1.msra.mxu0 0.0
    %733 = vmatprep.subr.mxu0 0.0
    %734 = vmatpush1.msra.mxu0 0.0
    %735 = vmatprep.subr.mxu0 0.0
    %736 = vmatpush1.msra.mxu0 0.0
    %737 = vmatprep.subr.mxu0 0.0
    %738 = vmatpush1.msra.mxu0 0.0
    %739 = vmatprep.subr.mxu0 0.0
    %740 = vmatpush1.msra.mxu0 0.0
    %741 = vmatprep.subr.mxu0 0.0
    %742 = vmatpush1.msra.mxu0 0.0
    %743 = vmatprep.subr.mxu0 0.0
    %744 = vmatpush1.msra.mxu0 0.0
    %v745 = vand.u32 %v70, 4294901760
    %746 = vmatprep.subr.mxu0 %v745
    %v747 = vand.u32 %v68, 4294901760
    %748 = vmatpush1.msra.mxu0 %v747
    %749 = vmatprep.subr.mxu0 0.0
    %750 = vmatpush2.msra.mxu0 0.0
    %751 = vmatprep.subr.mxu0 0.0
    %752 = vmatpush2.msra.mxu0 0.0
    %753 = vmatprep.subr.mxu0 0.0
    %754 = vmatpush2.msra.mxu0 0.0
    %755 = vmatprep.subr.mxu0 0.0
    %756 = vmatpush2.msra.mxu0 0.0
    %757 = vmatprep.subr.mxu0 0.0
    %758 = vmatpush2.msra.mxu0 0.0
    %759 = vmatprep.subr.mxu0 0.0
    %760 = vmatpush2.msra.mxu0 0.0
    %761 = vmatprep.subr.mxu0 0.0
    %762 = vmatpush2.msra.mxu0 0.0
    %763 = vmatprep.subr.mxu0 0.0
    %764 = vmatpush2.msra.mxu0 0.0
    %765 = vmatprep.subr.mxu0 0.0
    %766 = vmatpush2.msra.mxu0 0.0
    %767 = vmatprep.subr.mxu0 0.0
    %768 = vmatpush2.msra.mxu0 0.0
    %769 = vmatprep.subr.mxu0 0.0
    %770 = vmatpush2.msra.mxu0 0.0
    %771 = vmatprep.subr.mxu0 0.0
    %772 = vmatpush2.msra.mxu0 0.0
    %773 = vmatprep.subr.mxu0 0.0
    %774 = vmatpush2.msra.mxu0 0.0
    %775 = vmatprep.subr.mxu0 0.0
    %776 = vmatpush2.msra.mxu0 0.0
    %777 = vmatprep.subr.mxu0 0.0
    %778 = vmatpush2.msra.mxu0 0.0
    %779 = vmatprep.subr.mxu0 0.0
    %780 = vmatpush2.msra.mxu0 0.0
    %781 = vmatprep.mubr.f32.mxu0 0.0
    %v782 = vand.u32 %v47, 4294901760
    %783 = vmatmul.mubr.f32.gmra.mxu0 %v782
    %v784 = vpop.f32.mrf.mxu0
    %v785 = vadd.f32 %v669, %v784
    %v786 = vpop.f32.mrf.mxu0
    %v787 = vadd.f32 %v671, %v786
    %788 = vmatprep.mubr.f32.mxu0 0.0
    %v789 = vand.u32 %v50, 4294901760
    %790 = vmatmul.mubr.f32.gmra.mxu0 %v789
    %v791 = vpop.f32.mrf.mxu0
    %v792 = vadd.f32 %v676, %v791
    %v793 = vpop.f32.mrf.mxu0
    %v794 = vadd.f32 %v678, %v793
    %795 = vmatprep.mubr.f32.mxu0 0.0
    %v796 = vand.u32 %v53, 4294901760
    %797 = vmatmul.mubr.f32.gmra.mxu0 %v796
    %v798 = vpop.f32.mrf.mxu0
    %v799 = vadd.f32 %v683, %v798
    %v800 = vpop.f32.mrf.mxu0
    %v801 = vadd.f32 %v685, %v800
    %802 = vmatprep.mubr.f32.mxu0 0.0
    %v803 = vand.u32 %v56, 4294901760
    %804 = vmatmul.mubr.f32.gmra.mxu0 %v803
    %v805 = vpop.f32.mrf.mxu0
    %v806 = vadd.f32 %v690, %v805
    %v807 = vpop.f32.mrf.mxu0
    %v808 = vadd.f32 %v692, %v807
    %809 = vmatprep.mubr.f32.mxu0 0.0
    %v810 = vand.u32 %v59, 4294901760
    %811 = vmatmul.mubr.f32.gmra.mxu0 %v810
    %v812 = vpop.f32.mrf.mxu0
    %v813 = vadd.f32 %v697, %v812
    %v814 = vpop.f32.mrf.mxu0
    %v815 = vadd.f32 %v699, %v814
    %816 = vmatprep.mubr.f32.mxu0 0.0
    %v817 = vand.u32 %v62, 4294901760
    %818 = vmatmul.mubr.f32.gmra.mxu0 %v817
    %v819 = vpop.f32.mrf.mxu0
    %v820 = vadd.f32 %v704, %v819
    %v821 = vpop.f32.mrf.mxu0
    %v822 = vadd.f32 %v706, %v821
    %823 = vmatprep.mubr.f32.mxu0 0.0
    %v824 = vand.u32 %v65, 4294901760
    %825 = vmatmul.mubr.f32.gmra.mxu0 %v824
    %v826 = vpop.f32.mrf.mxu0
    %v827 = vadd.f32 %v711, %v826
    %v828 = vpop.f32.mrf.mxu0
    %v829 = vadd.f32 %v713, %v828
    %830 = vdwg.mxu0
    %v833 = vunpack.c.l.s4 1983009808
    %v834 = vunpack.c.0.s8 %v833
    %v835 = vlaneseq
    %v836 = vshrl.u32 %v835, 7
    %v837 = vsub.s32 %v834, %v836
    %v838 = vrot.slane %v34, %v837
    %v839 = vcombine.high %v838, %v838
    %vm840 = vcmask 15360
    %v842 = vsel %vm840, %v27, 0
    %v845 = vsel %vm840, %v28, 0
    %v848 = vsel %vm840, %v29, 0
    %v851 = vsel %vm840, %v30, 0
    %v854 = vsel %vm840, %v31, 0
    %v857 = vsel %vm840, %v32, 0
    %v860 = vsel %vm840, %v33, 0
    %vm862 = vcmask 1041408
    %v863 = vsel %vm862, %v838, 0
    %v865 = vsel %vm862, %v839, 0
    %867 = vmatprep.subr.mxu0 0.0
    %868 = vmatpush1.msra.mxu0 0.0
    %869 = vmatprep.subr.mxu0 0.0
    %870 = vmatpush1.msra.mxu0 0.0
    %871 = vmatprep.subr.mxu0 0.0
    %872 = vmatpush1.msra.mxu0 0.0
    %873 = vmatprep.subr.mxu0 0.0
    %874 = vmatpush1.msra.mxu0 0.0
    %875 = vmatprep.subr.mxu0 0.0
    %876 = vmatpush1.msra.mxu0 0.0
    %877 = vmatprep.subr.mxu0 0.0
    %878 = vmatpush1.msra.mxu0 0.0
    %879 = vmatprep.subr.mxu0 0.0
    %880 = vmatpush1.msra.mxu0 0.0
    %881 = vmatprep.subr.mxu0 0.0
    %882 = vmatpush1.msra.mxu0 0.0
    %883 = vmatprep.subr.mxu0 0.0
    %884 = vmatpush1.msra.mxu0 0.0
    %885 = vmatprep.subr.mxu0 0.0
    %886 = vmatpush1.msra.mxu0 0.0
    %887 = vmatprep.subr.mxu0 0.0
    %888 = vmatpush1.msra.mxu0 0.0
    %889 = vmatprep.subr.mxu0 0.0
    %890 = vmatpush1.msra.mxu0 0.0
    %891 = vmatprep.subr.mxu0 0.0
    %892 = vmatpush1.msra.mxu0 0.0
    %893 = vmatprep.subr.mxu0 0.0
    %894 = vmatpush1.msra.mxu0 0.0
    %895 = vmatprep.subr.mxu0 0.0
    %896 = vmatpush1.msra.mxu0 0.0
    %v897 = vand.u32 %v865, 4294901760
    %898 = vmatprep.subr.mxu0 %v897
    %v899 = vand.u32 %v863, 4294901760
    %900 = vmatpush1.msra.mxu0 %v899
    %901 = vmatprep.subr.mxu0 0.0
    %902 = vmatpush2.msra.mxu0 0.0
    %903 = vmatprep.subr.mxu0 0.0
    %904 = vmatpush2.msra.mxu0 0.0
    %905 = vmatprep.subr.mxu0 0.0
    %906 = vmatpush2.msra.mxu0 0.0
    %907 = vmatprep.subr.mxu0 0.0
    %908 = vmatpush2.msra.mxu0 0.0
    %909 = vmatprep.subr.mxu0 0.0
    %910 = vmatpush2.msra.mxu0 0.0
    %911 = vmatprep.subr.mxu0 0.0
    %912 = vmatpush2.msra.mxu0 0.0
    %913 = vmatprep.subr.mxu0 0.0
    %914 = vmatpush2.msra.mxu0 0.0
    %915 = vmatprep.subr.mxu0 0.0
    %916 = vmatpush2.msra.mxu0 0.0
    %917 = vmatprep.subr.mxu0 0.0
    %918 = vmatpush2.msra.mxu0 0.0
    %919 = vmatprep.subr.mxu0 0.0
    %920 = vmatpush2.msra.mxu0 0.0
    %921 = vmatprep.subr.mxu0 0.0
    %922 = vmatpush2.msra.mxu0 0.0
    %923 = vmatprep.subr.mxu0 0.0
    %924 = vmatpush2.msra.mxu0 0.0
    %925 = vmatprep.subr.mxu0 0.0
    %926 = vmatpush2.msra.mxu0 0.0
    %927 = vmatprep.subr.mxu0 0.0
    %928 = vmatpush2.msra.mxu0 0.0
    %929 = vmatprep.subr.mxu0 0.0
    %930 = vmatpush2.msra.mxu0 0.0
    %931 = vmatprep.subr.mxu0 0.0
    %932 = vmatpush2.msra.mxu0 0.0
    %933 = vmatprep.mubr.f32.mxu0 0.0
    %v934 = vand.u32 %v842, 4294901760
    %v935 = vsub.f32 %v842, %v934
    %v936 = vand.u32 %v935, 4294901760
    %v937 = vsub.f32 %v935, %v936
    %v938 = vand.u32 %v937, 4294901760
    %939 = vmatmul.mubr.f32.gmra.mxu0 %v938
    %v940 = vpop.f32.mrf.mxu0
    %v941 = vadd.f32 %v785, %v940
    %v942 = vpop.f32.mrf.mxu0
    %v943 = vadd.f32 %v787, %v942
    %944 = vmatprep.mubr.f32.mxu0 0.0
    %v945 = vand.u32 %v845, 4294901760
    %v946 = vsub.f32 %v845, %v945
    %v947 = vand.u32 %v946, 4294901760
    %v948 = vsub.f32 %v946, %v947
    %v949 = vand.u32 %v948, 4294901760
    %950 = vmatmul.mubr.f32.gmra.mxu0 %v949
    %v951 = vpop.f32.mrf.mxu0
    %v952 = vadd.f32 %v792, %v951
    %v953 = vpop.f32.mrf.mxu0
    %v954 = vadd.f32 %v794, %v953
    %955 = vmatprep.mubr.f32.mxu0 0.0
    %v956 = vand.u32 %v848, 4294901760
    %v957 = vsub.f32 %v848, %v956
    %v958 = vand.u32 %v957, 4294901760
    %v959 = vsub.f32 %v957, %v958
    %v960 = vand.u32 %v959, 4294901760
    %961 = vmatmul.mubr.f32.gmra.mxu0 %v960
    %v962 = vpop.f32.mrf.mxu0
    %v963 = vadd.f32 %v799, %v962
    %v964 = vpop.f32.mrf.mxu0
    %v965 = vadd.f32 %v801, %v964
    %966 = vmatprep.mubr.f32.mxu0 0.0
    %v967 = vand.u32 %v851, 4294901760
    %v968 = vsub.f32 %v851, %v967
    %v969 = vand.u32 %v968, 4294901760
    %v970 = vsub.f32 %v968, %v969
    %v971 = vand.u32 %v970, 4294901760
    %972 = vmatmul.mubr.f32.gmra.mxu0 %v971
    %v973 = vpop.f32.mrf.mxu0
    %v974 = vadd.f32 %v806, %v973
    %v975 = vpop.f32.mrf.mxu0
    %v976 = vadd.f32 %v808, %v975
    %977 = vmatprep.mubr.f32.mxu0 0.0
    %v978 = vand.u32 %v854, 4294901760
    %v979 = vsub.f32 %v854, %v978
    %v980 = vand.u32 %v979, 4294901760
    %v981 = vsub.f32 %v979, %v980
    %v982 = vand.u32 %v981, 4294901760
    %983 = vmatmul.mubr.f32.gmra.mxu0 %v982
    %v984 = vpop.f32.mrf.mxu0
    %v985 = vadd.f32 %v813, %v984
    %v986 = vpop.f32.mrf.mxu0
    %v987 = vadd.f32 %v815, %v986
    %988 = vmatprep.mubr.f32.mxu0 0.0
    %v989 = vand.u32 %v857, 4294901760
    %v990 = vsub.f32 %v857, %v989
    %v991 = vand.u32 %v990, 4294901760
    %v992 = vsub.f32 %v990, %v991
    %v993 = vand.u32 %v992, 4294901760
    %994 = vmatmul.mubr.f32.gmra.mxu0 %v993
    %v995 = vpop.f32.mrf.mxu0
    %v996 = vadd.f32 %v820, %v995
    %v997 = vpop.f32.mrf.mxu0
    %v998 = vadd.f32 %v822, %v997
    %999 = vmatprep.mubr.f32.mxu0 0.0
    %v1000 = vand.u32 %v860, 4294901760
    %v1001 = vsub.f32 %v860, %v1000
    %v1002 = vand.u32 %v1001, 4294901760
    %v1003 = vsub.f32 %v1001, %v1002
    %v1004 = vand.u32 %v1003, 4294901760
    %1005 = vmatmul.mubr.f32.gmra.mxu0 %v1004
    %v1006 = vpop.f32.mrf.mxu0
    %v1007 = vadd.f32 %v827, %v1006
    %v1008 = vpop.f32.mrf.mxu0
    %v1009 = vadd.f32 %v829, %v1008
    %1010 = vdwg.mxu0
    %1011 = vmatprep.subr.mxu0 0.0
    %1012 = vmatpush1.msra.mxu0 0.0
    %1013 = vmatprep.subr.mxu0 0.0
    %1014 = vmatpush1.msra.mxu0 0.0
    %1015 = vmatprep.subr.mxu0 0.0
    %1016 = vmatpush1.msra.mxu0 0.0
    %1017 = vmatprep.subr.mxu0 0.0
    %1018 = vmatpush1.msra.mxu0 0.0
    %1019 = vmatprep.subr.mxu0 0.0
    %1020 = vmatpush1.msra.mxu0 0.0
    %1021 = vmatprep.subr.mxu0 0.0
    %1022 = vmatpush1.msra.mxu0 0.0
    %1023 = vmatprep.subr.mxu0 0.0
    %1024 = vmatpush1.msra.mxu0 0.0
    %1025 = vmatprep.subr.mxu0 0.0
    %1026 = vmatpush1.msra.mxu0 0.0
    %1027 = vmatprep.subr.mxu0 0.0
    %1028 = vmatpush1.msra.mxu0 0.0
    %1029 = vmatprep.subr.mxu0 0.0
    %1030 = vmatpush1.msra.mxu0 0.0
    %1031 = vmatprep.subr.mxu0 0.0
    %1032 = vmatpush1.msra.mxu0 0.0
    %1033 = vmatprep.subr.mxu0 0.0
    %1034 = vmatpush1.msra.mxu0 0.0
    %1035 = vmatprep.subr.mxu0 0.0
    %1036 = vmatpush1.msra.mxu0 0.0
    %1037 = vmatprep.subr.mxu0 0.0
    %1038 = vmatpush1.msra.mxu0 0.0
    %1039 = vmatprep.subr.mxu0 0.0
    %1040 = vmatpush1.msra.mxu0 0.0
    %v1041 = vand.u32 %v865, 4294901760
    %v1042 = vsub.f32 %v865, %v1041
    %v1043 = vand.u32 %v1042, 4294901760
    %v1044 = vsub.f32 %v1042, %v1043
    %v1045 = vand.u32 %v1044, 4294901760
    %1046 = vmatprep.subr.mxu0 %v1045
    %v1047 = vand.u32 %v863, 4294901760
    %v1048 = vsub.f32 %v863, %v1047
    %v1049 = vand.u32 %v1048, 4294901760
    %v1050 = vsub.f32 %v1048, %v1049
    %v1051 = vand.u32 %v1050, 4294901760
    %1052 = vmatpush1.msra.mxu0 %v1051
    %1053 = vmatprep.subr.mxu0 0.0
    %1054 = vmatpush2.msra.mxu0 0.0
    %1055 = vmatprep.subr.mxu0 0.0
    %1056 = vmatpush2.msra.mxu0 0.0
    %1057 = vmatprep.subr.mxu0 0.0
    %1058 = vmatpush2.msra.mxu0 0.0
    %1059 = vmatprep.subr.mxu0 0.0
    %1060 = vmatpush2.msra.mxu0 0.0
    %1061 = vmatprep.subr.mxu0 0.0
    %1062 = vmatpush2.msra.mxu0 0.0
    %1063 = vmatprep.subr.mxu0 0.0
    %1064 = vmatpush2.msra.mxu0 0.0
    %1065 = vmatprep.subr.mxu0 0.0
    %1066 = vmatpush2.msra.mxu0 0.0
    %1067 = vmatprep.subr.mxu0 0.0
    %1068 = vmatpush2.msra.mxu0 0.0
    %1069 = vmatprep.subr.mxu0 0.0
    %1070 = vmatpush2.msra.mxu0 0.0
    %1071 = vmatprep.subr.mxu0 0.0
    %1072 = vmatpush2.msra.mxu0 0.0
    %1073 = vmatprep.subr.mxu0 0.0
    %1074 = vmatpush2.msra.mxu0 0.0
    %1075 = vmatprep.subr.mxu0 0.0
    %1076 = vmatpush2.msra.mxu0 0.0
    %1077 = vmatprep.subr.mxu0 0.0
    %1078 = vmatpush2.msra.mxu0 0.0
    %1079 = vmatprep.subr.mxu0 0.0
    %1080 = vmatpush2.msra.mxu0 0.0
    %1081 = vmatprep.subr.mxu0 0.0
    %1082 = vmatpush2.msra.mxu0 0.0
    %1083 = vmatprep.subr.mxu0 0.0
    %1084 = vmatpush2.msra.mxu0 0.0
    %1085 = vmatprep.mubr.f32.mxu0 0.0
    %v1086 = vand.u32 %v842, 4294901760
    %1087 = vmatmul.mubr.f32.gmra.mxu0 %v1086
    %v1088 = vpop.f32.mrf.mxu0
    %v1089 = vadd.f32 %v941, %v1088
    %v1090 = vpop.f32.mrf.mxu0
    %v1091 = vadd.f32 %v943, %v1090
    %1092 = vmatprep.mubr.f32.mxu0 0.0
    %v1093 = vand.u32 %v845, 4294901760
    %1094 = vmatmul.mubr.f32.gmra.mxu0 %v1093
    %v1095 = vpop.f32.mrf.mxu0
    %v1096 = vadd.f32 %v952, %v1095
    %v1097 = vpop.f32.mrf.mxu0
    %v1098 = vadd.f32 %v954, %v1097
    %1099 = vmatprep.mubr.f32.mxu0 0.0
    %v1100 = vand.u32 %v848, 4294901760
    %1101 = vmatmul.mubr.f32.gmra.mxu0 %v1100
    %v1102 = vpop.f32.mrf.mxu0
    %v1103 = vadd.f32 %v963, %v1102
    %v1104 = vpop.f32.mrf.mxu0
    %v1105 = vadd.f32 %v965, %v1104
    %1106 = vmatprep.mubr.f32.mxu0 0.0
    %v1107 = vand.u32 %v851, 4294901760
    %1108 = vmatmul.mubr.f32.gmra.mxu0 %v1107
    %v1109 = vpop.f32.mrf.mxu0
    %v1110 = vadd.f32 %v974, %v1109
    %v1111 = vpop.f32.mrf.mxu0
    %v1112 = vadd.f32 %v976, %v1111
    %1113 = vmatprep.mubr.f32.mxu0 0.0
    %v1114 = vand.u32 %v854, 4294901760
    %1115 = vmatmul.mubr.f32.gmra.mxu0 %v1114
    %v1116 = vpop.f32.mrf.mxu0
    %v1117 = vadd.f32 %v985, %v1116
    %v1118 = vpop.f32.mrf.mxu0
    %v1119 = vadd.f32 %v987, %v1118
    %1120 = vmatprep.mubr.f32.mxu0 0.0
    %v1121 = vand.u32 %v857, 4294901760
    %1122 = vmatmul.mubr.f32.gmra.mxu0 %v1121
    %v1123 = vpop.f32.mrf.mxu0
    %v1124 = vadd.f32 %v996, %v1123
    %v1125 = vpop.f32.mrf.mxu0
    %v1126 = vadd.f32 %v998, %v1125
    %1127 = vmatprep.mubr.f32.mxu0 0.0
    %v1128 = vand.u32 %v860, 4294901760
    %1129 = vmatmul.mubr.f32.gmra.mxu0 %v1128
    %v1130 = vpop.f32.mrf.mxu0
    %v1131 = vadd.f32 %v1007, %v1130
    %v1132 = vpop.f32.mrf.mxu0
    %v1133 = vadd.f32 %v1009, %v1132
    %1134 = vdwg.mxu0
    %1135 = vmatprep.subr.mxu0 0.0
    %1136 = vmatpush1.msra.mxu0 0.0
    %1137 = vmatprep.subr.mxu0 0.0
    %1138 = vmatpush1.msra.mxu0 0.0
    %1139 = vmatprep.subr.mxu0 0.0
    %1140 = vmatpush1.msra.mxu0 0.0
    %1141 = vmatprep.subr.mxu0 0.0
    %1142 = vmatpush1.msra.mxu0 0.0
    %1143 = vmatprep.subr.mxu0 0.0
    %1144 = vmatpush1.msra.mxu0 0.0
    %1145 = vmatprep.subr.mxu0 0.0
    %1146 = vmatpush1.msra.mxu0 0.0
    %1147 = vmatprep.subr.mxu0 0.0
    %1148 = vmatpush1.msra.mxu0 0.0
    %1149 = vmatprep.subr.mxu0 0.0
    %1150 = vmatpush1.msra.mxu0 0.0
    %1151 = vmatprep.subr.mxu0 0.0
    %1152 = vmatpush1.msra.mxu0 0.0
    %1153 = vmatprep.subr.mxu0 0.0
    %1154 = vmatpush1.msra.mxu0 0.0
    %1155 = vmatprep.subr.mxu0 0.0
    %1156 = vmatpush1.msra.mxu0 0.0
    %1157 = vmatprep.subr.mxu0 0.0
    %1158 = vmatpush1.msra.mxu0 0.0
    %1159 = vmatprep.subr.mxu0 0.0
    %1160 = vmatpush1.msra.mxu0 0.0
    %1161 = vmatprep.subr.mxu0 0.0
    %1162 = vmatpush1.msra.mxu0 0.0
    %1163 = vmatprep.subr.mxu0 0.0
    %1164 = vmatpush1.msra.mxu0 0.0
    %v1165 = vand.u32 %v865, 4294901760
    %v1166 = vsub.f32 %v865, %v1165
    %1167 = vmatprep.subr.mxu0 %v1166
    %v1168 = vand.u32 %v863, 4294901760
    %v1169 = vsub.f32 %v863, %v1168
    %1170 = vmatpush1.msra.mxu0 %v1169
    %1171 = vmatprep.subr.mxu0 0.0
    %1172 = vmatpush2.msra.mxu0 0.0
    %1173 = vmatprep.subr.mxu0 0.0
    %1174 = vmatpush2.msra.mxu0 0.0
    %1175 = vmatprep.subr.mxu0 0.0
    %1176 = vmatpush2.msra.mxu0 0.0
    %1177 = vmatprep.subr.mxu0 0.0
    %1178 = vmatpush2.msra.mxu0 0.0
    %1179 = vmatprep.subr.mxu0 0.0
    %1180 = vmatpush2.msra.mxu0 0.0
    %1181 = vmatprep.subr.mxu0 0.0
    %1182 = vmatpush2.msra.mxu0 0.0
    %1183 = vmatprep.subr.mxu0 0.0
    %1184 = vmatpush2.msra.mxu0 0.0
    %1185 = vmatprep.subr.mxu0 0.0
    %1186 = vmatpush2.msra.mxu0 0.0
    %1187 = vmatprep.subr.mxu0 0.0
    %1188 = vmatpush2.msra.mxu0 0.0
    %1189 = vmatprep.subr.mxu0 0.0
    %1190 = vmatpush2.msra.mxu0 0.0
    %1191 = vmatprep.subr.mxu0 0.0
    %1192 = vmatpush2.msra.mxu0 0.0
    %1193 = vmatprep.subr.mxu0 0.0
    %1194 = vmatpush2.msra.mxu0 0.0
    %1195 = vmatprep.subr.mxu0 0.0
    %1196 = vmatpush2.msra.mxu0 0.0
    %1197 = vmatprep.subr.mxu0 0.0
    %1198 = vmatpush2.msra.mxu0 0.0
    %1199 = vmatprep.subr.mxu0 0.0
    %1200 = vmatpush2.msra.mxu0 0.0
    %1201 = vmatprep.subr.mxu0 0.0
    %1202 = vmatpush2.msra.mxu0 0.0
    %1203 = vmatprep.mubr.f32.mxu0 0.0
    %v1204 = vand.u32 %v842, 4294901760
    %v1205 = vsub.f32 %v842, %v1204
    %1206 = vmatmul.mubr.f32.gmra.mxu0 %v1205
    %v1207 = vpop.f32.mrf.mxu0
    %v1208 = vadd.f32 %v1089, %v1207
    %v1209 = vpop.f32.mrf.mxu0
    %v1210 = vadd.f32 %v1091, %v1209
    %1211 = vmatprep.mubr.f32.mxu0 0.0
    %v1212 = vand.u32 %v845, 4294901760
    %v1213 = vsub.f32 %v845, %v1212
    %1214 = vmatmul.mubr.f32.gmra.mxu0 %v1213
    %v1215 = vpop.f32.mrf.mxu0
    %v1216 = vadd.f32 %v1096, %v1215
    %v1217 = vpop.f32.mrf.mxu0
    %v1218 = vadd.f32 %v1098, %v1217
    %1219 = vmatprep.mubr.f32.mxu0 0.0
    %v1220 = vand.u32 %v848, 4294901760
    %v1221 = vsub.f32 %v848, %v1220
    %1222 = vmatmul.mubr.f32.gmra.mxu0 %v1221
    %v1223 = vpop.f32.mrf.mxu0
    %v1224 = vadd.f32 %v1103, %v1223
    %v1225 = vpop.f32.mrf.mxu0
    %v1226 = vadd.f32 %v1105, %v1225
    %1227 = vmatprep.mubr.f32.mxu0 0.0
    %v1228 = vand.u32 %v851, 4294901760
    %v1229 = vsub.f32 %v851, %v1228
    %1230 = vmatmul.mubr.f32.gmra.mxu0 %v1229
    %v1231 = vpop.f32.mrf.mxu0
    %v1232 = vadd.f32 %v1110, %v1231
    %v1233 = vpop.f32.mrf.mxu0
    %v1234 = vadd.f32 %v1112, %v1233
    %1235 = vmatprep.mubr.f32.mxu0 0.0
    %v1236 = vand.u32 %v854, 4294901760
    %v1237 = vsub.f32 %v854, %v1236
    %1238 = vmatmul.mubr.f32.gmra.mxu0 %v1237
    %v1239 = vpop.f32.mrf.mxu0
    %v1240 = vadd.f32 %v1117, %v1239
    %v1241 = vpop.f32.mrf.mxu0
    %v1242 = vadd.f32 %v1119, %v1241
    %1243 = vmatprep.mubr.f32.mxu0 0.0
    %v1244 = vand.u32 %v857, 4294901760
    %v1245 = vsub.f32 %v857, %v1244
    %1246 = vmatmul.mubr.f32.gmra.mxu0 %v1245
    %v1247 = vpop.f32.mrf.mxu0
    %v1248 = vadd.f32 %v1124, %v1247
    %v1249 = vpop.f32.mrf.mxu0
    %v1250 = vadd.f32 %v1126, %v1249
    %1251 = vmatprep.mubr.f32.mxu0 0.0
    %v1252 = vand.u32 %v860, 4294901760
    %v1253 = vsub.f32 %v860, %v1252
    %1254 = vmatmul.mubr.f32.gmra.mxu0 %v1253
    %v1255 = vpop.f32.mrf.mxu0
    %v1256 = vadd.f32 %v1131, %v1255
    %v1257 = vpop.f32.mrf.mxu0
    %v1258 = vadd.f32 %v1133, %v1257
    %1259 = vdwg.mxu0
    %1260 = vmatprep.subr.mxu0 0.0
    %1261 = vmatpush1.msra.mxu0 0.0
    %1262 = vmatprep.subr.mxu0 0.0
    %1263 = vmatpush1.msra.mxu0 0.0
    %1264 = vmatprep.subr.mxu0 0.0
    %1265 = vmatpush1.msra.mxu0 0.0
    %1266 = vmatprep.subr.mxu0 0.0
    %1267 = vmatpush1.msra.mxu0 0.0
    %1268 = vmatprep.subr.mxu0 0.0
    %1269 = vmatpush1.msra.mxu0 0.0
    %1270 = vmatprep.subr.mxu0 0.0
    %1271 = vmatpush1.msra.mxu0 0.0
    %1272 = vmatprep.subr.mxu0 0.0
    %1273 = vmatpush1.msra.mxu0 0.0
    %1274 = vmatprep.subr.mxu0 0.0
    %1275 = vmatpush1.msra.mxu0 0.0
    %1276 = vmatprep.subr.mxu0 0.0
    %1277 = vmatpush1.msra.mxu0 0.0
    %1278 = vmatprep.subr.mxu0 0.0
    %1279 = vmatpush1.msra.mxu0 0.0
    %1280 = vmatprep.subr.mxu0 0.0
    %1281 = vmatpush1.msra.mxu0 0.0
    %1282 = vmatprep.subr.mxu0 0.0
    %1283 = vmatpush1.msra.mxu0 0.0
    %1284 = vmatprep.subr.mxu0 0.0
    %1285 = vmatpush1.msra.mxu0 0.0
    %1286 = vmatprep.subr.mxu0 0.0
    %1287 = vmatpush1.msra.mxu0 0.0
    %1288 = vmatprep.subr.mxu0 0.0
    %1289 = vmatpush1.msra.mxu0 0.0
    %v1290 = vand.u32 %v865, 4294901760
    %1291 = vmatprep.subr.mxu0 %v1290
    %v1292 = vand.u32 %v863, 4294901760
    %1293 = vmatpush1.msra.mxu0 %v1292
    %1294 = vmatprep.subr.mxu0 0.0
    %1295 = vmatpush2.msra.mxu0 0.0
    %1296 = vmatprep.subr.mxu0 0.0
    %1297 = vmatpush2.msra.mxu0 0.0
    %1298 = vmatprep.subr.mxu0 0.0
    %1299 = vmatpush2.msra.mxu0 0.0
    %1300 = vmatprep.subr.mxu0 0.0
    %1301 = vmatpush2.msra.mxu0 0.0
    %1302 = vmatprep.subr.mxu0 0.0
    %1303 = vmatpush2.msra.mxu0 0.0
    %1304 = vmatprep.subr.mxu0 0.0
    %1305 = vmatpush2.msra.mxu0 0.0
    %1306 = vmatprep.subr.mxu0 0.0
    %1307 = vmatpush2.msra.mxu0 0.0
    %1308 = vmatprep.subr.mxu0 0.0
    %1309 = vmatpush2.msra.mxu0 0.0
    %1310 = vmatprep.subr.mxu0 0.0
    %1311 = vmatpush2.msra.mxu0 0.0
    %1312 = vmatprep.subr.mxu0 0.0
    %1313 = vmatpush2.msra.mxu0 0.0
    %1314 = vmatprep.subr.mxu0 0.0
    %1315 = vmatpush2.msra.mxu0 0.0
    %1316 = vmatprep.subr.mxu0 0.0
    %1317 = vmatpush2.msra.mxu0 0.0
    %1318 = vmatprep.subr.mxu0 0.0
    %1319 = vmatpush2.msra.mxu0 0.0
    %1320 = vmatprep.subr.mxu0 0.0
    %1321 = vmatpush2.msra.mxu0 0.0
    %1322 = vmatprep.subr.mxu0 0.0
    %1323 = vmatpush2.msra.mxu0 0.0
    %1324 = vmatprep.subr.mxu0 0.0
    %1325 = vmatpush2.msra.mxu0 0.0
    %1326 = vmatprep.mubr.f32.mxu0 0.0
    %v1327 = vand.u32 %v842, 4294901760
    %v1328 = vsub.f32 %v842, %v1327
    %v1329 = vand.u32 %v1328, 4294901760
    %1330 = vmatmul.mubr.f32.gmra.mxu0 %v1329
    %v1331 = vpop.f32.mrf.mxu0
    %v1332 = vadd.f32 %v1208, %v1331
    %v1333 = vpop.f32.mrf.mxu0
    %v1334 = vadd.f32 %v1210, %v1333
    %1335 = vmatprep.mubr.f32.mxu0 0.0
    %v1336 = vand.u32 %v845, 4294901760
    %v1337 = vsub.f32 %v845, %v1336
    %v1338 = vand.u32 %v1337, 4294901760
    %1339 = vmatmul.mubr.f32.gmra.mxu0 %v1338
    %v1340 = vpop.f32.mrf.mxu0
    %v1341 = vadd.f32 %v1216, %v1340
    %v1342 = vpop.f32.mrf.mxu0
    %v1343 = vadd.f32 %v1218, %v1342
    %1344 = vmatprep.mubr.f32.mxu0 0.0
    %v1345 = vand.u32 %v848, 4294901760
    %v1346 = vsub.f32 %v848, %v1345
    %v1347 = vand.u32 %v1346, 4294901760
    %1348 = vmatmul.mubr.f32.gmra.mxu0 %v1347
    %v1349 = vpop.f32.mrf.mxu0
    %v1350 = vadd.f32 %v1224, %v1349
    %v1351 = vpop.f32.mrf.mxu0
    %v1352 = vadd.f32 %v1226, %v1351
    %1353 = vmatprep.mubr.f32.mxu0 0.0
    %v1354 = vand.u32 %v851, 4294901760
    %v1355 = vsub.f32 %v851, %v1354
    %v1356 = vand.u32 %v1355, 4294901760
    %1357 = vmatmul.mubr.f32.gmra.mxu0 %v1356
    %v1358 = vpop.f32.mrf.mxu0
    %v1359 = vadd.f32 %v1232, %v1358
    %v1360 = vpop.f32.mrf.mxu0
    %v1361 = vadd.f32 %v1234, %v1360
    %1362 = vmatprep.mubr.f32.mxu0 0.0
    %v1363 = vand.u32 %v854, 4294901760
    %v1364 = vsub.f32 %v854, %v1363
    %v1365 = vand.u32 %v1364, 4294901760
    %1366 = vmatmul.mubr.f32.gmra.mxu0 %v1365
    %v1367 = vpop.f32.mrf.mxu0
    %v1368 = vadd.f32 %v1240, %v1367
    %v1369 = vpop.f32.mrf.mxu0
    %v1370 = vadd.f32 %v1242, %v1369
    %1371 = vmatprep.mubr.f32.mxu0 0.0
    %v1372 = vand.u32 %v857, 4294901760
    %v1373 = vsub.f32 %v857, %v1372
    %v1374 = vand.u32 %v1373, 4294901760
    %1375 = vmatmul.mubr.f32.gmra.mxu0 %v1374
    %v1376 = vpop.f32.mrf.mxu0
    %v1377 = vadd.f32 %v1248, %v1376
    %v1378 = vpop.f32.mrf.mxu0
    %v1379 = vadd.f32 %v1250, %v1378
    %1380 = vmatprep.mubr.f32.mxu0 0.0
    %v1381 = vand.u32 %v860, 4294901760
    %v1382 = vsub.f32 %v860, %v1381
    %v1383 = vand.u32 %v1382, 4294901760
    %1384 = vmatmul.mubr.f32.gmra.mxu0 %v1383
    %v1385 = vpop.f32.mrf.mxu0
    %v1386 = vadd.f32 %v1256, %v1385
    %v1387 = vpop.f32.mrf.mxu0
    %v1388 = vadd.f32 %v1258, %v1387
    %1389 = vdwg.mxu0
    %1390 = vmatprep.subr.mxu0 0.0
    %1391 = vmatpush1.msra.mxu0 0.0
    %1392 = vmatprep.subr.mxu0 0.0
    %1393 = vmatpush1.msra.mxu0 0.0
    %1394 = vmatprep.subr.mxu0 0.0
    %1395 = vmatpush1.msra.mxu0 0.0
    %1396 = vmatprep.subr.mxu0 0.0
    %1397 = vmatpush1.msra.mxu0 0.0
    %1398 = vmatprep.subr.mxu0 0.0
    %1399 = vmatpush1.msra.mxu0 0.0
    %1400 = vmatprep.subr.mxu0 0.0
    %1401 = vmatpush1.msra.mxu0 0.0
    %1402 = vmatprep.subr.mxu0 0.0
    %1403 = vmatpush1.msra.mxu0 0.0
    %1404 = vmatprep.subr.mxu0 0.0
    %1405 = vmatpush1.msra.mxu0 0.0
    %1406 = vmatprep.subr.mxu0 0.0
    %1407 = vmatpush1.msra.mxu0 0.0
    %1408 = vmatprep.subr.mxu0 0.0
    %1409 = vmatpush1.msra.mxu0 0.0
    %1410 = vmatprep.subr.mxu0 0.0
    %1411 = vmatpush1.msra.mxu0 0.0
    %1412 = vmatprep.subr.mxu0 0.0
    %1413 = vmatpush1.msra.mxu0 0.0
    %1414 = vmatprep.subr.mxu0 0.0
    %1415 = vmatpush1.msra.mxu0 0.0
    %1416 = vmatprep.subr.mxu0 0.0
    %1417 = vmatpush1.msra.mxu0 0.0
    %1418 = vmatprep.subr.mxu0 0.0
    %1419 = vmatpush1.msra.mxu0 0.0
    %v1420 = vand.u32 %v865, 4294901760
    %v1421 = vsub.f32 %v865, %v1420
    %v1422 = vand.u32 %v1421, 4294901760
    %1423 = vmatprep.subr.mxu0 %v1422
    %v1424 = vand.u32 %v863, 4294901760
    %v1425 = vsub.f32 %v863, %v1424
    %v1426 = vand.u32 %v1425, 4294901760
    %1427 = vmatpush1.msra.mxu0 %v1426
    %1428 = vmatprep.subr.mxu0 0.0
    %1429 = vmatpush2.msra.mxu0 0.0
    %1430 = vmatprep.subr.mxu0 0.0
    %1431 = vmatpush2.msra.mxu0 0.0
    %1432 = vmatprep.subr.mxu0 0.0
    %1433 = vmatpush2.msra.mxu0 0.0
    %1434 = vmatprep.subr.mxu0 0.0
    %1435 = vmatpush2.msra.mxu0 0.0
    %1436 = vmatprep.subr.mxu0 0.0
    %1437 = vmatpush2.msra.mxu0 0.0
    %1438 = vmatprep.subr.mxu0 0.0
    %1439 = vmatpush2.msra.mxu0 0.0
    %1440 = vmatprep.subr.mxu0 0.0
    %1441 = vmatpush2.msra.mxu0 0.0
    %1442 = vmatprep.subr.mxu0 0.0
    %1443 = vmatpush2.msra.mxu0 0.0
    %1444 = vmatprep.subr.mxu0 0.0
    %1445 = vmatpush2.msra.mxu0 0.0
    %1446 = vmatprep.subr.mxu0 0.0
    %1447 = vmatpush2.msra.mxu0 0.0
    %1448 = vmatprep.subr.mxu0 0.0
    %1449 = vmatpush2.msra.mxu0 0.0
    %1450 = vmatprep.subr.mxu0 0.0
    %1451 = vmatpush2.msra.mxu0 0.0
    %1452 = vmatprep.subr.mxu0 0.0
    %1453 = vmatpush2.msra.mxu0 0.0
    %1454 = vmatprep.subr.mxu0 0.0
    %1455 = vmatpush2.msra.mxu0 0.0
    %1456 = vmatprep.subr.mxu0 0.0
    %1457 = vmatpush2.msra.mxu0 0.0
    %1458 = vmatprep.subr.mxu0 0.0
    %1459 = vmatpush2.msra.mxu0 0.0
    %1460 = vmatprep.mubr.f32.mxu0 0.0
    %v1461 = vand.u32 %v842, 4294901760
    %1462 = vmatmul.mubr.f32.gmra.mxu0 %v1461
    %v1463 = vpop.f32.mrf.mxu0
    %v1464 = vadd.f32 %v1332, %v1463
    %v1465 = vpop.f32.mrf.mxu0
    %v1466 = vadd.f32 %v1334, %v1465
    %1467 = vmatprep.mubr.f32.mxu0 0.0
    %v1468 = vand.u32 %v845, 4294901760
    %1469 = vmatmul.mubr.f32.gmra.mxu0 %v1468
    %v1470 = vpop.f32.mrf.mxu0
    %v1471 = vadd.f32 %v1341, %v1470
    %v1472 = vpop.f32.mrf.mxu0
    %v1473 = vadd.f32 %v1343, %v1472
    %1474 = vmatprep.mubr.f32.mxu0 0.0
    %v1475 = vand.u32 %v848, 4294901760
    %1476 = vmatmul.mubr.f32.gmra.mxu0 %v1475
    %v1477 = vpop.f32.mrf.mxu0
    %v1478 = vadd.f32 %v1350, %v1477
    %v1479 = vpop.f32.mrf.mxu0
    %v1480 = vadd.f32 %v1352, %v1479
    %1481 = vmatprep.mubr.f32.mxu0 0.0
    %v1482 = vand.u32 %v851, 4294901760
    %1483 = vmatmul.mubr.f32.gmra.mxu0 %v1482
    %v1484 = vpop.f32.mrf.mxu0
    %v1485 = vadd.f32 %v1359, %v1484
    %v1486 = vpop.f32.mrf.mxu0
    %v1487 = vadd.f32 %v1361, %v1486
    %1488 = vmatprep.mubr.f32.mxu0 0.0
    %v1489 = vand.u32 %v854, 4294901760
    %1490 = vmatmul.mubr.f32.gmra.mxu0 %v1489
    %v1491 = vpop.f32.mrf.mxu0
    %v1492 = vadd.f32 %v1368, %v1491
    %v1493 = vpop.f32.mrf.mxu0
    %v1494 = vadd.f32 %v1370, %v1493
    %1495 = vmatprep.mubr.f32.mxu0 0.0
    %v1496 = vand.u32 %v857, 4294901760
    %1497 = vmatmul.mubr.f32.gmra.mxu0 %v1496
    %v1498 = vpop.f32.mrf.mxu0
    %v1499 = vadd.f32 %v1377, %v1498
    %v1500 = vpop.f32.mrf.mxu0
    %v1501 = vadd.f32 %v1379, %v1500
    %1502 = vmatprep.mubr.f32.mxu0 0.0
    %v1503 = vand.u32 %v860, 4294901760
    %1504 = vmatmul.mubr.f32.gmra.mxu0 %v1503
    %v1505 = vpop.f32.mrf.mxu0
    %v1506 = vadd.f32 %v1386, %v1505
    %v1507 = vpop.f32.mrf.mxu0
    %v1508 = vadd.f32 %v1388, %v1507
    %1509 = vdwg.mxu0
    %1510 = vmatprep.subr.mxu0 0.0
    %1511 = vmatpush1.msra.mxu0 0.0
    %1512 = vmatprep.subr.mxu0 0.0
    %1513 = vmatpush1.msra.mxu0 0.0
    %1514 = vmatprep.subr.mxu0 0.0
    %1515 = vmatpush1.msra.mxu0 0.0
    %1516 = vmatprep.subr.mxu0 0.0
    %1517 = vmatpush1.msra.mxu0 0.0
    %1518 = vmatprep.subr.mxu0 0.0
    %1519 = vmatpush1.msra.mxu0 0.0
    %1520 = vmatprep.subr.mxu0 0.0
    %1521 = vmatpush1.msra.mxu0 0.0
    %1522 = vmatprep.subr.mxu0 0.0
    %1523 = vmatpush1.msra.mxu0 0.0
    %1524 = vmatprep.subr.mxu0 0.0
    %1525 = vmatpush1.msra.mxu0 0.0
    %1526 = vmatprep.subr.mxu0 0.0
    %1527 = vmatpush1.msra.mxu0 0.0
    %1528 = vmatprep.subr.mxu0 0.0
    %1529 = vmatpush1.msra.mxu0 0.0
    %1530 = vmatprep.subr.mxu0 0.0
    %1531 = vmatpush1.msra.mxu0 0.0
    %1532 = vmatprep.subr.mxu0 0.0
    %1533 = vmatpush1.msra.mxu0 0.0
    %1534 = vmatprep.subr.mxu0 0.0
    %1535 = vmatpush1.msra.mxu0 0.0
    %1536 = vmatprep.subr.mxu0 0.0
    %1537 = vmatpush1.msra.mxu0 0.0
    %1538 = vmatprep.subr.mxu0 0.0
    %1539 = vmatpush1.msra.mxu0 0.0
    %v1540 = vand.u32 %v865, 4294901760
    %1541 = vmatprep.subr.mxu0 %v1540
    %v1542 = vand.u32 %v863, 4294901760
    %1543 = vmatpush1.msra.mxu0 %v1542
    %1544 = vmatprep.subr.mxu0 0.0
    %1545 = vmatpush2.msra.mxu0 0.0
    %1546 = vmatprep.subr.mxu0 0.0
    %1547 = vmatpush2.msra.mxu0 0.0
    %1548 = vmatprep.subr.mxu0 0.0
    %1549 = vmatpush2.msra.mxu0 0.0
    %1550 = vmatprep.subr.mxu0 0.0
    %1551 = vmatpush2.msra.mxu0 0.0
    %1552 = vmatprep.subr.mxu0 0.0
    %1553 = vmatpush2.msra.mxu0 0.0
    %1554 = vmatprep.subr.mxu0 0.0
    %1555 = vmatpush2.msra.mxu0 0.0
    %1556 = vmatprep.subr.mxu0 0.0
    %1557 = vmatpush2.msra.mxu0 0.0
    %1558 = vmatprep.subr.mxu0 0.0
    %1559 = vmatpush2.msra.mxu0 0.0
    %1560 = vmatprep.subr.mxu0 0.0
    %1561 = vmatpush2.msra.mxu0 0.0
    %1562 = vmatprep.subr.mxu0 0.0
    %1563 = vmatpush2.msra.mxu0 0.0
    %1564 = vmatprep.subr.mxu0 0.0
    %1565 = vmatpush2.msra.mxu0 0.0
    %1566 = vmatprep.subr.mxu0 0.0
    %1567 = vmatpush2.msra.mxu0 0.0
    %1568 = vmatprep.subr.mxu0 0.0
    %1569 = vmatpush2.msra.mxu0 0.0
    %1570 = vmatprep.subr.mxu0 0.0
    %1571 = vmatpush2.msra.mxu0 0.0
    %1572 = vmatprep.subr.mxu0 0.0
    %1573 = vmatpush2.msra.mxu0 0.0
    %1574 = vmatprep.subr.mxu0 0.0
    %1575 = vmatpush2.msra.mxu0 0.0
    %1576 = vmatprep.mubr.f32.mxu0 0.0
    %v1577 = vand.u32 %v842, 4294901760
    %1578 = vmatmul.mubr.f32.gmra.mxu0 %v1577
    %v1579 = vpop.f32.mrf.mxu0
    %v1580 = vadd.f32 %v1464, %v1579
    %v1581 = vpop.f32.mrf.mxu0
    %v1582 = vadd.f32 %v1466, %v1581
    %1583 = vmatprep.mubr.f32.mxu0 0.0
    %v1584 = vand.u32 %v845, 4294901760
    %1585 = vmatmul.mubr.f32.gmra.mxu0 %v1584
    %v1586 = vpop.f32.mrf.mxu0
    %v1587 = vadd.f32 %v1471, %v1586
    %v1588 = vpop.f32.mrf.mxu0
    %v1589 = vadd.f32 %v1473, %v1588
    %1590 = vmatprep.mubr.f32.mxu0 0.0
    %v1591 = vand.u32 %v848, 4294901760
    %1592 = vmatmul.mubr.f32.gmra.mxu0 %v1591
    %v1593 = vpop.f32.mrf.mxu0
    %v1594 = vadd.f32 %v1478, %v1593
    %v1595 = vpop.f32.mrf.mxu0
    %v1596 = vadd.f32 %v1480, %v1595
    %1597 = vmatprep.mubr.f32.mxu0 0.0
    %v1598 = vand.u32 %v851, 4294901760
    %1599 = vmatmul.mubr.f32.gmra.mxu0 %v1598
    %v1600 = vpop.f32.mrf.mxu0
    %v1601 = vadd.f32 %v1485, %v1600
    %v1602 = vpop.f32.mrf.mxu0
    %v1603 = vadd.f32 %v1487, %v1602
    %1604 = vmatprep.mubr.f32.mxu0 0.0
    %v1605 = vand.u32 %v854, 4294901760
    %1606 = vmatmul.mubr.f32.gmra.mxu0 %v1605
    %v1607 = vpop.f32.mrf.mxu0
    %v1608 = vadd.f32 %v1492, %v1607
    %v1609 = vpop.f32.mrf.mxu0
    %v1610 = vadd.f32 %v1494, %v1609
    %1611 = vmatprep.mubr.f32.mxu0 0.0
    %v1612 = vand.u32 %v857, 4294901760
    %1613 = vmatmul.mubr.f32.gmra.mxu0 %v1612
    %v1614 = vpop.f32.mrf.mxu0
    %v1615 = vadd.f32 %v1499, %v1614
    %v1616 = vpop.f32.mrf.mxu0
    %v1617 = vadd.f32 %v1501, %v1616
    %1618 = vmatprep.mubr.f32.mxu0 0.0
    %v1619 = vand.u32 %v860, 4294901760
    %1620 = vmatmul.mubr.f32.gmra.mxu0 %v1619
    %v1621 = vpop.f32.mrf.mxu0
    %v1622 = vadd.f32 %v1506, %v1621
    %v1623 = vpop.f32.mrf.mxu0
    %v1624 = vadd.f32 %v1508, %v1623
    %1625 = vdwg.mxu0
    %v1626 = vld [vmem:[%s4] sm:$0xff]
    %v1627 = vld [vmem:[%s4 + $0x8] sm:$0xff]
    %v1628 = vld [vmem:[%s4 + $0x10] sm:$0xff]
    %v1629 = vld [vmem:[%s4 + $0x18] sm:$0xff]
    %v1630 = vld [vmem:[%s4 + $0x20] sm:$0xff]
    %v1631 = vld [vmem:[%s4 + $0x28] sm:$0xff]
    %v1632 = vld [vmem:[%s4 + $0x30] sm:$0xff]
    %1634 = vset.pattern.permute.xlu0 0
    %1635 = vperm.xlu0 %1634, %v1626
    %v1636 = vpop.permute.xlu0 %1635
    %1639 = vset.pattern.permute.xlu0 0
    %1640 = vperm.xlu0 %1639, %v1627
    %v1641 = vpop.permute.xlu0 %1640
    %1644 = vset.pattern.permute.xlu0 0
    %1645 = vperm.xlu0 %1644, %v1628
    %v1646 = vpop.permute.xlu0 %1645
    %1649 = vset.pattern.permute.xlu0 0
    %1650 = vperm.xlu0 %1649, %v1629
    %v1651 = vpop.permute.xlu0 %1650
    %1654 = vset.pattern.permute.xlu0 0
    %1655 = vperm.xlu0 %1654, %v1630
    %v1656 = vpop.permute.xlu0 %1655
    %1659 = vset.pattern.permute.xlu0 0
    %1660 = vperm.xlu0 %1659, %v1631
    %v1661 = vpop.permute.xlu0 %1660
    %1664 = vset.pattern.permute.xlu0 0
    %1665 = vperm.xlu0 %1664, %v1632
    %v1666 = vpop.permute.xlu0 %1665
    %v1668 = vadd.f32 %v1580, %v1636
    %v1669 = vadd.f32 %v1582, %v1636
    %v1670 = vadd.f32 %v1587, %v1641
    %v1671 = vadd.f32 %v1589, %v1641
    %v1672 = vadd.f32 %v1594, %v1646
    %v1673 = vadd.f32 %v1596, %v1646
    %v1674 = vadd.f32 %v1601, %v1651
    %v1675 = vadd.f32 %v1603, %v1651
    %v1676 = vadd.f32 %v1608, %v1656
    %v1677 = vadd.f32 %v1610, %v1656
    %v1678 = vadd.f32 %v1615, %v1661
    %v1679 = vadd.f32 %v1617, %v1661
    %v1680 = vadd.f32 %v1622, %v1666
    %v1681 = vadd.f32 %v1624, %v1666
    %v1682 = vmax.f32 %v1668, 0.0
    %v1683 = vmax.f32 %v1669, 0.0
    %v1684 = vmax.f32 %v1670, 0.0
    %v1685 = vmax.f32 %v1671, 0.0
    %v1686 = vmax.f32 %v1672, 0.0
    %v1687 = vmax.f32 %v1673, 0.0
    %v1688 = vmax.f32 %v1674, 0.0
    %v1689 = vmax.f32 %v1675, 0.0
    %v1690 = vmax.f32 %v1676, 0.0
    %v1691 = vmax.f32 %v1677, 0.0
    %v1692 = vmax.f32 %v1678, 0.0
    %v1693 = vmax.f32 %v1679, 0.0
    %v1694 = vmax.f32 %v1680, 0.0
    %v1695 = vmax.f32 %v1681, 0.0
    %v1696 = vld [vmem:[%s5] sm:$0xff]
    %v1697 = vld [vmem:[%s5 + $0x8] sm:$0xff]
    %v1698 = vld [vmem:[%s5 + $0x10] sm:$0xff]
    %v1699 = vld [vmem:[%s5 + $0x18] sm:$0xff]
    %v1700 = vld [vmem:[%s5 + $0x20] sm:$0xff]
    %v1701 = vld [vmem:[%s5 + $0x28] sm:$0xff]
    %v1702 = vld [vmem:[%s5 + $0x30] sm:$0xff]
    %vm1703 = vcmask 457728
    %v1705 = vsel %vm1703, %v1696, 0
    %v1708 = vsel %vm1703, %v1697, 0
    %v1711 = vsel %vm1703, %v1698, 0
    %v1714 = vsel %vm1703, %v1699, 0
    %v1717 = vsel %vm1703, %v1700, 0
    %v1720 = vsel %vm1703, %v1701, 0
    %v1723 = vsel %vm1703, %v1702, 0
    %1725 = vmatprep.subr.mxu0 0.0
    %1726 = vmatpush1.msra.mxu0 0.0
    %1727 = vmatprep.subr.mxu0 0.0
    %1728 = vmatpush1.msra.mxu0 0.0
    %1729 = vmatprep.subr.mxu0 0.0
    %1730 = vmatpush1.msra.mxu0 0.0
    %1731 = vmatprep.subr.mxu0 0.0
    %1732 = vmatpush1.msra.mxu0 0.0
    %1733 = vmatprep.subr.mxu0 0.0
    %1734 = vmatpush1.msra.mxu0 0.0
    %1735 = vmatprep.subr.mxu0 0.0
    %1736 = vmatpush1.msra.mxu0 0.0
    %1737 = vmatprep.subr.mxu0 0.0
    %1738 = vmatpush1.msra.mxu0 0.0
    %1739 = vmatprep.subr.mxu0 0.0
    %1740 = vmatpush1.msra.mxu0 0.0
    %1741 = vmatprep.subr.mxu0 0.0
    %1742 = vmatpush1.msra.mxu0 0.0
    %v1743 = vand.u32 %v1695, 4294901760
    %1744 = vmatprep.subr.mxu0 %v1743
    %v1745 = vand.u32 %v1694, 4294901760
    %1746 = vmatpush1.msra.mxu0 %v1745
    %v1747 = vand.u32 %v1693, 4294901760
    %1748 = vmatprep.subr.mxu0 %v1747
    %v1749 = vand.u32 %v1692, 4294901760
    %1750 = vmatpush1.msra.mxu0 %v1749
    %v1751 = vand.u32 %v1691, 4294901760
    %1752 = vmatprep.subr.mxu0 %v1751
    %v1753 = vand.u32 %v1690, 4294901760
    %1754 = vmatpush1.msra.mxu0 %v1753
    %v1755 = vand.u32 %v1689, 4294901760
    %1756 = vmatprep.subr.mxu0 %v1755
    %v1757 = vand.u32 %v1688, 4294901760
    %1758 = vmatpush1.msra.mxu0 %v1757
    %v1759 = vand.u32 %v1687, 4294901760
    %1760 = vmatprep.subr.mxu0 %v1759
    %v1761 = vand.u32 %v1686, 4294901760
    %1762 = vmatpush1.msra.mxu0 %v1761
    %v1763 = vand.u32 %v1685, 4294901760
    %1764 = vmatprep.subr.mxu0 %v1763
    %v1765 = vand.u32 %v1684, 4294901760
    %1766 = vmatpush1.msra.mxu0 %v1765
    %v1767 = vand.u32 %v1683, 4294901760
    %1768 = vmatprep.subr.mxu0 %v1767
    %v1769 = vand.u32 %v1682, 4294901760
    %1770 = vmatpush1.msra.mxu0 %v1769
    %1771 = vmatprep.subr.mxu0 0.0
    %1772 = vmatpush2.msra.mxu0 0.0
    %1773 = vmatprep.subr.mxu0 0.0
    %1774 = vmatpush2.msra.mxu0 0.0
    %1775 = vmatprep.subr.mxu0 0.0
    %1776 = vmatpush2.msra.mxu0 0.0
    %1777 = vmatprep.subr.mxu0 0.0
    %1778 = vmatpush2.msra.mxu0 0.0
    %1779 = vmatprep.subr.mxu0 0.0
    %1780 = vmatpush2.msra.mxu0 0.0
    %1781 = vmatprep.subr.mxu0 0.0
    %1782 = vmatpush2.msra.mxu0 0.0
    %1783 = vmatprep.subr.mxu0 0.0
    %1784 = vmatpush2.msra.mxu0 0.0
    %1785 = vmatprep.subr.mxu0 0.0
    %1786 = vmatpush2.msra.mxu0 0.0
    %1787 = vmatprep.subr.mxu0 0.0
    %1788 = vmatpush2.msra.mxu0 0.0
    %1789 = vmatprep.subr.mxu0 0.0
    %1790 = vmatpush2.msra.mxu0 0.0
    %1791 = vmatprep.subr.mxu0 0.0
    %1792 = vmatpush2.msra.mxu0 0.0
    %1793 = vmatprep.subr.mxu0 0.0
    %1794 = vmatpush2.msra.mxu0 0.0
    %1795 = vmatprep.subr.mxu0 0.0
    %1796 = vmatpush2.msra.mxu0 0.0
    %1797 = vmatprep.subr.mxu0 0.0
    %1798 = vmatpush2.msra.mxu0 0.0
    %1799 = vmatprep.subr.mxu0 0.0
    %1800 = vmatpush2.msra.mxu0 0.0
    %1801 = vmatprep.subr.mxu0 0.0
    %1802 = vmatpush2.msra.mxu0 0.0
    %1803 = vmatprep.mubr.f32.mxu0 0.0
    %v1804 = vand.u32 %v1705, 4294901760
    %v1805 = vsub.f32 %v1705, %v1804
    %v1806 = vand.u32 %v1805, 4294901760
    %v1807 = vsub.f32 %v1805, %v1806
    %v1808 = vand.u32 %v1807, 4294901760
    %1809 = vmatmul.mubr.f32.gmra.mxu0 %v1808
    %v1810 = vpop.f32.mrf.mxu0
    %v1811 = vadd.f32 0.0, %v1810
    %v1812 = vpop.f32.mrf.mxu0
    %v1813 = vadd.f32 0.0, %v1812
    %1814 = vmatprep.mubr.f32.mxu0 0.0
    %v1815 = vand.u32 %v1708, 4294901760
    %v1816 = vsub.f32 %v1708, %v1815
    %v1817 = vand.u32 %v1816, 4294901760
    %v1818 = vsub.f32 %v1816, %v1817
    %v1819 = vand.u32 %v1818, 4294901760
    %1820 = vmatmul.mubr.f32.gmra.mxu0 %v1819
    %v1821 = vpop.f32.mrf.mxu0
    %v1822 = vadd.f32 0.0, %v1821
    %v1823 = vpop.f32.mrf.mxu0
    %v1824 = vadd.f32 0.0, %v1823
    %1825 = vmatprep.mubr.f32.mxu0 0.0
    %v1826 = vand.u32 %v1711, 4294901760
    %v1827 = vsub.f32 %v1711, %v1826
    %v1828 = vand.u32 %v1827, 4294901760
    %v1829 = vsub.f32 %v1827, %v1828
    %v1830 = vand.u32 %v1829, 4294901760
    %1831 = vmatmul.mubr.f32.gmra.mxu0 %v1830
    %v1832 = vpop.f32.mrf.mxu0
    %v1833 = vadd.f32 0.0, %v1832
    %v1834 = vpop.f32.mrf.mxu0
    %v1835 = vadd.f32 0.0, %v1834
    %1836 = vmatprep.mubr.f32.mxu0 0.0
    %v1837 = vand.u32 %v1714, 4294901760
    %v1838 = vsub.f32 %v1714, %v1837
    %v1839 = vand.u32 %v1838, 4294901760
    %v1840 = vsub.f32 %v1838, %v1839
    %v1841 = vand.u32 %v1840, 4294901760
    %1842 = vmatmul.mubr.f32.gmra.mxu0 %v1841
    %v1843 = vpop.f32.mrf.mxu0
    %v1844 = vadd.f32 0.0, %v1843
    %v1845 = vpop.f32.mrf.mxu0
    %v1846 = vadd.f32 0.0, %v1845
    %1847 = vmatprep.mubr.f32.mxu0 0.0
    %v1848 = vand.u32 %v1717, 4294901760
    %v1849 = vsub.f32 %v1717, %v1848
    %v1850 = vand.u32 %v1849, 4294901760
    %v1851 = vsub.f32 %v1849, %v1850
    %v1852 = vand.u32 %v1851, 4294901760
    %1853 = vmatmul.mubr.f32.gmra.mxu0 %v1852
    %v1854 = vpop.f32.mrf.mxu0
    %v1855 = vadd.f32 0.0, %v1854
    %v1856 = vpop.f32.mrf.mxu0
    %v1857 = vadd.f32 0.0, %v1856
    %1858 = vmatprep.mubr.f32.mxu0 0.0
    %v1859 = vand.u32 %v1720, 4294901760
    %v1860 = vsub.f32 %v1720, %v1859
    %v1861 = vand.u32 %v1860, 4294901760
    %v1862 = vsub.f32 %v1860, %v1861
    %v1863 = vand.u32 %v1862, 4294901760
    %1864 = vmatmul.mubr.f32.gmra.mxu0 %v1863
    %v1865 = vpop.f32.mrf.mxu0
    %v1866 = vadd.f32 0.0, %v1865
    %v1867 = vpop.f32.mrf.mxu0
    %v1868 = vadd.f32 0.0, %v1867
    %1869 = vmatprep.mubr.f32.mxu0 0.0
    %v1870 = vand.u32 %v1723, 4294901760
    %v1871 = vsub.f32 %v1723, %v1870
    %v1872 = vand.u32 %v1871, 4294901760
    %v1873 = vsub.f32 %v1871, %v1872
    %v1874 = vand.u32 %v1873, 4294901760
    %1875 = vmatmul.mubr.f32.gmra.mxu0 %v1874
    %v1876 = vpop.f32.mrf.mxu0
    %v1877 = vadd.f32 0.0, %v1876
    %v1878 = vpop.f32.mrf.mxu0
    %v1879 = vadd.f32 0.0, %v1878
    %1880 = vdwg.mxu0
    %1881 = vmatprep.subr.mxu0 0.0
    %1882 = vmatpush1.msra.mxu0 0.0
    %1883 = vmatprep.subr.mxu0 0.0
    %1884 = vmatpush1.msra.mxu0 0.0
    %1885 = vmatprep.subr.mxu0 0.0
    %1886 = vmatpush1.msra.mxu0 0.0
    %1887 = vmatprep.subr.mxu0 0.0
    %1888 = vmatpush1.msra.mxu0 0.0
    %1889 = vmatprep.subr.mxu0 0.0
    %1890 = vmatpush1.msra.mxu0 0.0
    %1891 = vmatprep.subr.mxu0 0.0
    %1892 = vmatpush1.msra.mxu0 0.0
    %1893 = vmatprep.subr.mxu0 0.0
    %1894 = vmatpush1.msra.mxu0 0.0
    %1895 = vmatprep.subr.mxu0 0.0
    %1896 = vmatpush1.msra.mxu0 0.0
    %1897 = vmatprep.subr.mxu0 0.0
    %1898 = vmatpush1.msra.mxu0 0.0
    %v1899 = vand.u32 %v1695, 4294901760
    %v1900 = vsub.f32 %v1695, %v1899
    %v1901 = vand.u32 %v1900, 4294901760
    %v1902 = vsub.f32 %v1900, %v1901
    %v1903 = vand.u32 %v1902, 4294901760
    %1904 = vmatprep.subr.mxu0 %v1903
    %v1905 = vand.u32 %v1694, 4294901760
    %v1906 = vsub.f32 %v1694, %v1905
    %v1907 = vand.u32 %v1906, 4294901760
    %v1908 = vsub.f32 %v1906, %v1907
    %v1909 = vand.u32 %v1908, 4294901760
    %1910 = vmatpush1.msra.mxu0 %v1909
    %v1911 = vand.u32 %v1693, 4294901760
    %v1912 = vsub.f32 %v1693, %v1911
    %v1913 = vand.u32 %v1912, 4294901760
    %v1914 = vsub.f32 %v1912, %v1913
    %v1915 = vand.u32 %v1914, 4294901760
    %1916 = vmatprep.subr.mxu0 %v1915
    %v1917 = vand.u32 %v1692, 4294901760
    %v1918 = vsub.f32 %v1692, %v1917
    %v1919 = vand.u32 %v1918, 4294901760
    %v1920 = vsub.f32 %v1918, %v1919
    %v1921 = vand.u32 %v1920, 4294901760
    %1922 = vmatpush1.msra.mxu0 %v1921
    %v1923 = vand.u32 %v1691, 4294901760
    %v1924 = vsub.f32 %v1691, %v1923
    %v1925 = vand.u32 %v1924, 4294901760
    %v1926 = vsub.f32 %v1924, %v1925
    %v1927 = vand.u32 %v1926, 4294901760
    %1928 = vmatprep.subr.mxu0 %v1927
    %v1929 = vand.u32 %v1690, 4294901760
    %v1930 = vsub.f32 %v1690, %v1929
    %v1931 = vand.u32 %v1930, 4294901760
    %v1932 = vsub.f32 %v1930, %v1931
    %v1933 = vand.u32 %v1932, 4294901760
    %1934 = vmatpush1.msra.mxu0 %v1933
    %v1935 = vand.u32 %v1689, 4294901760
    %v1936 = vsub.f32 %v1689, %v1935
    %v1937 = vand.u32 %v1936, 4294901760
    %v1938 = vsub.f32 %v1936, %v1937
    %v1939 = vand.u32 %v1938, 4294901760
    %1940 = vmatprep.subr.mxu0 %v1939
    %v1941 = vand.u32 %v1688, 4294901760
    %v1942 = vsub.f32 %v1688, %v1941
    %v1943 = vand.u32 %v1942, 4294901760
    %v1944 = vsub.f32 %v1942, %v1943
    %v1945 = vand.u32 %v1944, 4294901760
    %1946 = vmatpush1.msra.mxu0 %v1945
    %v1947 = vand.u32 %v1687, 4294901760
    %v1948 = vsub.f32 %v1687, %v1947
    %v1949 = vand.u32 %v1948, 4294901760
    %v1950 = vsub.f32 %v1948, %v1949
    %v1951 = vand.u32 %v1950, 4294901760
    %1952 = vmatprep.subr.mxu0 %v1951
    %v1953 = vand.u32 %v1686, 4294901760
    %v1954 = vsub.f32 %v1686, %v1953
    %v1955 = vand.u32 %v1954, 4294901760
    %v1956 = vsub.f32 %v1954, %v1955
    %v1957 = vand.u32 %v1956, 4294901760
    %1958 = vmatpush1.msra.mxu0 %v1957
    %v1959 = vand.u32 %v1685, 4294901760
    %v1960 = vsub.f32 %v1685, %v1959
    %v1961 = vand.u32 %v1960, 4294901760
    %v1962 = vsub.f32 %v1960, %v1961
    %v1963 = vand.u32 %v1962, 4294901760
    %1964 = vmatprep.subr.mxu0 %v1963
    %v1965 = vand.u32 %v1684, 4294901760
    %v1966 = vsub.f32 %v1684, %v1965
    %v1967 = vand.u32 %v1966, 4294901760
    %v1968 = vsub.f32 %v1966, %v1967
    %v1969 = vand.u32 %v1968, 4294901760
    %1970 = vmatpush1.msra.mxu0 %v1969
    %v1971 = vand.u32 %v1683, 4294901760
    %v1972 = vsub.f32 %v1683, %v1971
    %v1973 = vand.u32 %v1972, 4294901760
    %v1974 = vsub.f32 %v1972, %v1973
    %v1975 = vand.u32 %v1974, 4294901760
    %1976 = vmatprep.subr.mxu0 %v1975
    %v1977 = vand.u32 %v1682, 4294901760
    %v1978 = vsub.f32 %v1682, %v1977
    %v1979 = vand.u32 %v1978, 4294901760
    %v1980 = vsub.f32 %v1978, %v1979
    %v1981 = vand.u32 %v1980, 4294901760
    %1982 = vmatpush1.msra.mxu0 %v1981
    %1983 = vmatprep.subr.mxu0 0.0
    %1984 = vmatpush2.msra.mxu0 0.0
    %1985 = vmatprep.subr.mxu0 0.0
    %1986 = vmatpush2.msra.mxu0 0.0
    %1987 = vmatprep.subr.mxu0 0.0
    %1988 = vmatpush2.msra.mxu0 0.0
    %1989 = vmatprep.subr.mxu0 0.0
    %1990 = vmatpush2.msra.mxu0 0.0
    %1991 = vmatprep.subr.mxu0 0.0
    %1992 = vmatpush2.msra.mxu0 0.0
    %1993 = vmatprep.subr.mxu0 0.0
    %1994 = vmatpush2.msra.mxu0 0.0
    %1995 = vmatprep.subr.mxu0 0.0
    %1996 = vmatpush2.msra.mxu0 0.0
    %1997 = vmatprep.subr.mxu0 0.0
    %1998 = vmatpush2.msra.mxu0 0.0
    %1999 = vmatprep.subr.mxu0 0.0
    %2000 = vmatpush2.msra.mxu0 0.0
    %2001 = vmatprep.subr.mxu0 0.0
    %2002 = vmatpush2.msra.mxu0 0.0
    %2003 = vmatprep.subr.mxu0 0.0
    %2004 = vmatpush2.msra.mxu0 0.0
    %2005 = vmatprep.subr.mxu0 0.0
    %2006 = vmatpush2.msra.mxu0 0.0
    %2007 = vmatprep.subr.mxu0 0.0
    %2008 = vmatpush2.msra.mxu0 0.0
    %2009 = vmatprep.subr.mxu0 0.0
    %2010 = vmatpush2.msra.mxu0 0.0
    %2011 = vmatprep.subr.mxu0 0.0
    %2012 = vmatpush2.msra.mxu0 0.0
    %2013 = vmatprep.subr.mxu0 0.0
    %2014 = vmatpush2.msra.mxu0 0.0
    %2015 = vmatprep.mubr.f32.mxu0 0.0
    %v2016 = vand.u32 %v1705, 4294901760
    %2017 = vmatmul.mubr.f32.gmra.mxu0 %v2016
    %v2018 = vpop.f32.mrf.mxu0
    %v2019 = vadd.f32 %v1811, %v2018
    %v2020 = vpop.f32.mrf.mxu0
    %v2021 = vadd.f32 %v1813, %v2020
    %2022 = vmatprep.mubr.f32.mxu0 0.0
    %v2023 = vand.u32 %v1708, 4294901760
    %2024 = vmatmul.mubr.f32.gmra.mxu0 %v2023
    %v2025 = vpop.f32.mrf.mxu0
    %v2026 = vadd.f32 %v1822, %v2025
    %v2027 = vpop.f32.mrf.mxu0
    %v2028 = vadd.f32 %v1824, %v2027
    %2029 = vmatprep.mubr.f32.mxu0 0.0
    %v2030 = vand.u32 %v1711, 4294901760
    %2031 = vmatmul.mubr.f32.gmra.mxu0 %v2030
    %v2032 = vpop.f32.mrf.mxu0
    %v2033 = vadd.f32 %v1833, %v2032
    %v2034 = vpop.f32.mrf.mxu0
    %v2035 = vadd.f32 %v1835, %v2034
    %2036 = vmatprep.mubr.f32.mxu0 0.0
    %v2037 = vand.u32 %v1714, 4294901760
    %2038 = vmatmul.mubr.f32.gmra.mxu0 %v2037
    %v2039 = vpop.f32.mrf.mxu0
    %v2040 = vadd.f32 %v1844, %v2039
    %v2041 = vpop.f32.mrf.mxu0
    %v2042 = vadd.f32 %v1846, %v2041
    %2043 = vmatprep.mubr.f32.mxu0 0.0
    %v2044 = vand.u32 %v1717, 4294901760
    %2045 = vmatmul.mubr.f32.gmra.mxu0 %v2044
    %v2046 = vpop.f32.mrf.mxu0
    %v2047 = vadd.f32 %v1855, %v2046
    %v2048 = vpop.f32.mrf.mxu0
    %v2049 = vadd.f32 %v1857, %v2048
    %2050 = vmatprep.mubr.f32.mxu0 0.0
    %v2051 = vand.u32 %v1720, 4294901760
    %2052 = vmatmul.mubr.f32.gmra.mxu0 %v2051
    %v2053 = vpop.f32.mrf.mxu0
    %v2054 = vadd.f32 %v1866, %v2053
    %v2055 = vpop.f32.mrf.mxu0
    %v2056 = vadd.f32 %v1868, %v2055
    %2057 = vmatprep.mubr.f32.mxu0 0.0
    %v2058 = vand.u32 %v1723, 4294901760
    %2059 = vmatmul.mubr.f32.gmra.mxu0 %v2058
    %v2060 = vpop.f32.mrf.mxu0
    %v2061 = vadd.f32 %v1877, %v2060
    %v2062 = vpop.f32.mrf.mxu0
    %v2063 = vadd.f32 %v1879, %v2062
    %2064 = vdwg.mxu0
    %2065 = vmatprep.subr.mxu0 0.0
    %2066 = vmatpush1.msra.mxu0 0.0
    %2067 = vmatprep.subr.mxu0 0.0
    %2068 = vmatpush1.msra.mxu0 0.0
    %2069 = vmatprep.subr.mxu0 0.0
    %2070 = vmatpush1.msra.mxu0 0.0
    %2071 = vmatprep.subr.mxu0 0.0
    %2072 = vmatpush1.msra.mxu0 0.0
    %2073 = vmatprep.subr.mxu0 0.0
    %2074 = vmatpush1.msra.mxu0 0.0
    %2075 = vmatprep.subr.mxu0 0.0
    %2076 = vmatpush1.msra.mxu0 0.0
    %2077 = vmatprep.subr.mxu0 0.0
    %2078 = vmatpush1.msra.mxu0 0.0
    %2079 = vmatprep.subr.mxu0 0.0
    %2080 = vmatpush1.msra.mxu0 0.0
    %2081 = vmatprep.subr.mxu0 0.0
    %2082 = vmatpush1.msra.mxu0 0.0
    %v2083 = vand.u32 %v1695, 4294901760
    %v2084 = vsub.f32 %v1695, %v2083
    %2085 = vmatprep.subr.mxu0 %v2084
    %v2086 = vand.u32 %v1694, 4294901760
    %v2087 = vsub.f32 %v1694, %v2086
    %2088 = vmatpush1.msra.mxu0 %v2087
    %v2089 = vand.u32 %v1693, 4294901760
    %v2090 = vsub.f32 %v1693, %v2089
    %2091 = vmatprep.subr.mxu0 %v2090
    %v2092 = vand.u32 %v1692, 4294901760
    %v2093 = vsub.f32 %v1692, %v2092
    %2094 = vmatpush1.msra.mxu0 %v2093
    %v2095 = vand.u32 %v1691, 4294901760
    %v2096 = vsub.f32 %v1691, %v2095
    %2097 = vmatprep.subr.mxu0 %v2096
    %v2098 = vand.u32 %v1690, 4294901760
    %v2099 = vsub.f32 %v1690, %v2098
    %2100 = vmatpush1.msra.mxu0 %v2099
    %v2101 = vand.u32 %v1689, 4294901760
    %v2102 = vsub.f32 %v1689, %v2101
    %2103 = vmatprep.subr.mxu0 %v2102
    %v2104 = vand.u32 %v1688, 4294901760
    %v2105 = vsub.f32 %v1688, %v2104
    %2106 = vmatpush1.msra.mxu0 %v2105
    %v2107 = vand.u32 %v1687, 4294901760
    %v2108 = vsub.f32 %v1687, %v2107
    %2109 = vmatprep.subr.mxu0 %v2108
    %v2110 = vand.u32 %v1686, 4294901760
    %v2111 = vsub.f32 %v1686, %v2110
    %2112 = vmatpush1.msra.mxu0 %v2111
    %v2113 = vand.u32 %v1685, 4294901760
    %v2114 = vsub.f32 %v1685, %v2113
    %2115 = vmatprep.subr.mxu0 %v2114
    %v2116 = vand.u32 %v1684, 4294901760
    %v2117 = vsub.f32 %v1684, %v2116
    %2118 = vmatpush1.msra.mxu0 %v2117
    %v2119 = vand.u32 %v1683, 4294901760
    %v2120 = vsub.f32 %v1683, %v2119
    %2121 = vmatprep.subr.mxu0 %v2120
    %v2122 = vand.u32 %v1682, 4294901760
    %v2123 = vsub.f32 %v1682, %v2122
    %2124 = vmatpush1.msra.mxu0 %v2123
    %2125 = vmatprep.subr.mxu0 0.0
    %2126 = vmatpush2.msra.mxu0 0.0
    %2127 = vmatprep.subr.mxu0 0.0
    %2128 = vmatpush2.msra.mxu0 0.0
    %2129 = vmatprep.subr.mxu0 0.0
    %2130 = vmatpush2.msra.mxu0 0.0
    %2131 = vmatprep.subr.mxu0 0.0
    %2132 = vmatpush2.msra.mxu0 0.0
    %2133 = vmatprep.subr.mxu0 0.0
    %2134 = vmatpush2.msra.mxu0 0.0
    %2135 = vmatprep.subr.mxu0 0.0
    %2136 = vmatpush2.msra.mxu0 0.0
    %2137 = vmatprep.subr.mxu0 0.0
    %2138 = vmatpush2.msra.mxu0 0.0
    %2139 = vmatprep.subr.mxu0 0.0
    %2140 = vmatpush2.msra.mxu0 0.0
    %2141 = vmatprep.subr.mxu0 0.0
    %2142 = vmatpush2.msra.mxu0 0.0
    %2143 = vmatprep.subr.mxu0 0.0
    %2144 = vmatpush2.msra.mxu0 0.0
    %2145 = vmatprep.subr.mxu0 0.0
    %2146 = vmatpush2.msra.mxu0 0.0
    %2147 = vmatprep.subr.mxu0 0.0
    %2148 = vmatpush2.msra.mxu0 0.0
    %2149 = vmatprep.subr.mxu0 0.0
    %2150 = vmatpush2.msra.mxu0 0.0
    %2151 = vmatprep.subr.mxu0 0.0
    %2152 = vmatpush2.msra.mxu0 0.0
    %2153 = vmatprep.subr.mxu0 0.0
    %2154 = vmatpush2.msra.mxu0 0.0
    %2155 = vmatprep.subr.mxu0 0.0
    %2156 = vmatpush2.msra.mxu0 0.0
    %2157 = vmatprep.mubr.f32.mxu0 0.0
    %v2158 = vand.u32 %v1705, 4294901760
    %v2159 = vsub.f32 %v1705, %v2158
    %2160 = vmatmul.mubr.f32.gmra.mxu0 %v2159
    %v2161 = vpop.f32.mrf.mxu0
    %v2162 = vadd.f32 %v2019, %v2161
    %v2163 = vpop.f32.mrf.mxu0
    %v2164 = vadd.f32 %v2021, %v2163
    %2165 = vmatprep.mubr.f32.mxu0 0.0
    %v2166 = vand.u32 %v1708, 4294901760
    %v2167 = vsub.f32 %v1708, %v2166
    %2168 = vmatmul.mubr.f32.gmra.mxu0 %v2167
    %v2169 = vpop.f32.mrf.mxu0
    %v2170 = vadd.f32 %v2026, %v2169
    %v2171 = vpop.f32.mrf.mxu0
    %v2172 = vadd.f32 %v2028, %v2171
    %2173 = vmatprep.mubr.f32.mxu0 0.0
    %v2174 = vand.u32 %v1711, 4294901760
    %v2175 = vsub.f32 %v1711, %v2174
    %2176 = vmatmul.mubr.f32.gmra.mxu0 %v2175
    %v2177 = vpop.f32.mrf.mxu0
    %v2178 = vadd.f32 %v2033, %v2177
    %v2179 = vpop.f32.mrf.mxu0
    %v2180 = vadd.f32 %v2035, %v2179
    %2181 = vmatprep.mubr.f32.mxu0 0.0
    %v2182 = vand.u32 %v1714, 4294901760
    %v2183 = vsub.f32 %v1714, %v2182
    %2184 = vmatmul.mubr.f32.gmra.mxu0 %v2183
    %v2185 = vpop.f32.mrf.mxu0
    %v2186 = vadd.f32 %v2040, %v2185
    %v2187 = vpop.f32.mrf.mxu0
    %v2188 = vadd.f32 %v2042, %v2187
    %2189 = vmatprep.mubr.f32.mxu0 0.0
    %v2190 = vand.u32 %v1717, 4294901760
    %v2191 = vsub.f32 %v1717, %v2190
    %2192 = vmatmul.mubr.f32.gmra.mxu0 %v2191
    %v2193 = vpop.f32.mrf.mxu0
    %v2194 = vadd.f32 %v2047, %v2193
    %v2195 = vpop.f32.mrf.mxu0
    %v2196 = vadd.f32 %v2049, %v2195
    %2197 = vmatprep.mubr.f32.mxu0 0.0
    %v2198 = vand.u32 %v1720, 4294901760
    %v2199 = vsub.f32 %v1720, %v2198
    %2200 = vmatmul.mubr.f32.gmra.mxu0 %v2199
    %v2201 = vpop.f32.mrf.mxu0
    %v2202 = vadd.f32 %v2054, %v2201
    %v2203 = vpop.f32.mrf.mxu0
    %v2204 = vadd.f32 %v2056, %v2203
    %2205 = vmatprep.mubr.f32.mxu0 0.0
    %v2206 = vand.u32 %v1723, 4294901760
    %v2207 = vsub.f32 %v1723, %v2206
    %2208 = vmatmul.mubr.f32.gmra.mxu0 %v2207
    %v2209 = vpop.f32.mrf.mxu0
    %v2210 = vadd.f32 %v2061, %v2209
    %v2211 = vpop.f32.mrf.mxu0
    %v2212 = vadd.f32 %v2063, %v2211
    %2213 = vdwg.mxu0
    %2214 = vmatprep.subr.mxu0 0.0
    %2215 = vmatpush1.msra.mxu0 0.0
    %2216 = vmatprep.subr.mxu0 0.0
    %2217 = vmatpush1.msra.mxu0 0.0
    %2218 = vmatprep.subr.mxu0 0.0
    %2219 = vmatpush1.msra.mxu0 0.0
    %2220 = vmatprep.subr.mxu0 0.0
    %2221 = vmatpush1.msra.mxu0 0.0
    %2222 = vmatprep.subr.mxu0 0.0
    %2223 = vmatpush1.msra.mxu0 0.0
    %2224 = vmatprep.subr.mxu0 0.0
    %2225 = vmatpush1.msra.mxu0 0.0
    %2226 = vmatprep.subr.mxu0 0.0
    %2227 = vmatpush1.msra.mxu0 0.0
    %2228 = vmatprep.subr.mxu0 0.0
    %2229 = vmatpush1.msra.mxu0 0.0
    %2230 = vmatprep.subr.mxu0 0.0
    %2231 = vmatpush1.msra.mxu0 0.0
    %v2232 = vand.u32 %v1695, 4294901760
    %2233 = vmatprep.subr.mxu0 %v2232
    %v2234 = vand.u32 %v1694, 4294901760
    %2235 = vmatpush1.msra.mxu0 %v2234
    %v2236 = vand.u32 %v1693, 4294901760
    %2237 = vmatprep.subr.mxu0 %v2236
    %v2238 = vand.u32 %v1692, 4294901760
    %2239 = vmatpush1.msra.mxu0 %v2238
    %v2240 = vand.u32 %v1691, 4294901760
    %2241 = vmatprep.subr.mxu0 %v2240
    %v2242 = vand.u32 %v1690, 4294901760
    %2243 = vmatpush1.msra.mxu0 %v2242
    %v2244 = vand.u32 %v1689, 4294901760
    %2245 = vmatprep.subr.mxu0 %v2244
    %v2246 = vand.u32 %v1688, 4294901760
    %2247 = vmatpush1.msra.mxu0 %v2246
    %v2248 = vand.u32 %v1687, 4294901760
    %2249 = vmatprep.subr.mxu0 %v2248
    %v2250 = vand.u32 %v1686, 4294901760
    %2251 = vmatpush1.msra.mxu0 %v2250
    %v2252 = vand.u32 %v1685, 4294901760
    %2253 = vmatprep.subr.mxu0 %v2252
    %v2254 = vand.u32 %v1684, 4294901760
    %2255 = vmatpush1.msra.mxu0 %v2254
    %v2256 = vand.u32 %v1683, 4294901760
    %2257 = vmatprep.subr.mxu0 %v2256
    %v2258 = vand.u32 %v1682, 4294901760
    %2259 = vmatpush1.msra.mxu0 %v2258
    %2260 = vmatprep.subr.mxu0 0.0
    %2261 = vmatpush2.msra.mxu0 0.0
    %2262 = vmatprep.subr.mxu0 0.0
    %2263 = vmatpush2.msra.mxu0 0.0
    %2264 = vmatprep.subr.mxu0 0.0
    %2265 = vmatpush2.msra.mxu0 0.0
    %2266 = vmatprep.subr.mxu0 0.0
    %2267 = vmatpush2.msra.mxu0 0.0
    %2268 = vmatprep.subr.mxu0 0.0
    %2269 = vmatpush2.msra.mxu0 0.0
    %2270 = vmatprep.subr.mxu0 0.0
    %2271 = vmatpush2.msra.mxu0 0.0
    %2272 = vmatprep.subr.mxu0 0.0
    %2273 = vmatpush2.msra.mxu0 0.0
    %2274 = vmatprep.subr.mxu0 0.0
    %2275 = vmatpush2.msra.mxu0 0.0
    %2276 = vmatprep.subr.mxu0 0.0
    %2277 = vmatpush2.msra.mxu0 0.0
    %2278 = vmatprep.subr.mxu0 0.0
    %2279 = vmatpush2.msra.mxu0 0.0
    %2280 = vmatprep.subr.mxu0 0.0
    %2281 = vmatpush2.msra.mxu0 0.0
    %2282 = vmatprep.subr.mxu0 0.0
    %2283 = vmatpush2.msra.mxu0 0.0
    %2284 = vmatprep.subr.mxu0 0.0
    %2285 = vmatpush2.msra.mxu0 0.0
    %2286 = vmatprep.subr.mxu0 0.0
    %2287 = vmatpush2.msra.mxu0 0.0
    %2288 = vmatprep.subr.mxu0 0.0
    %2289 = vmatpush2.msra.mxu0 0.0
    %2290 = vmatprep.subr.mxu0 0.0
    %2291 = vmatpush2.msra.mxu0 0.0
    %2292 = vmatprep.mubr.f32.mxu0 0.0
    %v2293 = vand.u32 %v1705, 4294901760
    %v2294 = vsub.f32 %v1705, %v2293
    %v2295 = vand.u32 %v2294, 4294901760
    %2296 = vmatmul.mubr.f32.gmra.mxu0 %v2295
    %v2297 = vpop.f32.mrf.mxu0
    %v2298 = vadd.f32 %v2162, %v2297
    %v2299 = vpop.f32.mrf.mxu0
    %v2300 = vadd.f32 %v2164, %v2299
    %2301 = vmatprep.mubr.f32.mxu0 0.0
    %v2302 = vand.u32 %v1708, 4294901760
    %v2303 = vsub.f32 %v1708, %v2302
    %v2304 = vand.u32 %v2303, 4294901760
    %2305 = vmatmul.mubr.f32.gmra.mxu0 %v2304
    %v2306 = vpop.f32.mrf.mxu0
    %v2307 = vadd.f32 %v2170, %v2306
    %v2308 = vpop.f32.mrf.mxu0
    %v2309 = vadd.f32 %v2172, %v2308
    %2310 = vmatprep.mubr.f32.mxu0 0.0
    %v2311 = vand.u32 %v1711, 4294901760
    %v2312 = vsub.f32 %v1711, %v2311
    %v2313 = vand.u32 %v2312, 4294901760
    %2314 = vmatmul.mubr.f32.gmra.mxu0 %v2313
    %v2315 = vpop.f32.mrf.mxu0
    %v2316 = vadd.f32 %v2178, %v2315
    %v2317 = vpop.f32.mrf.mxu0
    %v2318 = vadd.f32 %v2180, %v2317
    %2319 = vmatprep.mubr.f32.mxu0 0.0
    %v2320 = vand.u32 %v1714, 4294901760
    %v2321 = vsub.f32 %v1714, %v2320
    %v2322 = vand.u32 %v2321, 4294901760
    %2323 = vmatmul.mubr.f32.gmra.mxu0 %v2322
    %v2324 = vpop.f32.mrf.mxu0
    %v2325 = vadd.f32 %v2186, %v2324
    %v2326 = vpop.f32.mrf.mxu0
    %v2327 = vadd.f32 %v2188, %v2326
    %2328 = vmatprep.mubr.f32.mxu0 0.0
    %v2329 = vand.u32 %v1717, 4294901760
    %v2330 = vsub.f32 %v1717, %v2329
    %v2331 = vand.u32 %v2330, 4294901760
    %2332 = vmatmul.mubr.f32.gmra.mxu0 %v2331
    %v2333 = vpop.f32.mrf.mxu0
    %v2334 = vadd.f32 %v2194, %v2333
    %v2335 = vpop.f32.mrf.mxu0
    %v2336 = vadd.f32 %v2196, %v2335
    %2337 = vmatprep.mubr.f32.mxu0 0.0
    %v2338 = vand.u32 %v1720, 4294901760
    %v2339 = vsub.f32 %v1720, %v2338
    %v2340 = vand.u32 %v2339, 4294901760
    %2341 = vmatmul.mubr.f32.gmra.mxu0 %v2340
    %v2342 = vpop.f32.mrf.mxu0
    %v2343 = vadd.f32 %v2202, %v2342
    %v2344 = vpop.f32.mrf.mxu0
    %v2345 = vadd.f32 %v2204, %v2344
    %2346 = vmatprep.mubr.f32.mxu0 0.0
    %v2347 = vand.u32 %v1723, 4294901760
    %v2348 = vsub.f32 %v1723, %v2347
    %v2349 = vand.u32 %v2348, 4294901760
    %2350 = vmatmul.mubr.f32.gmra.mxu0 %v2349
    %v2351 = vpop.f32.mrf.mxu0
    %v2352 = vadd.f32 %v2210, %v2351
    %v2353 = vpop.f32.mrf.mxu0
    %v2354 = vadd.f32 %v2212, %v2353
    %2355 = vdwg.mxu0
    %2356 = vmatprep.subr.mxu0 0.0
    %2357 = vmatpush1.msra.mxu0 0.0
    %2358 = vmatprep.subr.mxu0 0.0
    %2359 = vmatpush1.msra.mxu0 0.0
    %2360 = vmatprep.subr.mxu0 0.0
    %2361 = vmatpush1.msra.mxu0 0.0
    %2362 = vmatprep.subr.mxu0 0.0
    %2363 = vmatpush1.msra.mxu0 0.0
    %2364 = vmatprep.subr.mxu0 0.0
    %2365 = vmatpush1.msra.mxu0 0.0
    %2366 = vmatprep.subr.mxu0 0.0
    %2367 = vmatpush1.msra.mxu0 0.0
    %2368 = vmatprep.subr.mxu0 0.0
    %2369 = vmatpush1.msra.mxu0 0.0
    %2370 = vmatprep.subr.mxu0 0.0
    %2371 = vmatpush1.msra.mxu0 0.0
    %2372 = vmatprep.subr.mxu0 0.0
    %2373 = vmatpush1.msra.mxu0 0.0
    %v2374 = vand.u32 %v1695, 4294901760
    %v2375 = vsub.f32 %v1695, %v2374
    %v2376 = vand.u32 %v2375, 4294901760
    %2377 = vmatprep.subr.mxu0 %v2376
    %v2378 = vand.u32 %v1694, 4294901760
    %v2379 = vsub.f32 %v1694, %v2378
    %v2380 = vand.u32 %v2379, 4294901760
    %2381 = vmatpush1.msra.mxu0 %v2380
    %v2382 = vand.u32 %v1693, 4294901760
    %v2383 = vsub.f32 %v1693, %v2382
    %v2384 = vand.u32 %v2383, 4294901760
    %2385 = vmatprep.subr.mxu0 %v2384
    %v2386 = vand.u32 %v1692, 4294901760
    %v2387 = vsub.f32 %v1692, %v2386
    %v2388 = vand.u32 %v2387, 4294901760
    %2389 = vmatpush1.msra.mxu0 %v2388
    %v2390 = vand.u32 %v1691, 4294901760
    %v2391 = vsub.f32 %v1691, %v2390
    %v2392 = vand.u32 %v2391, 4294901760
    %2393 = vmatprep.subr.mxu0 %v2392
    %v2394 = vand.u32 %v1690, 4294901760
    %v2395 = vsub.f32 %v1690, %v2394
    %v2396 = vand.u32 %v2395, 4294901760
    %2397 = vmatpush1.msra.mxu0 %v2396
    %v2398 = vand.u32 %v1689, 4294901760
    %v2399 = vsub.f32 %v1689, %v2398
    %v2400 = vand.u32 %v2399, 4294901760
    %2401 = vmatprep.subr.mxu0 %v2400
    %v2402 = vand.u32 %v1688, 4294901760
    %v2403 = vsub.f32 %v1688, %v2402
    %v2404 = vand.u32 %v2403, 4294901760
    %2405 = vmatpush1.msra.mxu0 %v2404
    %v2406 = vand.u32 %v1687, 4294901760
    %v2407 = vsub.f32 %v1687, %v2406
    %v2408 = vand.u32 %v2407, 4294901760
    %2409 = vmatprep.subr.mxu0 %v2408
    %v2410 = vand.u32 %v1686, 4294901760
    %v2411 = vsub.f32 %v1686, %v2410
    %v2412 = vand.u32 %v2411, 4294901760
    %2413 = vmatpush1.msra.mxu0 %v2412
    %v2414 = vand.u32 %v1685, 4294901760
    %v2415 = vsub.f32 %v1685, %v2414
    %v2416 = vand.u32 %v2415, 4294901760
    %2417 = vmatprep.subr.mxu0 %v2416
    %v2418 = vand.u32 %v1684, 4294901760
    %v2419 = vsub.f32 %v1684, %v2418
    %v2420 = vand.u32 %v2419, 4294901760
    %2421 = vmatpush1.msra.mxu0 %v2420
    %v2422 = vand.u32 %v1683, 4294901760
    %v2423 = vsub.f32 %v1683, %v2422
    %v2424 = vand.u32 %v2423, 4294901760
    %2425 = vmatprep.subr.mxu0 %v2424
    %v2426 = vand.u32 %v1682, 4294901760
    %v2427 = vsub.f32 %v1682, %v2426
    %v2428 = vand.u32 %v2427, 4294901760
    %2429 = vmatpush1.msra.mxu0 %v2428
    %2430 = vmatprep.subr.mxu0 0.0
    %2431 = vmatpush2.msra.mxu0 0.0
    %2432 = vmatprep.subr.mxu0 0.0
    %2433 = vmatpush2.msra.mxu0 0.0
    %2434 = vmatprep.subr.mxu0 0.0
    %2435 = vmatpush2.msra.mxu0 0.0
    %2436 = vmatprep.subr.mxu0 0.0
    %2437 = vmatpush2.msra.mxu0 0.0
    %2438 = vmatprep.subr.mxu0 0.0
    %2439 = vmatpush2.msra.mxu0 0.0
    %2440 = vmatprep.subr.mxu0 0.0
    %2441 = vmatpush2.msra.mxu0 0.0
    %2442 = vmatprep.subr.mxu0 0.0
    %2443 = vmatpush2.msra.mxu0 0.0
    %2444 = vmatprep.subr.mxu0 0.0
    %2445 = vmatpush2.msra.mxu0 0.0
    %2446 = vmatprep.subr.mxu0 0.0
    %2447 = vmatpush2.msra.mxu0 0.0
    %2448 = vmatprep.subr.mxu0 0.0
    %2449 = vmatpush2.msra.mxu0 0.0
    %2450 = vmatprep.subr.mxu0 0.0
    %2451 = vmatpush2.msra.mxu0 0.0
    %2452 = vmatprep.subr.mxu0 0.0
    %2453 = vmatpush2.msra.mxu0 0.0
    %2454 = vmatprep.subr.mxu0 0.0
    %2455 = vmatpush2.msra.mxu0 0.0
    %2456 = vmatprep.subr.mxu0 0.0
    %2457 = vmatpush2.msra.mxu0 0.0
    %2458 = vmatprep.subr.mxu0 0.0
    %2459 = vmatpush2.msra.mxu0 0.0
    %2460 = vmatprep.subr.mxu0 0.0
    %2461 = vmatpush2.msra.mxu0 0.0
    %2462 = vmatprep.mubr.f32.mxu0 0.0
    %v2463 = vand.u32 %v1705, 4294901760
    %2464 = vmatmul.mubr.f32.gmra.mxu0 %v2463
    %v2465 = vpop.f32.mrf.mxu0
    %v2466 = vadd.f32 %v2298, %v2465
    %v2467 = vpop.f32.mrf.mxu0
    %v2468 = vadd.f32 %v2300, %v2467
    %2469 = vmatprep.mubr.f32.mxu0 0.0
    %v2470 = vand.u32 %v1708, 4294901760
    %2471 = vmatmul.mubr.f32.gmra.mxu0 %v2470
    %v2472 = vpop.f32.mrf.mxu0
    %v2473 = vadd.f32 %v2307, %v2472
    %v2474 = vpop.f32.mrf.mxu0
    %v2475 = vadd.f32 %v2309, %v2474
    %2476 = vmatprep.mubr.f32.mxu0 0.0
    %v2477 = vand.u32 %v1711, 4294901760
    %2478 = vmatmul.mubr.f32.gmra.mxu0 %v2477
    %v2479 = vpop.f32.mrf.mxu0
    %v2480 = vadd.f32 %v2316, %v2479
    %v2481 = vpop.f32.mrf.mxu0
    %v2482 = vadd.f32 %v2318, %v2481
    %2483 = vmatprep.mubr.f32.mxu0 0.0
    %v2484 = vand.u32 %v1714, 4294901760
    %2485 = vmatmul.mubr.f32.gmra.mxu0 %v2484
    %v2486 = vpop.f32.mrf.mxu0
    %v2487 = vadd.f32 %v2325, %v2486
    %v2488 = vpop.f32.mrf.mxu0
    %v2489 = vadd.f32 %v2327, %v2488
    %2490 = vmatprep.mubr.f32.mxu0 0.0
    %v2491 = vand.u32 %v1717, 4294901760
    %2492 = vmatmul.mubr.f32.gmra.mxu0 %v2491
    %v2493 = vpop.f32.mrf.mxu0
    %v2494 = vadd.f32 %v2334, %v2493
    %v2495 = vpop.f32.mrf.mxu0
    %v2496 = vadd.f32 %v2336, %v2495
    %2497 = vmatprep.mubr.f32.mxu0 0.0
    %v2498 = vand.u32 %v1720, 4294901760
    %2499 = vmatmul.mubr.f32.gmra.mxu0 %v2498
    %v2500 = vpop.f32.mrf.mxu0
    %v2501 = vadd.f32 %v2343, %v2500
    %v2502 = vpop.f32.mrf.mxu0
    %v2503 = vadd.f32 %v2345, %v2502
    %2504 = vmatprep.mubr.f32.mxu0 0.0
    %v2505 = vand.u32 %v1723, 4294901760
    %2506 = vmatmul.mubr.f32.gmra.mxu0 %v2505
    %v2507 = vpop.f32.mrf.mxu0
    %v2508 = vadd.f32 %v2352, %v2507
    %v2509 = vpop.f32.mrf.mxu0
    %v2510 = vadd.f32 %v2354, %v2509
    %2511 = vdwg.mxu0
    %2512 = vmatprep.subr.mxu0 0.0
    %2513 = vmatpush1.msra.mxu0 0.0
    %2514 = vmatprep.subr.mxu0 0.0
    %2515 = vmatpush1.msra.mxu0 0.0
    %2516 = vmatprep.subr.mxu0 0.0
    %2517 = vmatpush1.msra.mxu0 0.0
    %2518 = vmatprep.subr.mxu0 0.0
    %2519 = vmatpush1.msra.mxu0 0.0
    %2520 = vmatprep.subr.mxu0 0.0
    %2521 = vmatpush1.msra.mxu0 0.0
    %2522 = vmatprep.subr.mxu0 0.0
    %2523 = vmatpush1.msra.mxu0 0.0
    %2524 = vmatprep.subr.mxu0 0.0
    %2525 = vmatpush1.msra.mxu0 0.0
    %2526 = vmatprep.subr.mxu0 0.0
    %2527 = vmatpush1.msra.mxu0 0.0
    %2528 = vmatprep.subr.mxu0 0.0
    %2529 = vmatpush1.msra.mxu0 0.0
    %v2530 = vand.u32 %v1695, 4294901760
    %2531 = vmatprep.subr.mxu0 %v2530
    %v2532 = vand.u32 %v1694, 4294901760
    %2533 = vmatpush1.msra.mxu0 %v2532
    %v2534 = vand.u32 %v1693, 4294901760
    %2535 = vmatprep.subr.mxu0 %v2534
    %v2536 = vand.u32 %v1692, 4294901760
    %2537 = vmatpush1.msra.mxu0 %v2536
    %v2538 = vand.u32 %v1691, 4294901760
    %2539 = vmatprep.subr.mxu0 %v2538
    %v2540 = vand.u32 %v1690, 4294901760
    %2541 = vmatpush1.msra.mxu0 %v2540
    %v2542 = vand.u32 %v1689, 4294901760
    %2543 = vmatprep.subr.mxu0 %v2542
    %v2544 = vand.u32 %v1688, 4294901760
    %2545 = vmatpush1.msra.mxu0 %v2544
    %v2546 = vand.u32 %v1687, 4294901760
    %2547 = vmatprep.subr.mxu0 %v2546
    %v2548 = vand.u32 %v1686, 4294901760
    %2549 = vmatpush1.msra.mxu0 %v2548
    %v2550 = vand.u32 %v1685, 4294901760
    %2551 = vmatprep.subr.mxu0 %v2550
    %v2552 = vand.u32 %v1684, 4294901760
    %2553 = vmatpush1.msra.mxu0 %v2552
    %v2554 = vand.u32 %v1683, 4294901760
    %2555 = vmatprep.subr.mxu0 %v2554
    %v2556 = vand.u32 %v1682, 4294901760
    %2557 = vmatpush1.msra.mxu0 %v2556
    %2558 = vmatprep.subr.mxu0 0.0
    %2559 = vmatpush2.msra.mxu0 0.0
    %2560 = vmatprep.subr.mxu0 0.0
    %2561 = vmatpush2.msra.mxu0 0.0
    %2562 = vmatprep.subr.mxu0 0.0
    %2563 = vmatpush2.msra.mxu0 0.0
    %2564 = vmatprep.subr.mxu0 0.0
    %2565 = vmatpush2.msra.mxu0 0.0
    %2566 = vmatprep.subr.mxu0 0.0
    %2567 = vmatpush2.msra.mxu0 0.0
    %2568 = vmatprep.subr.mxu0 0.0
    %2569 = vmatpush2.msra.mxu0 0.0
    %2570 = vmatprep.subr.mxu0 0.0
    %2571 = vmatpush2.msra.mxu0 0.0
    %2572 = vmatprep.subr.mxu0 0.0
    %2573 = vmatpush2.msra.mxu0 0.0
    %2574 = vmatprep.subr.mxu0 0.0
    %2575 = vmatpush2.msra.mxu0 0.0
    %2576 = vmatprep.subr.mxu0 0.0
    %2577 = vmatpush2.msra.mxu0 0.0
    %2578 = vmatprep.subr.mxu0 0.0
    %2579 = vmatpush2.msra.mxu0 0.0
    %2580 = vmatprep.subr.mxu0 0.0
    %2581 = vmatpush2.msra.mxu0 0.0
    %2582 = vmatprep.subr.mxu0 0.0
    %2583 = vmatpush2.msra.mxu0 0.0
    %2584 = vmatprep.subr.mxu0 0.0
    %2585 = vmatpush2.msra.mxu0 0.0
    %2586 = vmatprep.subr.mxu0 0.0
    %2587 = vmatpush2.msra.mxu0 0.0
    %2588 = vmatprep.subr.mxu0 0.0
    %2589 = vmatpush2.msra.mxu0 0.0
    %2590 = vmatprep.mubr.f32.mxu0 0.0
    %v2591 = vand.u32 %v1705, 4294901760
    %2592 = vmatmul.mubr.f32.gmra.mxu0 %v2591
    %v2593 = vpop.f32.mrf.mxu0
    %v2594 = vadd.f32 %v2466, %v2593
    %v2595 = vpop.f32.mrf.mxu0
    %v2596 = vadd.f32 %v2468, %v2595
    %2597 = vmatprep.mubr.f32.mxu0 0.0
    %v2598 = vand.u32 %v1708, 4294901760
    %2599 = vmatmul.mubr.f32.gmra.mxu0 %v2598
    %v2600 = vpop.f32.mrf.mxu0
    %v2601 = vadd.f32 %v2473, %v2600
    %v2602 = vpop.f32.mrf.mxu0
    %v2603 = vadd.f32 %v2475, %v2602
    %2604 = vmatprep.mubr.f32.mxu0 0.0
    %v2605 = vand.u32 %v1711, 4294901760
    %2606 = vmatmul.mubr.f32.gmra.mxu0 %v2605
    %v2607 = vpop.f32.mrf.mxu0
    %v2608 = vadd.f32 %v2480, %v2607
    %v2609 = vpop.f32.mrf.mxu0
    %v2610 = vadd.f32 %v2482, %v2609
    %2611 = vmatprep.mubr.f32.mxu0 0.0
    %v2612 = vand.u32 %v1714, 4294901760
    %2613 = vmatmul.mubr.f32.gmra.mxu0 %v2612
    %v2614 = vpop.f32.mrf.mxu0
    %v2615 = vadd.f32 %v2487, %v2614
    %v2616 = vpop.f32.mrf.mxu0
    %v2617 = vadd.f32 %v2489, %v2616
    %2618 = vmatprep.mubr.f32.mxu0 0.0
    %v2619 = vand.u32 %v1717, 4294901760
    %2620 = vmatmul.mubr.f32.gmra.mxu0 %v2619
    %v2621 = vpop.f32.mrf.mxu0
    %v2622 = vadd.f32 %v2494, %v2621
    %v2623 = vpop.f32.mrf.mxu0
    %v2624 = vadd.f32 %v2496, %v2623
    %2625 = vmatprep.mubr.f32.mxu0 0.0
    %v2626 = vand.u32 %v1720, 4294901760
    %2627 = vmatmul.mubr.f32.gmra.mxu0 %v2626
    %v2628 = vpop.f32.mrf.mxu0
    %v2629 = vadd.f32 %v2501, %v2628
    %v2630 = vpop.f32.mrf.mxu0
    %v2631 = vadd.f32 %v2503, %v2630
    %2632 = vmatprep.mubr.f32.mxu0 0.0
    %v2633 = vand.u32 %v1723, 4294901760
    %2634 = vmatmul.mubr.f32.gmra.mxu0 %v2633
    %v2635 = vpop.f32.mrf.mxu0
    %v2636 = vadd.f32 %v2508, %v2635
    %v2637 = vpop.f32.mrf.mxu0
    %v2638 = vadd.f32 %v2510, %v2637
    %2639 = vdwg.mxu0
    %v2640 = vmax.f32 %v2594, 0.0
    %v2641 = vmax.f32 %v2596, 0.0
    %v2642 = vmax.f32 %v2601, 0.0
    %v2643 = vmax.f32 %v2603, 0.0
    %v2644 = vmax.f32 %v2608, 0.0
    %v2645 = vmax.f32 %v2610, 0.0
    %v2646 = vmax.f32 %v2615, 0.0
    %v2647 = vmax.f32 %v2617, 0.0
    %v2648 = vmax.f32 %v2622, 0.0
    %v2649 = vmax.f32 %v2624, 0.0
    %v2650 = vmax.f32 %v2629, 0.0
    %v2651 = vmax.f32 %v2631, 0.0
    %v2652 = vmax.f32 %v2636, 0.0
    %v2653 = vmax.f32 %v2638, 0.0
    %v2654 = vld [vmem:[%s6] sm:$0x1]
    %v2656 = vsel %vm1703, %v2654, 0
    %2658 = vmatprep.subr.mxu0 0.0
    %2659 = vmatpush1.msra.mxu0 0.0
    %2660 = vmatprep.subr.mxu0 0.0
    %2661 = vmatpush1.msra.mxu0 0.0
    %2662 = vmatprep.subr.mxu0 0.0
    %2663 = vmatpush1.msra.mxu0 0.0
    %2664 = vmatprep.subr.mxu0 0.0
    %2665 = vmatpush1.msra.mxu0 0.0
    %2666 = vmatprep.subr.mxu0 0.0
    %2667 = vmatpush1.msra.mxu0 0.0
    %2668 = vmatprep.subr.mxu0 0.0
    %2669 = vmatpush1.msra.mxu0 0.0
    %2670 = vmatprep.subr.mxu0 0.0
    %2671 = vmatpush1.msra.mxu0 0.0
    %2672 = vmatprep.subr.mxu0 0.0
    %2673 = vmatpush1.msra.mxu0 0.0
    %2674 = vmatprep.subr.mxu0 0.0
    %2675 = vmatpush1.msra.mxu0 0.0
    %v2676 = vand.u32 %v2653, 4294901760
    %2677 = vmatprep.subr.mxu0 %v2676
    %v2678 = vand.u32 %v2652, 4294901760
    %2679 = vmatpush1.msra.mxu0 %v2678
    %v2680 = vand.u32 %v2651, 4294901760
    %2681 = vmatprep.subr.mxu0 %v2680
    %v2682 = vand.u32 %v2650, 4294901760
    %2683 = vmatpush1.msra.mxu0 %v2682
    %v2684 = vand.u32 %v2649, 4294901760
    %2685 = vmatprep.subr.mxu0 %v2684
    %v2686 = vand.u32 %v2648, 4294901760
    %2687 = vmatpush1.msra.mxu0 %v2686
    %v2688 = vand.u32 %v2647, 4294901760
    %2689 = vmatprep.subr.mxu0 %v2688
    %v2690 = vand.u32 %v2646, 4294901760
    %2691 = vmatpush1.msra.mxu0 %v2690
    %v2692 = vand.u32 %v2645, 4294901760
    %2693 = vmatprep.subr.mxu0 %v2692
    %v2694 = vand.u32 %v2644, 4294901760
    %2695 = vmatpush1.msra.mxu0 %v2694
    %v2696 = vand.u32 %v2643, 4294901760
    %2697 = vmatprep.subr.mxu0 %v2696
    %v2698 = vand.u32 %v2642, 4294901760
    %2699 = vmatpush1.msra.mxu0 %v2698
    %v2700 = vand.u32 %v2641, 4294901760
    %2701 = vmatprep.subr.mxu0 %v2700
    %v2702 = vand.u32 %v2640, 4294901760
    %2703 = vmatpush1.msra.mxu0 %v2702
    %2704 = vmatprep.subr.mxu0 0.0
    %2705 = vmatpush2.msra.mxu0 0.0
    %2706 = vmatprep.subr.mxu0 0.0
    %2707 = vmatpush2.msra.mxu0 0.0
    %2708 = vmatprep.subr.mxu0 0.0
    %2709 = vmatpush2.msra.mxu0 0.0
    %2710 = vmatprep.subr.mxu0 0.0
    %2711 = vmatpush2.msra.mxu0 0.0
    %2712 = vmatprep.subr.mxu0 0.0
    %2713 = vmatpush2.msra.mxu0 0.0
    %2714 = vmatprep.subr.mxu0 0.0
    %2715 = vmatpush2.msra.mxu0 0.0
    %2716 = vmatprep.subr.mxu0 0.0
    %2717 = vmatpush2.msra.mxu0 0.0
    %2718 = vmatprep.subr.mxu0 0.0
    %2719 = vmatpush2.msra.mxu0 0.0
    %2720 = vmatprep.subr.mxu0 0.0
    %2721 = vmatpush2.msra.mxu0 0.0
    %2722 = vmatprep.subr.mxu0 0.0
    %2723 = vmatpush2.msra.mxu0 0.0
    %2724 = vmatprep.subr.mxu0 0.0
    %2725 = vmatpush2.msra.mxu0 0.0
    %2726 = vmatprep.subr.mxu0 0.0
    %2727 = vmatpush2.msra.mxu0 0.0
    %2728 = vmatprep.subr.mxu0 0.0
    %2729 = vmatpush2.msra.mxu0 0.0
    %2730 = vmatprep.subr.mxu0 0.0
    %2731 = vmatpush2.msra.mxu0 0.0
    %2732 = vmatprep.subr.mxu0 0.0
    %2733 = vmatpush2.msra.mxu0 0.0
    %2734 = vmatprep.subr.mxu0 0.0
    %2735 = vmatpush2.msra.mxu0 0.0
    %2736 = vmatprep.mubr.f32.mxu0 0.0
    %v2737 = vand.u32 %v2656, 4294901760
    %v2738 = vsub.f32 %v2656, %v2737
    %v2739 = vand.u32 %v2738, 4294901760
    %v2740 = vsub.f32 %v2738, %v2739
    %v2741 = vand.u32 %v2740, 4294901760
    %2742 = vmatmul.mubr.f32.gmra.mxu0 %v2741
    %v2743 = vpop.f32.mrf.mxu0
    %v2744 = vadd.f32 0.0, %v2743
    %v2745 = vpop.f32.mrf.mxu0
    %v2746 = vadd.f32 0.0, %v2745
    %2747 = vdwg.mxu0
    %2748 = vmatprep.subr.mxu0 0.0
    %2749 = vmatpush1.msra.mxu0 0.0
    %2750 = vmatprep.subr.mxu0 0.0
    %2751 = vmatpush1.msra.mxu0 0.0
    %2752 = vmatprep.subr.mxu0 0.0
    %2753 = vmatpush1.msra.mxu0 0.0
    %2754 = vmatprep.subr.mxu0 0.0
    %2755 = vmatpush1.msra.mxu0 0.0
    %2756 = vmatprep.subr.mxu0 0.0
    %2757 = vmatpush1.msra.mxu0 0.0
    %2758 = vmatprep.subr.mxu0 0.0
    %2759 = vmatpush1.msra.mxu0 0.0
    %2760 = vmatprep.subr.mxu0 0.0
    %2761 = vmatpush1.msra.mxu0 0.0
    %2762 = vmatprep.subr.mxu0 0.0
    %2763 = vmatpush1.msra.mxu0 0.0
    %2764 = vmatprep.subr.mxu0 0.0
    %2765 = vmatpush1.msra.mxu0 0.0
    %v2766 = vand.u32 %v2653, 4294901760
    %v2767 = vsub.f32 %v2653, %v2766
    %v2768 = vand.u32 %v2767, 4294901760
    %v2769 = vsub.f32 %v2767, %v2768
    %v2770 = vand.u32 %v2769, 4294901760
    %2771 = vmatprep.subr.mxu0 %v2770
    %v2772 = vand.u32 %v2652, 4294901760
    %v2773 = vsub.f32 %v2652, %v2772
    %v2774 = vand.u32 %v2773, 4294901760
    %v2775 = vsub.f32 %v2773, %v2774
    %v2776 = vand.u32 %v2775, 4294901760
    %2777 = vmatpush1.msra.mxu0 %v2776
    %v2778 = vand.u32 %v2651, 4294901760
    %v2779 = vsub.f32 %v2651, %v2778
    %v2780 = vand.u32 %v2779, 4294901760
    %v2781 = vsub.f32 %v2779, %v2780
    %v2782 = vand.u32 %v2781, 4294901760
    %2783 = vmatprep.subr.mxu0 %v2782
    %v2784 = vand.u32 %v2650, 4294901760
    %v2785 = vsub.f32 %v2650, %v2784
    %v2786 = vand.u32 %v2785, 4294901760
    %v2787 = vsub.f32 %v2785, %v2786
    %v2788 = vand.u32 %v2787, 4294901760
    %2789 = vmatpush1.msra.mxu0 %v2788
    %v2790 = vand.u32 %v2649, 4294901760
    %v2791 = vsub.f32 %v2649, %v2790
    %v2792 = vand.u32 %v2791, 4294901760
    %v2793 = vsub.f32 %v2791, %v2792
    %v2794 = vand.u32 %v2793, 4294901760
    %2795 = vmatprep.subr.mxu0 %v2794
    %v2796 = vand.u32 %v2648, 4294901760
    %v2797 = vsub.f32 %v2648, %v2796
    %v2798 = vand.u32 %v2797, 4294901760
    %v2799 = vsub.f32 %v2797, %v2798
    %v2800 = vand.u32 %v2799, 4294901760
    %2801 = vmatpush1.msra.mxu0 %v2800
    %v2802 = vand.u32 %v2647, 4294901760
    %v2803 = vsub.f32 %v2647, %v2802
    %v2804 = vand.u32 %v2803, 4294901760
    %v2805 = vsub.f32 %v2803, %v2804
    %v2806 = vand.u32 %v2805, 4294901760
    %2807 = vmatprep.subr.mxu0 %v2806
    %v2808 = vand.u32 %v2646, 4294901760
    %v2809 = vsub.f32 %v2646, %v2808
    %v2810 = vand.u32 %v2809, 4294901760
    %v2811 = vsub.f32 %v2809, %v2810
    %v2812 = vand.u32 %v2811, 4294901760
    %2813 = vmatpush1.msra.mxu0 %v2812
    %v2814 = vand.u32 %v2645, 4294901760
    %v2815 = vsub.f32 %v2645, %v2814
    %v2816 = vand.u32 %v2815, 4294901760
    %v2817 = vsub.f32 %v2815, %v2816
    %v2818 = vand.u32 %v2817, 4294901760
    %2819 = vmatprep.subr.mxu0 %v2818
    %v2820 = vand.u32 %v2644, 4294901760
    %v2821 = vsub.f32 %v2644, %v2820
    %v2822 = vand.u32 %v2821, 4294901760
    %v2823 = vsub.f32 %v2821, %v2822
    %v2824 = vand.u32 %v2823, 4294901760
    %2825 = vmatpush1.msra.mxu0 %v2824
    %v2826 = vand.u32 %v2643, 4294901760
    %v2827 = vsub.f32 %v2643, %v2826
    %v2828 = vand.u32 %v2827, 4294901760
    %v2829 = vsub.f32 %v2827, %v2828
    %v2830 = vand.u32 %v2829, 4294901760
    %2831 = vmatprep.subr.mxu0 %v2830
    %v2832 = vand.u32 %v2642, 4294901760
    %v2833 = vsub.f32 %v2642, %v2832
    %v2834 = vand.u32 %v2833, 4294901760
    %v2835 = vsub.f32 %v2833, %v2834
    %v2836 = vand.u32 %v2835, 4294901760
    %2837 = vmatpush1.msra.mxu0 %v2836
    %v2838 = vand.u32 %v2641, 4294901760
    %v2839 = vsub.f32 %v2641, %v2838
    %v2840 = vand.u32 %v2839, 4294901760
    %v2841 = vsub.f32 %v2839, %v2840
    %v2842 = vand.u32 %v2841, 4294901760
    %2843 = vmatprep.subr.mxu0 %v2842
    %v2844 = vand.u32 %v2640, 4294901760
    %v2845 = vsub.f32 %v2640, %v2844
    %v2846 = vand.u32 %v2845, 4294901760
    %v2847 = vsub.f32 %v2845, %v2846
    %v2848 = vand.u32 %v2847, 4294901760
    %2849 = vmatpush1.msra.mxu0 %v2848
    %2850 = vmatprep.subr.mxu0 0.0
    %2851 = vmatpush2.msra.mxu0 0.0
    %2852 = vmatprep.subr.mxu0 0.0
    %2853 = vmatpush2.msra.mxu0 0.0
    %2854 = vmatprep.subr.mxu0 0.0
    %2855 = vmatpush2.msra.mxu0 0.0
    %2856 = vmatprep.subr.mxu0 0.0
    %2857 = vmatpush2.msra.mxu0 0.0
    %2858 = vmatprep.subr.mxu0 0.0
    %2859 = vmatpush2.msra.mxu0 0.0
    %2860 = vmatprep.subr.mxu0 0.0
    %2861 = vmatpush2.msra.mxu0 0.0
    %2862 = vmatprep.subr.mxu0 0.0
    %2863 = vmatpush2.msra.mxu0 0.0
    %2864 = vmatprep.subr.mxu0 0.0
    %2865 = vmatpush2.msra.mxu0 0.0
    %2866 = vmatprep.subr.mxu0 0.0
    %2867 = vmatpush2.msra.mxu0 0.0
    %2868 = vmatprep.subr.mxu0 0.0
    %2869 = vmatpush2.msra.mxu0 0.0
    %2870 = vmatprep.subr.mxu0 0.0
    %2871 = vmatpush2.msra.mxu0 0.0
    %2872 = vmatprep.subr.mxu0 0.0
    %2873 = vmatpush2.msra.mxu0 0.0
    %2874 = vmatprep.subr.mxu0 0.0
    %2875 = vmatpush2.msra.mxu0 0.0
    %2876 = vmatprep.subr.mxu0 0.0
    %2877 = vmatpush2.msra.mxu0 0.0
    %2878 = vmatprep.subr.mxu0 0.0
    %2879 = vmatpush2.msra.mxu0 0.0
    %2880 = vmatprep.subr.mxu0 0.0
    %2881 = vmatpush2.msra.mxu0 0.0
    %2882 = vmatprep.mubr.f32.mxu0 0.0
    %v2883 = vand.u32 %v2656, 4294901760
    %2884 = vmatmul.mubr.f32.gmra.mxu0 %v2883
    %v2885 = vpop.f32.mrf.mxu0
    %v2886 = vadd.f32 %v2744, %v2885
    %v2887 = vpop.f32.mrf.mxu0
    %v2888 = vadd.f32 %v2746, %v2887
    %2889 = vdwg.mxu0
    %2890 = vmatprep.subr.mxu0 0.0
    %2891 = vmatpush1.msra.mxu0 0.0
    %2892 = vmatprep.subr.mxu0 0.0
    %2893 = vmatpush1.msra.mxu0 0.0
    %2894 = vmatprep.subr.mxu0 0.0
    %2895 = vmatpush1.msra.mxu0 0.0
    %2896 = vmatprep.subr.mxu0 0.0
    %2897 = vmatpush1.msra.mxu0 0.0
    %2898 = vmatprep.subr.mxu0 0.0
    %2899 = vmatpush1.msra.mxu0 0.0
    %2900 = vmatprep.subr.mxu0 0.0
    %2901 = vmatpush1.msra.mxu0 0.0
    %2902 = vmatprep.subr.mxu0 0.0
    %2903 = vmatpush1.msra.mxu0 0.0
    %2904 = vmatprep.subr.mxu0 0.0
    %2905 = vmatpush1.msra.mxu0 0.0
    %2906 = vmatprep.subr.mxu0 0.0
    %2907 = vmatpush1.msra.mxu0 0.0
    %v2908 = vand.u32 %v2653, 4294901760
    %v2909 = vsub.f32 %v2653, %v2908
    %2910 = vmatprep.subr.mxu0 %v2909
    %v2911 = vand.u32 %v2652, 4294901760
    %v2912 = vsub.f32 %v2652, %v2911
    %2913 = vmatpush1.msra.mxu0 %v2912
    %v2914 = vand.u32 %v2651, 4294901760
    %v2915 = vsub.f32 %v2651, %v2914
    %2916 = vmatprep.subr.mxu0 %v2915
    %v2917 = vand.u32 %v2650, 4294901760
    %v2918 = vsub.f32 %v2650, %v2917
    %2919 = vmatpush1.msra.mxu0 %v2918
    %v2920 = vand.u32 %v2649, 4294901760
    %v2921 = vsub.f32 %v2649, %v2920
    %2922 = vmatprep.subr.mxu0 %v2921
    %v2923 = vand.u32 %v2648, 4294901760
    %v2924 = vsub.f32 %v2648, %v2923
    %2925 = vmatpush1.msra.mxu0 %v2924
    %v2926 = vand.u32 %v2647, 4294901760
    %v2927 = vsub.f32 %v2647, %v2926
    %2928 = vmatprep.subr.mxu0 %v2927
    %v2929 = vand.u32 %v2646, 4294901760
    %v2930 = vsub.f32 %v2646, %v2929
    %2931 = vmatpush1.msra.mxu0 %v2930
    %v2932 = vand.u32 %v2645, 4294901760
    %v2933 = vsub.f32 %v2645, %v2932
    %2934 = vmatprep.subr.mxu0 %v2933
    %v2935 = vand.u32 %v2644, 4294901760
    %v2936 = vsub.f32 %v2644, %v2935
    %2937 = vmatpush1.msra.mxu0 %v2936
    %v2938 = vand.u32 %v2643, 4294901760
    %v2939 = vsub.f32 %v2643, %v2938
    %2940 = vmatprep.subr.mxu0 %v2939
    %v2941 = vand.u32 %v2642, 4294901760
    %v2942 = vsub.f32 %v2642, %v2941
    %2943 = vmatpush1.msra.mxu0 %v2942
    %v2944 = vand.u32 %v2641, 4294901760
    %v2945 = vsub.f32 %v2641, %v2944
    %2946 = vmatprep.subr.mxu0 %v2945
    %v2947 = vand.u32 %v2640, 4294901760
    %v2948 = vsub.f32 %v2640, %v2947
    %2949 = vmatpush1.msra.mxu0 %v2948
    %2950 = vmatprep.subr.mxu0 0.0
    %2951 = vmatpush2.msra.mxu0 0.0
    %2952 = vmatprep.subr.mxu0 0.0
    %2953 = vmatpush2.msra.mxu0 0.0
    %2954 = vmatprep.subr.mxu0 0.0
    %2955 = vmatpush2.msra.mxu0 0.0
    %2956 = vmatprep.subr.mxu0 0.0
    %2957 = vmatpush2.msra.mxu0 0.0
    %2958 = vmatprep.subr.mxu0 0.0
    %2959 = vmatpush2.msra.mxu0 0.0
    %2960 = vmatprep.subr.mxu0 0.0
    %2961 = vmatpush2.msra.mxu0 0.0
    %2962 = vmatprep.subr.mxu0 0.0
    %2963 = vmatpush2.msra.mxu0 0.0
    %2964 = vmatprep.subr.mxu0 0.0
    %2965 = vmatpush2.msra.mxu0 0.0
    %2966 = vmatprep.subr.mxu0 0.0
    %2967 = vmatpush2.msra.mxu0 0.0
    %2968 = vmatprep.subr.mxu0 0.0
    %2969 = vmatpush2.msra.mxu0 0.0
    %2970 = vmatprep.subr.mxu0 0.0
    %2971 = vmatpush2.msra.mxu0 0.0
    %2972 = vmatprep.subr.mxu0 0.0
    %2973 = vmatpush2.msra.mxu0 0.0
    %2974 = vmatprep.subr.mxu0 0.0
    %2975 = vmatpush2.msra.mxu0 0.0
    %2976 = vmatprep.subr.mxu0 0.0
    %2977 = vmatpush2.msra.mxu0 0.0
    %2978 = vmatprep.subr.mxu0 0.0
    %2979 = vmatpush2.msra.mxu0 0.0
    %2980 = vmatprep.subr.mxu0 0.0
    %2981 = vmatpush2.msra.mxu0 0.0
    %2982 = vmatprep.mubr.f32.mxu0 0.0
    %v2983 = vand.u32 %v2656, 4294901760
    %v2984 = vsub.f32 %v2656, %v2983
    %2985 = vmatmul.mubr.f32.gmra.mxu0 %v2984
    %v2986 = vpop.f32.mrf.mxu0
    %v2987 = vadd.f32 %v2886, %v2986
    %v2988 = vpop.f32.mrf.mxu0
    %v2989 = vadd.f32 %v2888, %v2988
    %2990 = vdwg.mxu0
    %2991 = vmatprep.subr.mxu0 0.0
    %2992 = vmatpush1.msra.mxu0 0.0
    %2993 = vmatprep.subr.mxu0 0.0
    %2994 = vmatpush1.msra.mxu0 0.0
    %2995 = vmatprep.subr.mxu0 0.0
    %2996 = vmatpush1.msra.mxu0 0.0
    %2997 = vmatprep.subr.mxu0 0.0
    %2998 = vmatpush1.msra.mxu0 0.0
    %2999 = vmatprep.subr.mxu0 0.0
    %3000 = vmatpush1.msra.mxu0 0.0
    %3001 = vmatprep.subr.mxu0 0.0
    %3002 = vmatpush1.msra.mxu0 0.0
    %3003 = vmatprep.subr.mxu0 0.0
    %3004 = vmatpush1.msra.mxu0 0.0
    %3005 = vmatprep.subr.mxu0 0.0
    %3006 = vmatpush1.msra.mxu0 0.0
    %3007 = vmatprep.subr.mxu0 0.0
    %3008 = vmatpush1.msra.mxu0 0.0
    %v3009 = vand.u32 %v2653, 4294901760
    %3010 = vmatprep.subr.mxu0 %v3009
    %v3011 = vand.u32 %v2652, 4294901760
    %3012 = vmatpush1.msra.mxu0 %v3011
    %v3013 = vand.u32 %v2651, 4294901760
    %3014 = vmatprep.subr.mxu0 %v3013
    %v3015 = vand.u32 %v2650, 4294901760
    %3016 = vmatpush1.msra.mxu0 %v3015
    %v3017 = vand.u32 %v2649, 4294901760
    %3018 = vmatprep.subr.mxu0 %v3017
    %v3019 = vand.u32 %v2648, 4294901760
    %3020 = vmatpush1.msra.mxu0 %v3019
    %v3021 = vand.u32 %v2647, 4294901760
    %3022 = vmatprep.subr.mxu0 %v3021
    %v3023 = vand.u32 %v2646, 4294901760
    %3024 = vmatpush1.msra.mxu0 %v3023
    %v3025 = vand.u32 %v2645, 4294901760
    %3026 = vmatprep.subr.mxu0 %v3025
    %v3027 = vand.u32 %v2644, 4294901760
    %3028 = vmatpush1.msra.mxu0 %v3027
    %v3029 = vand.u32 %v2643, 4294901760
    %3030 = vmatprep.subr.mxu0 %v3029
    %v3031 = vand.u32 %v2642, 4294901760
    %3032 = vmatpush1.msra.mxu0 %v3031
    %v3033 = vand.u32 %v2641, 4294901760
    %3034 = vmatprep.subr.mxu0 %v3033
    %v3035 = vand.u32 %v2640, 4294901760
    %3036 = vmatpush1.msra.mxu0 %v3035
    %3037 = vmatprep.subr.mxu0 0.0
    %3038 = vmatpush2.msra.mxu0 0.0
    %3039 = vmatprep.subr.mxu0 0.0
    %3040 = vmatpush2.msra.mxu0 0.0
    %3041 = vmatprep.subr.mxu0 0.0
    %3042 = vmatpush2.msra.mxu0 0.0
    %3043 = vmatprep.subr.mxu0 0.0
    %3044 = vmatpush2.msra.mxu0 0.0
    %3045 = vmatprep.subr.mxu0 0.0
    %3046 = vmatpush2.msra.mxu0 0.0
    %3047 = vmatprep.subr.mxu0 0.0
    %3048 = vmatpush2.msra.mxu0 0.0
    %3049 = vmatprep.subr.mxu0 0.0
    %3050 = vmatpush2.msra.mxu0 0.0
    %3051 = vmatprep.subr.mxu0 0.0
    %3052 = vmatpush2.msra.mxu0 0.0
    %3053 = vmatprep.subr.mxu0 0.0
    %3054 = vmatpush2.msra.mxu0 0.0
    %3055 = vmatprep.subr.mxu0 0.0
    %3056 = vmatpush2.msra.mxu0 0.0
    %3057 = vmatprep.subr.mxu0 0.0
    %3058 = vmatpush2.msra.mxu0 0.0
    %3059 = vmatprep.subr.mxu0 0.0
    %3060 = vmatpush2.msra.mxu0 0.0
    %3061 = vmatprep.subr.mxu0 0.0
    %3062 = vmatpush2.msra.mxu0 0.0
    %3063 = vmatprep.subr.mxu0 0.0
    %3064 = vmatpush2.msra.mxu0 0.0
    %3065 = vmatprep.subr.mxu0 0.0
    %3066 = vmatpush2.msra.mxu0 0.0
    %3067 = vmatprep.subr.mxu0 0.0
    %3068 = vmatpush2.msra.mxu0 0.0
    %3069 = vmatprep.mubr.f32.mxu0 0.0
    %v3070 = vand.u32 %v2656, 4294901760
    %v3071 = vsub.f32 %v2656, %v3070
    %v3072 = vand.u32 %v3071, 4294901760
    %3073 = vmatmul.mubr.f32.gmra.mxu0 %v3072
    %v3074 = vpop.f32.mrf.mxu0
    %v3075 = vadd.f32 %v2987, %v3074
    %v3076 = vpop.f32.mrf.mxu0
    %v3077 = vadd.f32 %v2989, %v3076
    %3078 = vdwg.mxu0
    %3079 = vmatprep.subr.mxu0 0.0
    %3080 = vmatpush1.msra.mxu0 0.0
    %3081 = vmatprep.subr.mxu0 0.0
    %3082 = vmatpush1.msra.mxu0 0.0
    %3083 = vmatprep.subr.mxu0 0.0
    %3084 = vmatpush1.msra.mxu0 0.0
    %3085 = vmatprep.subr.mxu0 0.0
    %3086 = vmatpush1.msra.mxu0 0.0
    %3087 = vmatprep.subr.mxu0 0.0
    %3088 = vmatpush1.msra.mxu0 0.0
    %3089 = vmatprep.subr.mxu0 0.0
    %3090 = vmatpush1.msra.mxu0 0.0
    %3091 = vmatprep.subr.mxu0 0.0
    %3092 = vmatpush1.msra.mxu0 0.0
    %3093 = vmatprep.subr.mxu0 0.0
    %3094 = vmatpush1.msra.mxu0 0.0
    %3095 = vmatprep.subr.mxu0 0.0
    %3096 = vmatpush1.msra.mxu0 0.0
    %v3097 = vand.u32 %v2653, 4294901760
    %v3098 = vsub.f32 %v2653, %v3097
    %v3099 = vand.u32 %v3098, 4294901760
    %3100 = vmatprep.subr.mxu0 %v3099
    %v3101 = vand.u32 %v2652, 4294901760
    %v3102 = vsub.f32 %v2652, %v3101
    %v3103 = vand.u32 %v3102, 4294901760
    %3104 = vmatpush1.msra.mxu0 %v3103
    %v3105 = vand.u32 %v2651, 4294901760
    %v3106 = vsub.f32 %v2651, %v3105
    %v3107 = vand.u32 %v3106, 4294901760
    %3108 = vmatprep.subr.mxu0 %v3107
    %v3109 = vand.u32 %v2650, 4294901760
    %v3110 = vsub.f32 %v2650, %v3109
    %v3111 = vand.u32 %v3110, 4294901760
    %3112 = vmatpush1.msra.mxu0 %v3111
    %v3113 = vand.u32 %v2649, 4294901760
    %v3114 = vsub.f32 %v2649, %v3113
    %v3115 = vand.u32 %v3114, 4294901760
    %3116 = vmatprep.subr.mxu0 %v3115
    %v3117 = vand.u32 %v2648, 4294901760
    %v3118 = vsub.f32 %v2648, %v3117
    %v3119 = vand.u32 %v3118, 4294901760
    %3120 = vmatpush1.msra.mxu0 %v3119
    %v3121 = vand.u32 %v2647, 4294901760
    %v3122 = vsub.f32 %v2647, %v3121
    %v3123 = vand.u32 %v3122, 4294901760
    %3124 = vmatprep.subr.mxu0 %v3123
    %v3125 = vand.u32 %v2646, 4294901760
    %v3126 = vsub.f32 %v2646, %v3125
    %v3127 = vand.u32 %v3126, 4294901760
    %3128 = vmatpush1.msra.mxu0 %v3127
    %v3129 = vand.u32 %v2645, 4294901760
    %v3130 = vsub.f32 %v2645, %v3129
    %v3131 = vand.u32 %v3130, 4294901760
    %3132 = vmatprep.subr.mxu0 %v3131
    %v3133 = vand.u32 %v2644, 4294901760
    %v3134 = vsub.f32 %v2644, %v3133
    %v3135 = vand.u32 %v3134, 4294901760
    %3136 = vmatpush1.msra.mxu0 %v3135
    %v3137 = vand.u32 %v2643, 4294901760
    %v3138 = vsub.f32 %v2643, %v3137
    %v3139 = vand.u32 %v3138, 4294901760
    %3140 = vmatprep.subr.mxu0 %v3139
    %v3141 = vand.u32 %v2642, 4294901760
    %v3142 = vsub.f32 %v2642, %v3141
    %v3143 = vand.u32 %v3142, 4294901760
    %3144 = vmatpush1.msra.mxu0 %v3143
    %v3145 = vand.u32 %v2641, 4294901760
    %v3146 = vsub.f32 %v2641, %v3145
    %v3147 = vand.u32 %v3146, 4294901760
    %3148 = vmatprep.subr.mxu0 %v3147
    %v3149 = vand.u32 %v2640, 4294901760
    %v3150 = vsub.f32 %v2640, %v3149
    %v3151 = vand.u32 %v3150, 4294901760
    %3152 = vmatpush1.msra.mxu0 %v3151
    %3153 = vmatprep.subr.mxu0 0.0
    %3154 = vmatpush2.msra.mxu0 0.0
    %3155 = vmatprep.subr.mxu0 0.0
    %3156 = vmatpush2.msra.mxu0 0.0
    %3157 = vmatprep.subr.mxu0 0.0
    %3158 = vmatpush2.msra.mxu0 0.0
    %3159 = vmatprep.subr.mxu0 0.0
    %3160 = vmatpush2.msra.mxu0 0.0
    %3161 = vmatprep.subr.mxu0 0.0
    %3162 = vmatpush2.msra.mxu0 0.0
    %3163 = vmatprep.subr.mxu0 0.0
    %3164 = vmatpush2.msra.mxu0 0.0
    %3165 = vmatprep.subr.mxu0 0.0
    %3166 = vmatpush2.msra.mxu0 0.0
    %3167 = vmatprep.subr.mxu0 0.0
    %3168 = vmatpush2.msra.mxu0 0.0
    %3169 = vmatprep.subr.mxu0 0.0
    %3170 = vmatpush2.msra.mxu0 0.0
    %3171 = vmatprep.subr.mxu0 0.0
    %3172 = vmatpush2.msra.mxu0 0.0
    %3173 = vmatprep.subr.mxu0 0.0
    %3174 = vmatpush2.msra.mxu0 0.0
    %3175 = vmatprep.subr.mxu0 0.0
    %3176 = vmatpush2.msra.mxu0 0.0
    %3177 = vmatprep.subr.mxu0 0.0
    %3178 = vmatpush2.msra.mxu0 0.0
    %3179 = vmatprep.subr.mxu0 0.0
    %3180 = vmatpush2.msra.mxu0 0.0
    %3181 = vmatprep.subr.mxu0 0.0
    %3182 = vmatpush2.msra.mxu0 0.0
    %3183 = vmatprep.subr.mxu0 0.0
    %3184 = vmatpush2.msra.mxu0 0.0
    %3185 = vmatprep.mubr.f32.mxu0 0.0
    %v3186 = vand.u32 %v2656, 4294901760
    %3187 = vmatmul.mubr.f32.gmra.mxu0 %v3186
    %v3188 = vpop.f32.mrf.mxu0
    %v3189 = vadd.f32 %v3075, %v3188
    %v3190 = vpop.f32.mrf.mxu0
    %v3191 = vadd.f32 %v3077, %v3190
    %3192 = vdwg.mxu0
    %3193 = vmatprep.subr.mxu0 0.0
    %3194 = vmatpush1.msra.mxu0 0.0
    %3195 = vmatprep.subr.mxu0 0.0
    %3196 = vmatpush1.msra.mxu0 0.0
    %3197 = vmatprep.subr.mxu0 0.0
    %3198 = vmatpush1.msra.mxu0 0.0
    %3199 = vmatprep.subr.mxu0 0.0
    %3200 = vmatpush1.msra.mxu0 0.0
    %3201 = vmatprep.subr.mxu0 0.0
    %3202 = vmatpush1.msra.mxu0 0.0
    %3203 = vmatprep.subr.mxu0 0.0
    %3204 = vmatpush1.msra.mxu0 0.0
    %3205 = vmatprep.subr.mxu0 0.0
    %3206 = vmatpush1.msra.mxu0 0.0
    %3207 = vmatprep.subr.mxu0 0.0
    %3208 = vmatpush1.msra.mxu0 0.0
    %3209 = vmatprep.subr.mxu0 0.0
    %3210 = vmatpush1.msra.mxu0 0.0
    %v3211 = vand.u32 %v2653, 4294901760
    %3212 = vmatprep.subr.mxu0 %v3211
    %v3213 = vand.u32 %v2652, 4294901760
    %3214 = vmatpush1.msra.mxu0 %v3213
    %v3215 = vand.u32 %v2651, 4294901760
    %3216 = vmatprep.subr.mxu0 %v3215
    %v3217 = vand.u32 %v2650, 4294901760
    %3218 = vmatpush1.msra.mxu0 %v3217
    %v3219 = vand.u32 %v2649, 4294901760
    %3220 = vmatprep.subr.mxu0 %v3219
    %v3221 = vand.u32 %v2648, 4294901760
    %3222 = vmatpush1.msra.mxu0 %v3221
    %v3223 = vand.u32 %v2647, 4294901760
    %3224 = vmatprep.subr.mxu0 %v3223
    %v3225 = vand.u32 %v2646, 4294901760
    %3226 = vmatpush1.msra.mxu0 %v3225
    %v3227 = vand.u32 %v2645, 4294901760
    %3228 = vmatprep.subr.mxu0 %v3227
    %v3229 = vand.u32 %v2644, 4294901760
    %3230 = vmatpush1.msra.mxu0 %v3229
    %v3231 = vand.u32 %v2643, 4294901760
    %3232 = vmatprep.subr.mxu0 %v3231
    %v3233 = vand.u32 %v2642, 4294901760
    %3234 = vmatpush1.msra.mxu0 %v3233
    %v3235 = vand.u32 %v2641, 4294901760
    %3236 = vmatprep.subr.mxu0 %v3235
    %v3237 = vand.u32 %v2640, 4294901760
    %3238 = vmatpush1.msra.mxu0 %v3237
    %3239 = vmatprep.subr.mxu0 0.0
    %3240 = vmatpush2.msra.mxu0 0.0
    %3241 = vmatprep.subr.mxu0 0.0
    %3242 = vmatpush2.msra.mxu0 0.0
    %3243 = vmatprep.subr.mxu0 0.0
    %3244 = vmatpush2.msra.mxu0 0.0
    %3245 = vmatprep.subr.mxu0 0.0
    %3246 = vmatpush2.msra.mxu0 0.0
    %3247 = vmatprep.subr.mxu0 0.0
    %3248 = vmatpush2.msra.mxu0 0.0
    %3249 = vmatprep.subr.mxu0 0.0
    %3250 = vmatpush2.msra.mxu0 0.0
    %3251 = vmatprep.subr.mxu0 0.0
    %3252 = vmatpush2.msra.mxu0 0.0
    %3253 = vmatprep.subr.mxu0 0.0
    %3254 = vmatpush2.msra.mxu0 0.0
    %3255 = vmatprep.subr.mxu0 0.0
    %3256 = vmatpush2.msra.mxu0 0.0
    %3257 = vmatprep.subr.mxu0 0.0
    %3258 = vmatpush2.msra.mxu0 0.0
    %3259 = vmatprep.subr.mxu0 0.0
    %3260 = vmatpush2.msra.mxu0 0.0
    %3261 = vmatprep.subr.mxu0 0.0
    %3262 = vmatpush2.msra.mxu0 0.0
    %3263 = vmatprep.subr.mxu0 0.0
    %3264 = vmatpush2.msra.mxu0 0.0
    %3265 = vmatprep.subr.mxu0 0.0
    %3266 = vmatpush2.msra.mxu0 0.0
    %3267 = vmatprep.subr.mxu0 0.0
    %3268 = vmatpush2.msra.mxu0 0.0
    %3269 = vmatprep.subr.mxu0 0.0
    %3270 = vmatpush2.msra.mxu0 0.0
    %3271 = vmatprep.mubr.f32.mxu0 0.0
    %v3272 = vand.u32 %v2656, 4294901760
    %3273 = vmatmul.mubr.f32.gmra.mxu0 %v3272
    %v3274 = vpop.f32.mrf.mxu0
    %v3275 = vadd.f32 %v3189, %v3274
    %v3276 = vpop.f32.mrf.mxu0
    %v3277 = vadd.f32 %v3191, %v3276
    %3278 = vdwg.mxu0
    %v3279 = vxor.u32 %v3275, 2147483648
    %v3280 = vxor.u32 %v3277, 2147483648
    %v3281 = vmul.f32 %v3279, 1.442695
    %v3282 = vpow.pop %v3281
    %v3283 = vmul.f32 %v3280, 1.442695
    %v3284 = vpow.pop %v3283
    %v3285 = vadd.f32 %v3282, 1.0
    %v3286 = vadd.f32 %v3284, 1.0
    %v3287 = vrcp.pop %v3285
    %v3288 = vmul.f32 1.0, %v3287
    %v3289 = vrcp.pop %v3286
    %v3290 = vmul.f32 1.0, %v3289
    %v3293 = vcombine.low %v3288, %v3290
    %v3295 = vunpack.c.l.s4 1966171168
    %v3296 = vunpack.c.0.s8 %v3295
    %v3297 = vlaneseq
    %v3298 = vshrl.u32 %v3297, 7
    %v3299 = vsub.s32 %v3296, %v3298
    %v3300 = vrot.slane %v3293, %v3299
    %v3302 = vunpack.c.l.s4 1966171168
    %v3303 = vunpack.c.0.s8 %v3302
    %v3304 = vlaneseq
    %v3305 = vshrl.u32 %v3304, 7
    %v3306 = vsub.s32 %v3303, %v3305
    %v3307 = vrot.slane %v3300, %v3306
    %v3309 = vlaneseq
    %vm3310 = vcmp.ge.s32.totalorder %v3309, 0
    %vm3311 = vcmp.lt.s32.totalorder %v3309, 256
    %vm3312 = vmand %vm3310, %vm3311
    %3313 = vst.msk [vmem:[#allocation2] sm:$0x3] %vm3312, %v3307
    // Predicated region
    $region30: #{edge_mlp_forward.1} parent=1 // pred_check
      _
    $region31: #{edge_mlp_forward.1} parent=1 // pred_check_branch
      %3315 = sbr.rel (0) target = $region33
    $region32: #{edge_mlp_forward.1} parent=1 // pred_region
      %s3317 = ssub.s32 32, 16
      %3318 = vsyncadd [#allocation3], %s3317
      %s3320 = sshll.u32 [#allocation2], 4
      %s3321 = int_to_ptr.vmem [resolvable:$true] %s3320
      %3323 = dma.vmem_to_hbm [thread:$0]  %s3321, 16, %s7, [#allocation3]
    $region33: #{edge_mlp_forward.1} parent=1 // pred_fallthru
      _
    // Predicated region
    $region34: #{edge_mlp_forward.1} parent=1 // pred_check
      _
    $region35: #{edge_mlp_forward.1} parent=1 // pred_check_branch
      %3325 = sbr.rel (0) target = $region37
    $region36: #{edge_mlp_forward.1} parent=1 // pred_region
      %3326 = dma.done [#allocation3], 32
    $region37: #{edge_mlp_forward.1} parent=1 // pred_fallthru
      _
    %3327 = vsyncpa [#allocation3], 1

</llo_original>
